<compile_context>
chip_gen: v7x
topology: tpu7x:2x2x1
jax: 0.10.0
libtpu: 0.0.40
codegen_flags: <defaults>
</compile_context>

<pallas_src>
import functools

import jax
import jax.numpy as jnp
from jax.experimental import pallas as pl
from jax.experimental.pallas import tpu as pltpu


def _lstm_chunk_kernel(maxlen_ref,                    # scalar prefetch (SMEM)
                       x_ref, lens_ref, w_ih_ref, w_hh_ref, b_g_ref,
                       w_fc_ref, b_fc_ref,            # inputs (VMEM)
                       y_ref,                         # output (VMEM)
                       h_scr, c_scr, gx_scr, out_scr,  # scratch (VMEM)
                       *, t_chunk, b_tile, hidden, out_dim):
    """One grid step == t_chunk LSTM time steps + one batched fc projection.

    maxlen_ref: (num_b_tiles,) int32 in SMEM  max sequence length per batch tile
    x_ref:      (t_chunk, b_tile, H)          time-major input block
    lens_ref:   (b_tile, 1) int32             per-row sequence lengths
    w_ih_ref:   (H, 4H)                       input->gates weights (transposed)
    w_hh_ref:   (H, 4H)                       hidden->gates weights (transposed)
    b_g_ref:    (1, 4H)                       b_ih + b_hh
    w_fc_ref:   (H, O), b_fc_ref: (1, O)      fc head
    y_ref:      (t_chunk, b_tile, O)          time-major output block
    h_scr/c_scr:(b_tile, H)                   persistent LSTM state
    gx_scr:     (t_chunk*b_tile, 4H)          per-chunk input->gates
    out_scr:    (t_chunk*b_tile, H)           per-chunk masked lstm outputs
    """
    b_blk = pl.program_id(0)
    t_blk = pl.program_id(1)
    t0 = t_blk * t_chunk

    @pl.when(t_blk == 0)
    def _():
        h_scr[...] = jnp.zeros_like(h_scr)
        c_scr[...] = jnp.zeros_like(c_scr)

    tile_max_len = maxlen_ref[b_blk]

    @pl.when(t0 < tile_max_len)
    def _compute():
        # Input->gates for the whole chunk: one big MXU dot, biases folded in.
        x_flat = x_ref[...].reshape(t_chunk * b_tile, hidden)
        gx_scr[...] = jnp.dot(x_flat, w_ih_ref[...],
                              preferred_element_type=jnp.float32) + b_g_ref[...]

        h = h_scr[...]
        c = c_scr[...]
        w_hh = w_hh_ref[...]          # hoisted out of the step loop
        lens = lens_ref[...]          # (b_tile, 1) int32

        # Statically unrolled recurrence (t_chunk <= 32 keeps code size sane).
        for step in range(t_chunk):
            row0 = step * b_tile      # static offset -> aligned full-tile access
            gates = gx_scr[pl.ds(row0, b_tile), :] + jnp.dot(
                h, w_hh, preferred_element_type=jnp.float32)
            # PyTorch gate order: i, f, g, o (packed along the 4H lane axis).
            i_g = jax.nn.sigmoid(gates[:, 0 * hidden:1 * hidden])
            f_g = jax.nn.sigmoid(gates[:, 1 * hidden:2 * hidden])
            g_g = jnp.tanh(gates[:, 2 * hidden:3 * hidden])
            o_g = jax.nn.sigmoid(gates[:, 3 * hidden:4 * hidden])

            c_new = f_g * c + i_g * g_g
            h_new = o_g * jnp.tanh(c_new)

            # Packed-sequence semantics: freeze state past each row's length;
            # pad_packed_sequence emits zeros there.
            mask = lens > (t0 + step)                     # (b_tile, 1) bool
            h = jnp.where(mask, h_new, h)
            c = jnp.where(mask, c_new, c)
            out_scr[pl.ds(row0, b_tile), :] = jnp.where(mask, h_new, 0.0)

        h_scr[...] = h
        c_scr[...] = c

        # Batched fc for the whole chunk: one (t_chunk*b_tile, H) @ (H, O) dot.
        y = jnp.dot(out_scr[...], w_fc_ref[...],
                    preferred_element_type=jnp.float32) + b_fc_ref[...]
        y_ref[...] = y.reshape(t_chunk, b_tile, out_dim).astype(y_ref.dtype)

    @pl.when(t0 >= tile_max_len)
    def _skip():
        # Every row of this tile is past its length: lstm_out is all zeros, so
        # fc reduces to the bias.  Skip the recurrence and the fc entirely.
        y_ref[...] = jnp.broadcast_to(b_fc_ref[...],
                                      (t_chunk, b_tile, out_dim)
                                      ).astype(y_ref.dtype)


def scaling_decoder_forward(x, lengths, params, custom_pad_length=None,
                            t_chunk=16, b_tile=None):
    """JAX/Pallas equivalent of ScalingDecoder.forward.

    x:        (B, T, H) float32 batch_first padded input (data of `packed_z`)
    lengths:  (B,)      int32 sequence lengths
    params:   dict with PyTorch-shaped LSTM / Linear parameters
    returns:  (B, T_out, O) with T_out = custom_pad_length or T
    """
    B, T, H = x.shape
    T_out = custom_pad_length if custom_pad_length is not None else T
    assert T_out >= T
    out_dim = params["w_fc"].shape[0]

    # Batch tile: fill the MXU M-dimension at realistic batch sizes, but never
    # exceed (rounded-up) B; keep it a sublane multiple.  On v7x prefer
    # B_pad/b_tile >= 2 so the "parallel" axis shards across both TensorCores.
    if b_tile is None:
        b_tile = min(128, ((B + 7) // 8) * 8)
    B_pad = ((B + b_tile - 1) // b_tile) * b_tile
    T_padded = ((T_out + t_chunk - 1) // t_chunk) * t_chunk

    # Pad batch/time; padded rows get length 0 so they stay at fc-bias output
    # and are sliced off below.
    x_p = jnp.zeros((B_pad, T_padded, H), jnp.float32)
    x_p = x_p.at[:B, :T, :].set(x.astype(jnp.float32))
    lens_p = jnp.zeros((B_pad,), jnp.int32).at[:B].set(lengths.astype(jnp.int32))

    # Time-major so each grid step streams one contiguous (t_chunk, b_tile, H)
    # block and each recurrence step reads a full (b_tile, 4H) gx tile.
    x_tm = jnp.transpose(x_p, (1, 0, 2))                          # (T_pd, B_pd, H)

    w_ih_t = params["w_ih"].astype(jnp.float32).T                 # (H, 4H)
    w_hh_t = params["w_hh"].astype(jnp.float32).T                 # (H, 4H)
    b_g = (params["b_ih"] + params["b_hh"]).astype(jnp.float32).reshape(1, 4 * H)
    w_fc_t = params["w_fc"].astype(jnp.float32).T                 # (H, O)
    b_fc = params["b_fc"].astype(jnp.float32).reshape(1, out_dim)
    lens2d = lens_p.reshape(B_pad, 1)

    nb = B_pad // b_tile
    nt = T_padded // t_chunk
    # Per-batch-tile max length (scalar prefetch, SMEM) for the tail-chunk skip.
    tile_max_len = jnp.max(lens_p.reshape(nb, b_tile), axis=1).astype(jnp.int32)

    kernel = functools.partial(_lstm_chunk_kernel, t_chunk=t_chunk,
                               b_tile=b_tile, hidden=H, out_dim=out_dim)

    y_tm = pl.pallas_call(
        kernel,
        out_shape=jax.ShapeDtypeStruct((T_padded, B_pad, out_dim), jnp.float32),
        grid_spec=pltpu.PrefetchScalarGridSpec(
            num_scalar_prefetch=1,
            grid=(nb, nt),
            in_specs=[
                pl.BlockSpec((t_chunk, b_tile, H), lambda b, t, ml: (t, b, 0)),  # x
                pl.BlockSpec((b_tile, 1), lambda b, t, ml: (b, 0)),              # lengths
                pl.BlockSpec((H, 4 * H), lambda b, t, ml: (0, 0)),               # W_ih^T
                pl.BlockSpec((H, 4 * H), lambda b, t, ml: (0, 0)),               # W_hh^T
                pl.BlockSpec((1, 4 * H), lambda b, t, ml: (0, 0)),               # b_ih+b_hh
                pl.BlockSpec((H, out_dim), lambda b, t, ml: (0, 0)),             # W_fc^T
                pl.BlockSpec((1, out_dim), lambda b, t, ml: (0, 0)),             # b_fc
            ],
            out_specs=pl.BlockSpec((t_chunk, b_tile, out_dim),
                                   lambda b, t, ml: (t, b, 0)),
            scratch_shapes=[
                pltpu.VMEM((b_tile, H), jnp.float32),                 # h state
                pltpu.VMEM((b_tile, H), jnp.float32),                 # c state
                pltpu.VMEM((t_chunk * b_tile, 4 * H), jnp.float32),   # gx chunk
                pltpu.VMEM((t_chunk * b_tile, H), jnp.float32),       # lstm_out chunk
            ]),
        compiler_params=pltpu.CompilerParams(
            dimension_semantics=("parallel", "arbitrary")),   # batch || , time seq
    )(tile_max_len, x_tm, lens2d, w_ih_t, w_hh_t, b_g, w_fc_t, b_fc)

    # Layout plumbing only: back to batch-major and drop padding.
    y = jnp.transpose(y_tm, (1, 0, 2))
    return y[:B, :T_out, :]


def _reference_forward(x, lengths, params, custom_pad_length):
    """Pure-JAX reference (lax.scan) mirroring PyTorch packed-LSTM + fc."""
    B, T, H = x.shape
    T_pad = custom_pad_length if custom_pad_length is not None else T
    if T_pad > T:
        x = jnp.concatenate([x, jnp.zeros((B, T_pad - T, H), x.dtype)], axis=1)
    w_ih, w_hh = params["w_ih"], params["w_hh"]
    b_ih, b_hh = params["b_ih"], params["b_hh"]

    def step(carry, inp):
        h, c = carry
        x_t, t = inp
        gates = x_t @ w_ih.T + h @ w_hh.T + b_ih + b_hh
        i, f, g, o = jnp.split(gates, 4, axis=-1)
        i, f, g, o = (jax.nn.sigmoid(i), jax.nn.sigmoid(f),
                      jnp.tanh(g), jax.nn.sigmoid(o))
        c_new = f * c + i * g
        h_new = o * jnp.tanh(c_new)
        m = (lengths > t)[:, None]
        out = jnp.where(m, h_new, 0.0)
        return (jnp.where(m, h_new, h), jnp.where(m, c_new, c)), out

    init = (jnp.zeros((B, H), jnp.float32), jnp.zeros((B, H), jnp.float32))
    _, outs = jax.lax.scan(step, init,
                           (jnp.transpose(x, (1, 0, 2)), jnp.arange(T_pad)))
    lstm_out = jnp.transpose(outs, (1, 0, 2))             # (B, T_pad, H)
    return lstm_out @ params["w_fc"].T + params["b_fc"]


if __name__ == "__main__":
    B, T, hidden_dim, output_dim = 2, 8, 32, 16
    custom_pad_length = 10

    key = jax.random.PRNGKey(0)
    k = jax.random.split(key, 8)
    scale = 1.0 / jnp.sqrt(hidden_dim)
    params = {
        "w_ih": jax.random.uniform(k[0], (4 * hidden_dim, hidden_dim),
                                   jnp.float32, -scale, scale),
        "w_hh": jax.random.uniform(k[1], (4 * hidden_dim, hidden_dim),
                                   jnp.float32, -scale, scale),
        "b_ih": jax.random.uniform(k[2], (4 * hidden_dim,),
                                   jnp.float32, -scale, scale),
        "b_hh": jax.random.uniform(k[3], (4 * hidden_dim,),
                                   jnp.float32, -scale, scale),
        "w_fc": jax.random.uniform(k[4], (output_dim, hidden_dim),
                                   jnp.float32, -scale, scale),
        "b_fc": jax.random.uniform(k[5], (output_dim,),
                                   jnp.float32, -scale, scale),
    }

    x = jax.random.normal(k[6], (B, T, hidden_dim), jnp.float32)
    lengths = jnp.array([8, 5], dtype=jnp.int32)
    # Zero out inputs beyond each sequence length (as a packed sequence implies).
    time_ix = jnp.arange(T)[None, :, None]
    x = x * (time_ix < lengths[:, None, None]).astype(x.dtype)

    y = scaling_decoder_forward(x, lengths, params, custom_pad_length)
    y = jax.block_until_ready(y)

    y_ref = _reference_forward(x, lengths, params, custom_pad_length)
    assert y.shape == (B, custom_pad_length, output_dim)
    assert jnp.allclose(y, y_ref, atol=1e-4, rtol=1e-4), \
        float(jnp.max(jnp.abs(y - y_ref)))

    print("KERNEL_OK")
</pallas_src>

<mosaic_0001>
module attributes {stable_mosaic.version = 11 : i64} {
  func.func @_lstm_chunk_kernel(%arg0: i32, %arg1: i32, %arg2: memref<1xi32, #tpu.memory_space<smem>>, %arg3: memref<16x8x32xf32, #tpu.memory_space<vmem>>, %arg4: memref<8x1xi32, #tpu.memory_space<vmem>>, %arg5: memref<32x128xf32, #tpu.memory_space<vmem>>, %arg6: memref<32x128xf32, #tpu.memory_space<vmem>>, %arg7: memref<1x128xf32, #tpu.memory_space<vmem>>, %arg8: memref<32x16xf32, #tpu.memory_space<vmem>>, %arg9: memref<1x16xf32, #tpu.memory_space<vmem>>, %arg10: memref<16x8x16xf32, #tpu.memory_space<vmem>>, %arg11: memref<8x32xf32, #tpu.memory_space<vmem>>, %arg12: memref<8x32xf32, #tpu.memory_space<vmem>>, %arg13: memref<128x128xf32, #tpu.memory_space<vmem>>, %arg14: memref<128x32xf32, #tpu.memory_space<vmem>>) attributes {dimension_semantics = [#tpu.dimension_semantics<parallel>, #tpu.dimension_semantics<arbitrary>], iteration_bounds = array<i64: 1, 1>, scalar_prefetch = 1 : i64, scratch_operands = 4 : i64, tpu.core_type = #tpu.core_type<tc>, window_params = [{transform_indices = @transform_0, window_bounds = array<i64: 16, 8, 32>}, {transform_indices = @transform_1, window_bounds = array<i64: 8, 1>}, {pipeline_mode = #tpu.pipeline_mode<synchronous>, transform_indices = @transform_2, window_bounds = array<i64: 32, 128>}, {pipeline_mode = #tpu.pipeline_mode<synchronous>, transform_indices = @transform_3, window_bounds = array<i64: 32, 128>}, {pipeline_mode = #tpu.pipeline_mode<synchronous>, transform_indices = @transform_4, window_bounds = array<i64: 1, 128>}, {pipeline_mode = #tpu.pipeline_mode<synchronous>, transform_indices = @transform_5, window_bounds = array<i64: 32, 16>}, {pipeline_mode = #tpu.pipeline_mode<synchronous>, transform_indices = @transform_6, window_bounds = array<i64: 1, 16>}, {transform_indices = @transform_7, window_bounds = array<i64: 16, 8, 16>}]} {
    %c16_i32 = arith.constant 16 : i32
    %0 = arith.muli %arg1, %c16_i32 : i32
    %c0_i32 = arith.constant 0 : i32
    %1 = arith.cmpi eq, %arg1, %c0_i32 : i32
    %2 = arith.extui %1 : i1 to i32
    %c0_i32_0 = arith.constant 0 : i32
    %3 = arith.cmpi ne, %2, %c0_i32_0 : i32
    scf.if %3 {
      %cst = arith.constant 0.000000e+00 : f32
      %12 = vector.broadcast %cst : f32 to vector<8x32xf32>
      %c0 = arith.constant 0 : index
      %c0_3 = arith.constant 0 : index
      %13 = vector.load %arg11[%c0, %c0_3] : memref<8x32xf32, #tpu.memory_space<vmem>>, vector<8x32xf32>
      tpu.vector_store %arg11[%c0, %c0_3], %12 {strides = array<i32>} : memref<8x32xf32, #tpu.memory_space<vmem>>, vector<8x32xf32>,
      %cst_4 = arith.constant 0.000000e+00 : f32
      %14 = vector.broadcast %cst_4 : f32 to vector<8x32xf32>
      %c0_5 = arith.constant 0 : index
      %c0_6 = arith.constant 0 : index
      %15 = vector.load %arg12[%c0_5, %c0_6] : memref<8x32xf32, #tpu.memory_space<vmem>>, vector<8x32xf32>
      tpu.vector_store %arg12[%c0_5, %c0_6], %14 {strides = array<i32>} : memref<8x32xf32, #tpu.memory_space<vmem>>, vector<8x32xf32>,
    } else {
    }
    %4 = arith.index_cast %arg0 : i32 to index
    %5 = memref.load %arg2[%4] : memref<1xi32, #tpu.memory_space<smem>>
    %6 = arith.cmpi slt, %0, %5 : i32
    %7 = arith.extui %6 : i1 to i32
    %c0_i32_1 = arith.constant 0 : i32
    %8 = arith.cmpi ne, %7, %c0_i32_1 : i32
    scf.if %8 {
      %c0 = arith.constant 0 : index
      %c0_3 = arith.constant 0 : index
      %c0_4 = arith.constant 0 : index
      %12 = vector.load %arg3[%c0, %c0_3, %c0_4] : memref<16x8x32xf32, #tpu.memory_space<vmem>>, vector<16x8x32xf32>
      %13 = vector.shape_cast %12 : vector<16x8x32xf32> to vector<128x32xf32>
      %c0_5 = arith.constant 0 : index
      %c0_6 = arith.constant 0 : index
      %14 = vector.load %arg5[%c0_5, %c0_6] : memref<32x128xf32, #tpu.memory_space<vmem>>, vector<32x128xf32>
      %cst = arith.constant dense<0.000000e+00> : vector<128x128xf32>
      %15 = tpu.matmul %13, %14, %cst {dimension_numbers = #tpu.dot_dimension_numbers<[1], [0], [0], [1], [0, 0, 1, 1], [], []>} : vector<128x32xf32>, vector<32x128xf32>, vector<128x128xf32> -> vector<128x128xf32>
      %c0_7 = arith.constant 0 : index
      %c0_8 = arith.constant 0 : index
      %16 = vector.load %arg7[%c0_7, %c0_8] : memref<1x128xf32, #tpu.memory_space<vmem>>, vector<1x128xf32>
      %17 = vector.broadcast %16 : vector<1x128xf32> to vector<128x128xf32>
      %18 = arith.addf %15, %17 : vector<128x128xf32>
      %c0_9 = arith.constant 0 : index
      %c0_10 = arith.constant 0 : index
      %19 = vector.load %arg13[%c0_9, %c0_10] : memref<128x128xf32, #tpu.memory_space<vmem>>, vector<128x128xf32>
      tpu.vector_store %arg13[%c0_9, %c0_10], %18 {strides = array<i32>} : memref<128x128xf32, #tpu.memory_space<vmem>>, vector<128x128xf32>,
      %c0_11 = arith.constant 0 : index
      %c0_12 = arith.constant 0 : index
      %20 = vector.load %arg11[%c0_11, %c0_12] : memref<8x32xf32, #tpu.memory_space<vmem>>, vector<8x32xf32>
      %c0_13 = arith.constant 0 : index
      %c0_14 = arith.constant 0 : index
      %21 = vector.load %arg12[%c0_13, %c0_14] : memref<8x32xf32, #tpu.memory_space<vmem>>, vector<8x32xf32>
      %c0_15 = arith.constant 0 : index
      %c0_16 = arith.constant 0 : index
      %22 = vector.load %arg6[%c0_15, %c0_16] : memref<32x128xf32, #tpu.memory_space<vmem>>, vector<32x128xf32>
      %c0_17 = arith.constant 0 : index
      %c0_18 = arith.constant 0 : index
      %23 = vector.load %arg4[%c0_17, %c0_18] : memref<8x1xi32, #tpu.memory_space<vmem>>, vector<8x1xi32>
      %c0_19 = arith.constant 0 : index
      %c0_20 = arith.constant 0 : index
      %24 = vector.load %arg13[%c0_19, %c0_20] : memref<128x128xf32, #tpu.memory_space<vmem>>, vector<8x128xf32>
      %cst_21 = arith.constant dense<0.000000e+00> : vector<8x128xf32>
      %25 = tpu.matmul %20, %22, %cst_21 {dimension_numbers = #tpu.dot_dimension_numbers<[1], [0], [0], [1], [0, 0, 1, 1], [], []>} : vector<8x32xf32>, vector<32x128xf32>, vector<8x128xf32> -> vector<8x128xf32>
      %26 = arith.addf %24, %25 : vector<8x128xf32>
      %27 = vector.extract_strided_slice %26 {offsets = [0, 0], sizes = [8, 32], strides = [1, 1]} : vector<8x128xf32> to vector<8x32xf32>
      %28 = arith.negf %27 : vector<8x32xf32>
      %29 = math.exp %28 : vector<8x32xf32>
      %cst_22 = arith.constant 1.000000e+00 : f32
      %30 = vector.broadcast %cst_22 : f32 to vector<8x32xf32>
      %31 = arith.addf %30, %29 : vector<8x32xf32>
      %32 = arith.divf %30, %31 : vector<8x32xf32>
      %33 = vector.extract_strided_slice %26 {offsets = [0, 32], sizes = [8, 32], strides = [1, 1]} : vector<8x128xf32> to vector<8x32xf32>
      %34 = arith.negf %33 : vector<8x32xf32>
      %35 = math.exp %34 : vector<8x32xf32>
      %cst_23 = arith.constant 1.000000e+00 : f32
      %36 = vector.broadcast %cst_23 : f32 to vector<8x32xf32>
      %37 = arith.addf %36, %35 : vector<8x32xf32>
      %38 = arith.divf %36, %37 : vector<8x32xf32>
      %39 = vector.extract_strided_slice %26 {offsets = [0, 64], sizes = [8, 32], strides = [1, 1]} : vector<8x128xf32> to vector<8x32xf32>
      %40 = math.tanh %39 : vector<8x32xf32>
      %41 = vector.extract_strided_slice %26 {offsets = [0, 96], sizes = [8, 32], strides = [1, 1]} : vector<8x128xf32> to vector<8x32xf32>
      %42 = arith.negf %41 : vector<8x32xf32>
      %43 = math.exp %42 : vector<8x32xf32>
      %cst_24 = arith.constant 1.000000e+00 : f32
      %44 = vector.broadcast %cst_24 : f32 to vector<8x32xf32>
      %45 = arith.addf %44, %43 : vector<8x32xf32>
      %46 = arith.divf %44, %45 : vector<8x32xf32>
      %47 = arith.mulf %38, %21 : vector<8x32xf32>
      %48 = arith.mulf %32, %40 : vector<8x32xf32>
      %49 = arith.addf %47, %48 : vector<8x32xf32>
      %50 = math.tanh %49 : vector<8x32xf32>
      %51 = arith.mulf %46, %50 : vector<8x32xf32>
      %c0_i32_25 = arith.constant 0 : i32
      %52 = arith.addi %0, %c0_i32_25 : i32
      %53 = vector.broadcast %52 : i32 to vector<8x1xi32>
      %54 = arith.cmpi sgt, %23, %53 : vector<8x1xi32>
      %55 = vector.shape_cast %54 : vector<8x1xi1> to vector<8x1xi1>
      %56 = vector.broadcast %55 : vector<8x1xi1> to vector<8x32xi1>
      %57 = arith.select %56, %51, %20 : vector<8x32xi1>, vector<8x32xf32>
      %58 = vector.shape_cast %54 : vector<8x1xi1> to vector<8x1xi1>
      %59 = vector.broadcast %58 : vector<8x1xi1> to vector<8x32xi1>
      %60 = arith.select %59, %49, %21 : vector<8x32xi1>, vector<8x32xf32>
      %cst_26 = arith.constant 0.000000e+00 : f32
      %61 = vector.shape_cast %54 : vector<8x1xi1> to vector<8x1xi1>
      %62 = vector.broadcast %61 : vector<8x1xi1> to vector<8x32xi1>
      %63 = vector.broadcast %cst_26 : f32 to vector<8x32xf32>
      %64 = arith.select %62, %51, %63 : vector<8x32xi1>, vector<8x32xf32>
      %c0_27 = arith.constant 0 : index
      %c0_28 = arith.constant 0 : index
      %65 = vector.load %arg14[%c0_27, %c0_28] : memref<128x32xf32, #tpu.memory_space<vmem>>, vector<8x32xf32>
      tpu.vector_store %arg14[%c0_27, %c0_28], %64 {strides = array<i32>} : memref<128x32xf32, #tpu.memory_space<vmem>>, vector<8x32xf32>,
      %c8 = arith.constant 8 : index
      %c0_29 = arith.constant 0 : index
      %66 = vector.load %arg13[%c8, %c0_29] : memref<128x128xf32, #tpu.memory_space<vmem>>, vector<8x128xf32>
      %cst_30 = arith.constant dense<0.000000e+00> : vector<8x128xf32>
      %67 = tpu.matmul %57, %22, %cst_30 {dimension_numbers = #tpu.dot_dimension_numbers<[1], [0], [0], [1], [0, 0, 1, 1], [], []>} : vector<8x32xf32>, vector<32x128xf32>, vector<8x128xf32> -> vector<8x128xf32>
      %68 = arith.addf %66, %67 : vector<8x128xf32>
      %69 = vector.extract_strided_slice %68 {offsets = [0, 0], sizes = [8, 32], strides = [1, 1]} : vector<8x128xf32> to vector<8x32xf32>
      %70 = arith.negf %69 : vector<8x32xf32>
      %71 = math.exp %70 : vector<8x32xf32>
      %cst_31 = arith.constant 1.000000e+00 : f32
      %72 = vector.broadcast %cst_31 : f32 to vector<8x32xf32>
      %73 = arith.addf %72, %71 : vector<8x32xf32>
      %74 = arith.divf %72, %73 : vector<8x32xf32>
      %75 = vector.extract_strided_slice %68 {offsets = [0, 32], sizes = [8, 32], strides = [1, 1]} : vector<8x128xf32> to vector<8x32xf32>
      %76 = arith.negf %75 : vector<8x32xf32>
      %77 = math.exp %76 : vector<8x32xf32>
      %cst_32 = arith.constant 1.000000e+00 : f32
      %78 = vector.broadcast %cst_32 : f32 to vector<8x32xf32>
      %79 = arith.addf %78, %77 : vector<8x32xf32>
      %80 = arith.divf %78, %79 : vector<8x32xf32>
      %81 = vector.extract_strided_slice %68 {offsets = [0, 64], sizes = [8, 32], strides = [1, 1]} : vector<8x128xf32> to vector<8x32xf32>
      %82 = math.tanh %81 : vector<8x32xf32>
      %83 = vector.extract_strided_slice %68 {offsets = [0, 96], sizes = [8, 32], strides = [1, 1]} : vector<8x128xf32> to vector<8x32xf32>
      %84 = arith.negf %83 : vector<8x32xf32>
      %85 = math.exp %84 : vector<8x32xf32>
      %cst_33 = arith.constant 1.000000e+00 : f32
      %86 = vector.broadcast %cst_33 : f32 to vector<8x32xf32>
      %87 = arith.addf %86, %85 : vector<8x32xf32>
      %88 = arith.divf %86, %87 : vector<8x32xf32>
      %89 = arith.mulf %80, %60 : vector<8x32xf32>
      %90 = arith.mulf %74, %82 : vector<8x32xf32>
      %91 = arith.addf %89, %90 : vector<8x32xf32>
      %92 = math.tanh %91 : vector<8x32xf32>
      %93 = arith.mulf %88, %92 : vector<8x32xf32>
      %c1_i32 = arith.constant 1 : i32
      %94 = arith.addi %0, %c1_i32 : i32
      %95 = vector.broadcast %94 : i32 to vector<8x1xi32>
      %96 = arith.cmpi sgt, %23, %95 : vector<8x1xi32>
      %97 = vector.shape_cast %96 : vector<8x1xi1> to vector<8x1xi1>
      %98 = vector.broadcast %97 : vector<8x1xi1> to vector<8x32xi1>
      %99 = arith.select %98, %93, %57 : vector<8x32xi1>, vector<8x32xf32>
      %100 = vector.shape_cast %96 : vector<8x1xi1> to vector<8x1xi1>
      %101 = vector.broadcast %100 : vector<8x1xi1> to vector<8x32xi1>
      %102 = arith.select %101, %91, %60 : vector<8x32xi1>, vector<8x32xf32>
      %cst_34 = arith.constant 0.000000e+00 : f32
      %103 = vector.shape_cast %96 : vector<8x1xi1> to vector<8x1xi1>
      %104 = vector.broadcast %103 : vector<8x1xi1> to vector<8x32xi1>
      %105 = vector.broadcast %cst_34 : f32 to vector<8x32xf32>
      %106 = arith.select %104, %93, %105 : vector<8x32xi1>, vector<8x32xf32>
      %c8_35 = arith.constant 8 : index
      %c0_36 = arith.constant 0 : index
      %107 = vector.load %arg14[%c8_35, %c0_36] : memref<128x32xf32, #tpu.memory_space<vmem>>, vector<8x32xf32>
      tpu.vector_store %arg14[%c8_35, %c0_36], %106 {strides = array<i32>} : memref<128x32xf32, #tpu.memory_space<vmem>>, vector<8x32xf32>,
      %c16 = arith.constant 16 : index
      %c0_37 = arith.constant 0 : index
      %108 = vector.load %arg13[%c16, %c0_37] : memref<128x128xf32, #tpu.memory_space<vmem>>, vector<8x128xf32>
      %cst_38 = arith.constant dense<0.000000e+00> : vector<8x128xf32>
      %109 = tpu.matmul %99, %22, %cst_38 {dimension_numbers = #tpu.dot_dimension_numbers<[1], [0], [0], [1], [0, 0, 1, 1], [], []>} : vector<8x32xf32>, vector<32x128xf32>, vector<8x128xf32> -> vector<8x128xf32>
      %110 = arith.addf %108, %109 : vector<8x128xf32>
      %111 = vector.extract_strided_slice %110 {offsets = [0, 0], sizes = [8, 32], strides = [1, 1]} : vector<8x128xf32> to vector<8x32xf32>
      %112 = arith.negf %111 : vector<8x32xf32>
      %113 = math.exp %112 : vector<8x32xf32>
      %cst_39 = arith.constant 1.000000e+00 : f32
      %114 = vector.broadcast %cst_39 : f32 to vector<8x32xf32>
      %115 = arith.addf %114, %113 : vector<8x32xf32>
      %116 = arith.divf %114, %115 : vector<8x32xf32>
      %117 = vector.extract_strided_slice %110 {offsets = [0, 32], sizes = [8, 32], strides = [1, 1]} : vector<8x128xf32> to vector<8x32xf32>
      %118 = arith.negf %117 : vector<8x32xf32>
      %119 = math.exp %118 : vector<8x32xf32>
      %cst_40 = arith.constant 1.000000e+00 : f32
      %120 = vector.broadcast %cst_40 : f32 to vector<8x32xf32>
      %121 = arith.addf %120, %119 : vector<8x32xf32>
      %122 = arith.divf %120, %121 : vector<8x32xf32>
      %123 = vector.extract_strided_slice %110 {offsets = [0, 64], sizes = [8, 32], strides = [1, 1]} : vector<8x128xf32> to vector<8x32xf32>
      %124 = math.tanh %123 : vector<8x32xf32>
      %125 = vector.extract_strided_slice %110 {offsets = [0, 96], sizes = [8, 32], strides = [1, 1]} : vector<8x128xf32> to vector<8x32xf32>
      %126 = arith.negf %125 : vector<8x32xf32>
      %127 = math.exp %126 : vector<8x32xf32>
      %cst_41 = arith.constant 1.000000e+00 : f32
      %128 = vector.broadcast %cst_41 : f32 to vector<8x32xf32>
      %129 = arith.addf %128, %127 : vector<8x32xf32>
      %130 = arith.divf %128, %129 : vector<8x32xf32>
      %131 = arith.mulf %122, %102 : vector<8x32xf32>
      %132 = arith.mulf %116, %124 : vector<8x32xf32>
      %133 = arith.addf %131, %132 : vector<8x32xf32>
      %134 = math.tanh %133 : vector<8x32xf32>
      %135 = arith.mulf %130, %134 : vector<8x32xf32>
      %c2_i32 = arith.constant 2 : i32
      %136 = arith.addi %0, %c2_i32 : i32
      %137 = vector.broadcast %136 : i32 to vector<8x1xi32>
      %138 = arith.cmpi sgt, %23, %137 : vector<8x1xi32>
      %139 = vector.shape_cast %138 : vector<8x1xi1> to vector<8x1xi1>
      %140 = vector.broadcast %139 : vector<8x1xi1> to vector<8x32xi1>
      %141 = arith.select %140, %135, %99 : vector<8x32xi1>, vector<8x32xf32>
      %142 = vector.shape_cast %138 : vector<8x1xi1> to vector<8x1xi1>
      %143 = vector.broadcast %142 : vector<8x1xi1> to vector<8x32xi1>
      %144 = arith.select %143, %133, %102 : vector<8x32xi1>, vector<8x32xf32>
      %cst_42 = arith.constant 0.000000e+00 : f32
      %145 = vector.shape_cast %138 : vector<8x1xi1> to vector<8x1xi1>
      %146 = vector.broadcast %145 : vector<8x1xi1> to vector<8x32xi1>
      %147 = vector.broadcast %cst_42 : f32 to vector<8x32xf32>
      %148 = arith.select %146, %135, %147 : vector<8x32xi1>, vector<8x32xf32>
      %c16_43 = arith.constant 16 : index
      %c0_44 = arith.constant 0 : index
      %149 = vector.load %arg14[%c16_43, %c0_44] : memref<128x32xf32, #tpu.memory_space<vmem>>, vector<8x32xf32>
      tpu.vector_store %arg14[%c16_43, %c0_44], %148 {strides = array<i32>} : memref<128x32xf32, #tpu.memory_space<vmem>>, vector<8x32xf32>,
      %c24 = arith.constant 24 : index
      %c0_45 = arith.constant 0 : index
      %150 = vector.load %arg13[%c24, %c0_45] : memref<128x128xf32, #tpu.memory_space<vmem>>, vector<8x128xf32>
      %cst_46 = arith.constant dense<0.000000e+00> : vector<8x128xf32>
      %151 = tpu.matmul %141, %22, %cst_46 {dimension_numbers = #tpu.dot_dimension_numbers<[1], [0], [0], [1], [0, 0, 1, 1], [], []>} : vector<8x32xf32>, vector<32x128xf32>, vector<8x128xf32> -> vector<8x128xf32>
      %152 = arith.addf %150, %151 : vector<8x128xf32>
      %153 = vector.extract_strided_slice %152 {offsets = [0, 0], sizes = [8, 32], strides = [1, 1]} : vector<8x128xf32> to vector<8x32xf32>
      %154 = arith.negf %153 : vector<8x32xf32>
      %155 = math.exp %154 : vector<8x32xf32>
      %cst_47 = arith.constant 1.000000e+00 : f32
      %156 = vector.broadcast %cst_47 : f32 to vector<8x32xf32>
      %157 = arith.addf %156, %155 : vector<8x32xf32>
      %158 = arith.divf %156, %157 : vector<8x32xf32>
      %159 = vector.extract_strided_slice %152 {offsets = [0, 32], sizes = [8, 32], strides = [1, 1]} : vector<8x128xf32> to vector<8x32xf32>
      %160 = arith.negf %159 : vector<8x32xf32>
      %161 = math.exp %160 : vector<8x32xf32>
      %cst_48 = arith.constant 1.000000e+00 : f32
      %162 = vector.broadcast %cst_48 : f32 to vector<8x32xf32>
      %163 = arith.addf %162, %161 : vector<8x32xf32>
      %164 = arith.divf %162, %163 : vector<8x32xf32>
      %165 = vector.extract_strided_slice %152 {offsets = [0, 64], sizes = [8, 32], strides = [1, 1]} : vector<8x128xf32> to vector<8x32xf32>
      %166 = math.tanh %165 : vector<8x32xf32>
      %167 = vector.extract_strided_slice %152 {offsets = [0, 96], sizes = [8, 32], strides = [1, 1]} : vector<8x128xf32> to vector<8x32xf32>
      %168 = arith.negf %167 : vector<8x32xf32>
      %169 = math.exp %168 : vector<8x32xf32>
      %cst_49 = arith.constant 1.000000e+00 : f32
      %170 = vector.broadcast %cst_49 : f32 to vector<8x32xf32>
      %171 = arith.addf %170, %169 : vector<8x32xf32>
      %172 = arith.divf %170, %171 : vector<8x32xf32>
      %173 = arith.mulf %164, %144 : vector<8x32xf32>
      %174 = arith.mulf %158, %166 : vector<8x32xf32>
      %175 = arith.addf %173, %174 : vector<8x32xf32>
      %176 = math.tanh %175 : vector<8x32xf32>
      %177 = arith.mulf %172, %176 : vector<8x32xf32>
      %c3_i32 = arith.constant 3 : i32
      %178 = arith.addi %0, %c3_i32 : i32
      %179 = vector.broadcast %178 : i32 to vector<8x1xi32>
      %180 = arith.cmpi sgt, %23, %179 : vector<8x1xi32>
      %181 = vector.shape_cast %180 : vector<8x1xi1> to vector<8x1xi1>
      %182 = vector.broadcast %181 : vector<8x1xi1> to vector<8x32xi1>
      %183 = arith.select %182, %177, %141 : vector<8x32xi1>, vector<8x32xf32>
      %184 = vector.shape_cast %180 : vector<8x1xi1> to vector<8x1xi1>
      %185 = vector.broadcast %184 : vector<8x1xi1> to vector<8x32xi1>
      %186 = arith.select %185, %175, %144 : vector<8x32xi1>, vector<8x32xf32>
      %cst_50 = arith.constant 0.000000e+00 : f32
      %187 = vector.shape_cast %180 : vector<8x1xi1> to vector<8x1xi1>
      %188 = vector.broadcast %187 : vector<8x1xi1> to vector<8x32xi1>
      %189 = vector.broadcast %cst_50 : f32 to vector<8x32xf32>
      %190 = arith.select %188, %177, %189 : vector<8x32xi1>, vector<8x32xf32>
      %c24_51 = arith.constant 24 : index
      %c0_52 = arith.constant 0 : index
      %191 = vector.load %arg14[%c24_51, %c0_52] : memref<128x32xf32, #tpu.memory_space<vmem>>, vector<8x32xf32>
      tpu.vector_store %arg14[%c24_51, %c0_52], %190 {strides = array<i32>} : memref<128x32xf32, #tpu.memory_space<vmem>>, vector<8x32xf32>,
      %c32 = arith.constant 32 : index
      %c0_53 = arith.constant 0 : index
      %192 = vector.load %arg13[%c32, %c0_53] : memref<128x128xf32, #tpu.memory_space<vmem>>, vector<8x128xf32>
      %cst_54 = arith.constant dense<0.000000e+00> : vector<8x128xf32>
      %193 = tpu.matmul %183, %22, %cst_54 {dimension_numbers = #tpu.dot_dimension_numbers<[1], [0], [0], [1], [0, 0, 1, 1], [], []>} : vector<8x32xf32>, vector<32x128xf32>, vector<8x128xf32> -> vector<8x128xf32>
      %194 = arith.addf %192, %193 : vector<8x128xf32>
      %195 = vector.extract_strided_slice %194 {offsets = [0, 0], sizes = [8, 32], strides = [1, 1]} : vector<8x128xf32> to vector<8x32xf32>
      %196 = arith.negf %195 : vector<8x32xf32>
      %197 = math.exp %196 : vector<8x32xf32>
      %cst_55 = arith.constant 1.000000e+00 : f32
      %198 = vector.broadcast %cst_55 : f32 to vector<8x32xf32>
      %199 = arith.addf %198, %197 : vector<8x32xf32>
      %200 = arith.divf %198, %199 : vector<8x32xf32>
      %201 = vector.extract_strided_slice %194 {offsets = [0, 32], sizes = [8, 32], strides = [1, 1]} : vector<8x128xf32> to vector<8x32xf32>
      %202 = arith.negf %201 : vector<8x32xf32>
      %203 = math.exp %202 : vector<8x32xf32>
      %cst_56 = arith.constant 1.000000e+00 : f32
      %204 = vector.broadcast %cst_56 : f32 to vector<8x32xf32>
      %205 = arith.addf %204, %203 : vector<8x32xf32>
      %206 = arith.divf %204, %205 : vector<8x32xf32>
      %207 = vector.extract_strided_slice %194 {offsets = [0, 64], sizes = [8, 32], strides = [1, 1]} : vector<8x128xf32> to vector<8x32xf32>
      %208 = math.tanh %207 : vector<8x32xf32>
      %209 = vector.extract_strided_slice %194 {offsets = [0, 96], sizes = [8, 32], strides = [1, 1]} : vector<8x128xf32> to vector<8x32xf32>
      %210 = arith.negf %209 : vector<8x32xf32>
      %211 = math.exp %210 : vector<8x32xf32>
      %cst_57 = arith.constant 1.000000e+00 : f32
      %212 = vector.broadcast %cst_57 : f32 to vector<8x32xf32>
      %213 = arith.addf %212, %211 : vector<8x32xf32>
      %214 = arith.divf %212, %213 : vector<8x32xf32>
      %215 = arith.mulf %206, %186 : vector<8x32xf32>
      %216 = arith.mulf %200, %208 : vector<8x32xf32>
      %217 = arith.addf %215, %216 : vector<8x32xf32>
      %218 = math.tanh %217 : vector<8x32xf32>
      %219 = arith.mulf %214, %218 : vector<8x32xf32>
      %c4_i32 = arith.constant 4 : i32
      %220 = arith.addi %0, %c4_i32 : i32
      %221 = vector.broadcast %220 : i32 to vector<8x1xi32>
      %222 = arith.cmpi sgt, %23, %221 : vector<8x1xi32>
      %223 = vector.shape_cast %222 : vector<8x1xi1> to vector<8x1xi1>
      %224 = vector.broadcast %223 : vector<8x1xi1> to vector<8x32xi1>
      %225 = arith.select %224, %219, %183 : vector<8x32xi1>, vector<8x32xf32>
      %226 = vector.shape_cast %222 : vector<8x1xi1> to vector<8x1xi1>
      %227 = vector.broadcast %226 : vector<8x1xi1> to vector<8x32xi1>
      %228 = arith.select %227, %217, %186 : vector<8x32xi1>, vector<8x32xf32>
      %cst_58 = arith.constant 0.000000e+00 : f32
      %229 = vector.shape_cast %222 : vector<8x1xi1> to vector<8x1xi1>
      %230 = vector.broadcast %229 : vector<8x1xi1> to vector<8x32xi1>
      %231 = vector.broadcast %cst_58 : f32 to vector<8x32xf32>
      %232 = arith.select %230, %219, %231 : vector<8x32xi1>, vector<8x32xf32>
      %c32_59 = arith.constant 32 : index
      %c0_60 = arith.constant 0 : index
      %233 = vector.load %arg14[%c32_59, %c0_60] : memref<128x32xf32, #tpu.memory_space<vmem>>, vector<8x32xf32>
      tpu.vector_store %arg14[%c32_59, %c0_60], %232 {strides = array<i32>} : memref<128x32xf32, #tpu.memory_space<vmem>>, vector<8x32xf32>,
      %c40 = arith.constant 40 : index
      %c0_61 = arith.constant 0 : index
      %234 = vector.load %arg13[%c40, %c0_61] : memref<128x128xf32, #tpu.memory_space<vmem>>, vector<8x128xf32>
      %cst_62 = arith.constant dense<0.000000e+00> : vector<8x128xf32>
      %235 = tpu.matmul %225, %22, %cst_62 {dimension_numbers = #tpu.dot_dimension_numbers<[1], [0], [0], [1], [0, 0, 1, 1], [], []>} : vector<8x32xf32>, vector<32x128xf32>, vector<8x128xf32> -> vector<8x128xf32>
      %236 = arith.addf %234, %235 : vector<8x128xf32>
      %237 = vector.extract_strided_slice %236 {offsets = [0, 0], sizes = [8, 32], strides = [1, 1]} : vector<8x128xf32> to vector<8x32xf32>
      %238 = arith.negf %237 : vector<8x32xf32>
      %239 = math.exp %238 : vector<8x32xf32>
      %cst_63 = arith.constant 1.000000e+00 : f32
      %240 = vector.broadcast %cst_63 : f32 to vector<8x32xf32>
      %241 = arith.addf %240, %239 : vector<8x32xf32>
      %242 = arith.divf %240, %241 : vector<8x32xf32>
      %243 = vector.extract_strided_slice %236 {offsets = [0, 32], sizes = [8, 32], strides = [1, 1]} : vector<8x128xf32> to vector<8x32xf32>
      %244 = arith.negf %243 : vector<8x32xf32>
      %245 = math.exp %244 : vector<8x32xf32>
      %cst_64 = arith.constant 1.000000e+00 : f32
      %246 = vector.broadcast %cst_64 : f32 to vector<8x32xf32>
      %247 = arith.addf %246, %245 : vector<8x32xf32>
      %248 = arith.divf %246, %247 : vector<8x32xf32>
      %249 = vector.extract_strided_slice %236 {offsets = [0, 64], sizes = [8, 32], strides = [1, 1]} : vector<8x128xf32> to vector<8x32xf32>
      %250 = math.tanh %249 : vector<8x32xf32>
      %251 = vector.extract_strided_slice %236 {offsets = [0, 96], sizes = [8, 32], strides = [1, 1]} : vector<8x128xf32> to vector<8x32xf32>
      %252 = arith.negf %251 : vector<8x32xf32>
      %253 = math.exp %252 : vector<8x32xf32>
      %cst_65 = arith.constant 1.000000e+00 : f32
      %254 = vector.broadcast %cst_65 : f32 to vector<8x32xf32>
      %255 = arith.addf %254, %253 : vector<8x32xf32>
      %256 = arith.divf %254, %255 : vector<8x32xf32>
      %257 = arith.mulf %248, %228 : vector<8x32xf32>
      %258 = arith.mulf %242, %250 : vector<8x32xf32>
      %259 = arith.addf %257, %258 : vector<8x32xf32>
      %260 = math.tanh %259 : vector<8x32xf32>
      %261 = arith.mulf %256, %260 : vector<8x32xf32>
      %c5_i32 = arith.constant 5 : i32
      %262 = arith.addi %0, %c5_i32 : i32
      %263 = vector.broadcast %262 : i32 to vector<8x1xi32>
      %264 = arith.cmpi sgt, %23, %263 : vector<8x1xi32>
      %265 = vector.shape_cast %264 : vector<8x1xi1> to vector<8x1xi1>
      %266 = vector.broadcast %265 : vector<8x1xi1> to vector<8x32xi1>
      %267 = arith.select %266, %261, %225 : vector<8x32xi1>, vector<8x32xf32>
      %268 = vector.shape_cast %264 : vector<8x1xi1> to vector<8x1xi1>
      %269 = vector.broadcast %268 : vector<8x1xi1> to vector<8x32xi1>
      %270 = arith.select %269, %259, %228 : vector<8x32xi1>, vector<8x32xf32>
      %cst_66 = arith.constant 0.000000e+00 : f32
      %271 = vector.shape_cast %264 : vector<8x1xi1> to vector<8x1xi1>
      %272 = vector.broadcast %271 : vector<8x1xi1> to vector<8x32xi1>
      %273 = vector.broadcast %cst_66 : f32 to vector<8x32xf32>
      %274 = arith.select %272, %261, %273 : vector<8x32xi1>, vector<8x32xf32>
      %c40_67 = arith.constant 40 : index
      %c0_68 = arith.constant 0 : index
      %275 = vector.load %arg14[%c40_67, %c0_68] : memref<128x32xf32, #tpu.memory_space<vmem>>, vector<8x32xf32>
      tpu.vector_store %arg14[%c40_67, %c0_68], %274 {strides = array<i32>} : memref<128x32xf32, #tpu.memory_space<vmem>>, vector<8x32xf32>,
      %c48 = arith.constant 48 : index
      %c0_69 = arith.constant 0 : index
      %276 = vector.load %arg13[%c48, %c0_69] : memref<128x128xf32, #tpu.memory_space<vmem>>, vector<8x128xf32>
      %cst_70 = arith.constant dense<0.000000e+00> : vector<8x128xf32>
      %277 = tpu.matmul %267, %22, %cst_70 {dimension_numbers = #tpu.dot_dimension_numbers<[1], [0], [0], [1], [0, 0, 1, 1], [], []>} : vector<8x32xf32>, vector<32x128xf32>, vector<8x128xf32> -> vector<8x128xf32>
      %278 = arith.addf %276, %277 : vector<8x128xf32>
      %279 = vector.extract_strided_slice %278 {offsets = [0, 0], sizes = [8, 32], strides = [1, 1]} : vector<8x128xf32> to vector<8x32xf32>
      %280 = arith.negf %279 : vector<8x32xf32>
      %281 = math.exp %280 : vector<8x32xf32>
      %cst_71 = arith.constant 1.000000e+00 : f32
      %282 = vector.broadcast %cst_71 : f32 to vector<8x32xf32>
      %283 = arith.addf %282, %281 : vector<8x32xf32>
      %284 = arith.divf %282, %283 : vector<8x32xf32>
      %285 = vector.extract_strided_slice %278 {offsets = [0, 32], sizes = [8, 32], strides = [1, 1]} : vector<8x128xf32> to vector<8x32xf32>
      %286 = arith.negf %285 : vector<8x32xf32>
      %287 = math.exp %286 : vector<8x32xf32>
      %cst_72 = arith.constant 1.000000e+00 : f32
      %288 = vector.broadcast %cst_72 : f32 to vector<8x32xf32>
      %289 = arith.addf %288, %287 : vector<8x32xf32>
      %290 = arith.divf %288, %289 : vector<8x32xf32>
      %291 = vector.extract_strided_slice %278 {offsets = [0, 64], sizes = [8, 32], strides = [1, 1]} : vector<8x128xf32> to vector<8x32xf32>
      %292 = math.tanh %291 : vector<8x32xf32>
      %293 = vector.extract_strided_slice %278 {offsets = [0, 96], sizes = [8, 32], strides = [1, 1]} : vector<8x128xf32> to vector<8x32xf32>
      %294 = arith.negf %293 : vector<8x32xf32>
      %295 = math.exp %294 : vector<8x32xf32>
      %cst_73 = arith.constant 1.000000e+00 : f32
      %296 = vector.broadcast %cst_73 : f32 to vector<8x32xf32>
      %297 = arith.addf %296, %295 : vector<8x32xf32>
      %298 = arith.divf %296, %297 : vector<8x32xf32>
      %299 = arith.mulf %290, %270 : vector<8x32xf32>
      %300 = arith.mulf %284, %292 : vector<8x32xf32>
      %301 = arith.addf %299, %300 : vector<8x32xf32>
      %302 = math.tanh %301 : vector<8x32xf32>
      %303 = arith.mulf %298, %302 : vector<8x32xf32>
      %c6_i32 = arith.constant 6 : i32
      %304 = arith.addi %0, %c6_i32 : i32
      %305 = vector.broadcast %304 : i32 to vector<8x1xi32>
      %306 = arith.cmpi sgt, %23, %305 : vector<8x1xi32>
      %307 = vector.shape_cast %306 : vector<8x1xi1> to vector<8x1xi1>
      %308 = vector.broadcast %307 : vector<8x1xi1> to vector<8x32xi1>
      %309 = arith.select %308, %303, %267 : vector<8x32xi1>, vector<8x32xf32>
      %310 = vector.shape_cast %306 : vector<8x1xi1> to vector<8x1xi1>
      %311 = vector.broadcast %310 : vector<8x1xi1> to vector<8x32xi1>
      %312 = arith.select %311, %301, %270 : vector<8x32xi1>, vector<8x32xf32>
      %cst_74 = arith.constant 0.000000e+00 : f32
      %313 = vector.shape_cast %306 : vector<8x1xi1> to vector<8x1xi1>
      %314 = vector.broadcast %313 : vector<8x1xi1> to vector<8x32xi1>
      %315 = vector.broadcast %cst_74 : f32 to vector<8x32xf32>
      %316 = arith.select %314, %303, %315 : vector<8x32xi1>, vector<8x32xf32>
      %c48_75 = arith.constant 48 : index
      %c0_76 = arith.constant 0 : index
      %317 = vector.load %arg14[%c48_75, %c0_76] : memref<128x32xf32, #tpu.memory_space<vmem>>, vector<8x32xf32>
      tpu.vector_store %arg14[%c48_75, %c0_76], %316 {strides = array<i32>} : memref<128x32xf32, #tpu.memory_space<vmem>>, vector<8x32xf32>,
      %c56 = arith.constant 56 : index
      %c0_77 = arith.constant 0 : index
      %318 = vector.load %arg13[%c56, %c0_77] : memref<128x128xf32, #tpu.memory_space<vmem>>, vector<8x128xf32>
      %cst_78 = arith.constant dense<0.000000e+00> : vector<8x128xf32>
      %319 = tpu.matmul %309, %22, %cst_78 {dimension_numbers = #tpu.dot_dimension_numbers<[1], [0], [0], [1], [0, 0, 1, 1], [], []>} : vector<8x32xf32>, vector<32x128xf32>, vector<8x128xf32> -> vector<8x128xf32>
      %320 = arith.addf %318, %319 : vector<8x128xf32>
      %321 = vector.extract_strided_slice %320 {offsets = [0, 0], sizes = [8, 32], strides = [1, 1]} : vector<8x128xf32> to vector<8x32xf32>
      %322 = arith.negf %321 : vector<8x32xf32>
      %323 = math.exp %322 : vector<8x32xf32>
      %cst_79 = arith.constant 1.000000e+00 : f32
      %324 = vector.broadcast %cst_79 : f32 to vector<8x32xf32>
      %325 = arith.addf %324, %323 : vector<8x32xf32>
      %326 = arith.divf %324, %325 : vector<8x32xf32>
      %327 = vector.extract_strided_slice %320 {offsets = [0, 32], sizes = [8, 32], strides = [1, 1]} : vector<8x128xf32> to vector<8x32xf32>
      %328 = arith.negf %327 : vector<8x32xf32>
      %329 = math.exp %328 : vector<8x32xf32>
      %cst_80 = arith.constant 1.000000e+00 : f32
      %330 = vector.broadcast %cst_80 : f32 to vector<8x32xf32>
      %331 = arith.addf %330, %329 : vector<8x32xf32>
      %332 = arith.divf %330, %331 : vector<8x32xf32>
      %333 = vector.extract_strided_slice %320 {offsets = [0, 64], sizes = [8, 32], strides = [1, 1]} : vector<8x128xf32> to vector<8x32xf32>
      %334 = math.tanh %333 : vector<8x32xf32>
      %335 = vector.extract_strided_slice %320 {offsets = [0, 96], sizes = [8, 32], strides = [1, 1]} : vector<8x128xf32> to vector<8x32xf32>
      %336 = arith.negf %335 : vector<8x32xf32>
      %337 = math.exp %336 : vector<8x32xf32>
      %cst_81 = arith.constant 1.000000e+00 : f32
      %338 = vector.broadcast %cst_81 : f32 to vector<8x32xf32>
      %339 = arith.addf %338, %337 : vector<8x32xf32>
      %340 = arith.divf %338, %339 : vector<8x32xf32>
      %341 = arith.mulf %332, %312 : vector<8x32xf32>
      %342 = arith.mulf %326, %334 : vector<8x32xf32>
      %343 = arith.addf %341, %342 : vector<8x32xf32>
      %344 = math.tanh %343 : vector<8x32xf32>
      %345 = arith.mulf %340, %344 : vector<8x32xf32>
      %c7_i32 = arith.constant 7 : i32
      %346 = arith.addi %0, %c7_i32 : i32
      %347 = vector.broadcast %346 : i32 to vector<8x1xi32>
      %348 = arith.cmpi sgt, %23, %347 : vector<8x1xi32>
      %349 = vector.shape_cast %348 : vector<8x1xi1> to vector<8x1xi1>
      %350 = vector.broadcast %349 : vector<8x1xi1> to vector<8x32xi1>
      %351 = arith.select %350, %345, %309 : vector<8x32xi1>, vector<8x32xf32>
      %352 = vector.shape_cast %348 : vector<8x1xi1> to vector<8x1xi1>
      %353 = vector.broadcast %352 : vector<8x1xi1> to vector<8x32xi1>
      %354 = arith.select %353, %343, %312 : vector<8x32xi1>, vector<8x32xf32>
      %cst_82 = arith.constant 0.000000e+00 : f32
      %355 = vector.shape_cast %348 : vector<8x1xi1> to vector<8x1xi1>
      %356 = vector.broadcast %355 : vector<8x1xi1> to vector<8x32xi1>
      %357 = vector.broadcast %cst_82 : f32 to vector<8x32xf32>
      %358 = arith.select %356, %345, %357 : vector<8x32xi1>, vector<8x32xf32>
      %c56_83 = arith.constant 56 : index
      %c0_84 = arith.constant 0 : index
      %359 = vector.load %arg14[%c56_83, %c0_84] : memref<128x32xf32, #tpu.memory_space<vmem>>, vector<8x32xf32>
      tpu.vector_store %arg14[%c56_83, %c0_84], %358 {strides = array<i32>} : memref<128x32xf32, #tpu.memory_space<vmem>>, vector<8x32xf32>,
      %c64 = arith.constant 64 : index
      %c0_85 = arith.constant 0 : index
      %360 = vector.load %arg13[%c64, %c0_85] : memref<128x128xf32, #tpu.memory_space<vmem>>, vector<8x128xf32>
      %cst_86 = arith.constant dense<0.000000e+00> : vector<8x128xf32>
      %361 = tpu.matmul %351, %22, %cst_86 {dimension_numbers = #tpu.dot_dimension_numbers<[1], [0], [0], [1], [0, 0, 1, 1], [], []>} : vector<8x32xf32>, vector<32x128xf32>, vector<8x128xf32> -> vector<8x128xf32>
      %362 = arith.addf %360, %361 : vector<8x128xf32>
      %363 = vector.extract_strided_slice %362 {offsets = [0, 0], sizes = [8, 32], strides = [1, 1]} : vector<8x128xf32> to vector<8x32xf32>
      %364 = arith.negf %363 : vector<8x32xf32>
      %365 = math.exp %364 : vector<8x32xf32>
      %cst_87 = arith.constant 1.000000e+00 : f32
      %366 = vector.broadcast %cst_87 : f32 to vector<8x32xf32>
      %367 = arith.addf %366, %365 : vector<8x32xf32>
      %368 = arith.divf %366, %367 : vector<8x32xf32>
      %369 = vector.extract_strided_slice %362 {offsets = [0, 32], sizes = [8, 32], strides = [1, 1]} : vector<8x128xf32> to vector<8x32xf32>
      %370 = arith.negf %369 : vector<8x32xf32>
      %371 = math.exp %370 : vector<8x32xf32>
      %cst_88 = arith.constant 1.000000e+00 : f32
      %372 = vector.broadcast %cst_88 : f32 to vector<8x32xf32>
      %373 = arith.addf %372, %371 : vector<8x32xf32>
      %374 = arith.divf %372, %373 : vector<8x32xf32>
      %375 = vector.extract_strided_slice %362 {offsets = [0, 64], sizes = [8, 32], strides = [1, 1]} : vector<8x128xf32> to vector<8x32xf32>
      %376 = math.tanh %375 : vector<8x32xf32>
      %377 = vector.extract_strided_slice %362 {offsets = [0, 96], sizes = [8, 32], strides = [1, 1]} : vector<8x128xf32> to vector<8x32xf32>
      %378 = arith.negf %377 : vector<8x32xf32>
      %379 = math.exp %378 : vector<8x32xf32>
      %cst_89 = arith.constant 1.000000e+00 : f32
      %380 = vector.broadcast %cst_89 : f32 to vector<8x32xf32>
      %381 = arith.addf %380, %379 : vector<8x32xf32>
      %382 = arith.divf %380, %381 : vector<8x32xf32>
      %383 = arith.mulf %374, %354 : vector<8x32xf32>
      %384 = arith.mulf %368, %376 : vector<8x32xf32>
      %385 = arith.addf %383, %384 : vector<8x32xf32>
      %386 = math.tanh %385 : vector<8x32xf32>
      %387 = arith.mulf %382, %386 : vector<8x32xf32>
      %c8_i32 = arith.constant 8 : i32
      %388 = arith.addi %0, %c8_i32 : i32
      %389 = vector.broadcast %388 : i32 to vector<8x1xi32>
      %390 = arith.cmpi sgt, %23, %389 : vector<8x1xi32>
      %391 = vector.shape_cast %390 : vector<8x1xi1> to vector<8x1xi1>
      %392 = vector.broadcast %391 : vector<8x1xi1> to vector<8x32xi1>
      %393 = arith.select %392, %387, %351 : vector<8x32xi1>, vector<8x32xf32>
      %394 = vector.shape_cast %390 : vector<8x1xi1> to vector<8x1xi1>
      %395 = vector.broadcast %394 : vector<8x1xi1> to vector<8x32xi1>
      %396 = arith.select %395, %385, %354 : vector<8x32xi1>, vector<8x32xf32>
      %cst_90 = arith.constant 0.000000e+00 : f32
      %397 = vector.shape_cast %390 : vector<8x1xi1> to vector<8x1xi1>
      %398 = vector.broadcast %397 : vector<8x1xi1> to vector<8x32xi1>
      %399 = vector.broadcast %cst_90 : f32 to vector<8x32xf32>
      %400 = arith.select %398, %387, %399 : vector<8x32xi1>, vector<8x32xf32>
      %c64_91 = arith.constant 64 : index
      %c0_92 = arith.constant 0 : index
      %401 = vector.load %arg14[%c64_91, %c0_92] : memref<128x32xf32, #tpu.memory_space<vmem>>, vector<8x32xf32>
      tpu.vector_store %arg14[%c64_91, %c0_92], %400 {strides = array<i32>} : memref<128x32xf32, #tpu.memory_space<vmem>>, vector<8x32xf32>,
      %c72 = arith.constant 72 : index
      %c0_93 = arith.constant 0 : index
      %402 = vector.load %arg13[%c72, %c0_93] : memref<128x128xf32, #tpu.memory_space<vmem>>, vector<8x128xf32>
      %cst_94 = arith.constant dense<0.000000e+00> : vector<8x128xf32>
      %403 = tpu.matmul %393, %22, %cst_94 {dimension_numbers = #tpu.dot_dimension_numbers<[1], [0], [0], [1], [0, 0, 1, 1], [], []>} : vector<8x32xf32>, vector<32x128xf32>, vector<8x128xf32> -> vector<8x128xf32>
      %404 = arith.addf %402, %403 : vector<8x128xf32>
      %405 = vector.extract_strided_slice %404 {offsets = [0, 0], sizes = [8, 32], strides = [1, 1]} : vector<8x128xf32> to vector<8x32xf32>
      %406 = arith.negf %405 : vector<8x32xf32>
      %407 = math.exp %406 : vector<8x32xf32>
      %cst_95 = arith.constant 1.000000e+00 : f32
      %408 = vector.broadcast %cst_95 : f32 to vector<8x32xf32>
      %409 = arith.addf %408, %407 : vector<8x32xf32>
      %410 = arith.divf %408, %409 : vector<8x32xf32>
      %411 = vector.extract_strided_slice %404 {offsets = [0, 32], sizes = [8, 32], strides = [1, 1]} : vector<8x128xf32> to vector<8x32xf32>
      %412 = arith.negf %411 : vector<8x32xf32>
      %413 = math.exp %412 : vector<8x32xf32>
      %cst_96 = arith.constant 1.000000e+00 : f32
      %414 = vector.broadcast %cst_96 : f32 to vector<8x32xf32>
      %415 = arith.addf %414, %413 : vector<8x32xf32>
      %416 = arith.divf %414, %415 : vector<8x32xf32>
      %417 = vector.extract_strided_slice %404 {offsets = [0, 64], sizes = [8, 32], strides = [1, 1]} : vector<8x128xf32> to vector<8x32xf32>
      %418 = math.tanh %417 : vector<8x32xf32>
      %419 = vector.extract_strided_slice %404 {offsets = [0, 96], sizes = [8, 32], strides = [1, 1]} : vector<8x128xf32> to vector<8x32xf32>
      %420 = arith.negf %419 : vector<8x32xf32>
      %421 = math.exp %420 : vector<8x32xf32>
      %cst_97 = arith.constant 1.000000e+00 : f32
      %422 = vector.broadcast %cst_97 : f32 to vector<8x32xf32>
      %423 = arith.addf %422, %421 : vector<8x32xf32>
      %424 = arith.divf %422, %423 : vector<8x32xf32>
      %425 = arith.mulf %416, %396 : vector<8x32xf32>
      %426 = arith.mulf %410, %418 : vector<8x32xf32>
      %427 = arith.addf %425, %426 : vector<8x32xf32>
      %428 = math.tanh %427 : vector<8x32xf32>
      %429 = arith.mulf %424, %428 : vector<8x32xf32>
      %c9_i32 = arith.constant 9 : i32
      %430 = arith.addi %0, %c9_i32 : i32
      %431 = vector.broadcast %430 : i32 to vector<8x1xi32>
      %432 = arith.cmpi sgt, %23, %431 : vector<8x1xi32>
      %433 = vector.shape_cast %432 : vector<8x1xi1> to vector<8x1xi1>
      %434 = vector.broadcast %433 : vector<8x1xi1> to vector<8x32xi1>
      %435 = arith.select %434, %429, %393 : vector<8x32xi1>, vector<8x32xf32>
      %436 = vector.shape_cast %432 : vector<8x1xi1> to vector<8x1xi1>
      %437 = vector.broadcast %436 : vector<8x1xi1> to vector<8x32xi1>
      %438 = arith.select %437, %427, %396 : vector<8x32xi1>, vector<8x32xf32>
      %cst_98 = arith.constant 0.000000e+00 : f32
      %439 = vector.shape_cast %432 : vector<8x1xi1> to vector<8x1xi1>
      %440 = vector.broadcast %439 : vector<8x1xi1> to vector<8x32xi1>
      %441 = vector.broadcast %cst_98 : f32 to vector<8x32xf32>
      %442 = arith.select %440, %429, %441 : vector<8x32xi1>, vector<8x32xf32>
      %c72_99 = arith.constant 72 : index
      %c0_100 = arith.constant 0 : index
      %443 = vector.load %arg14[%c72_99, %c0_100] : memref<128x32xf32, #tpu.memory_space<vmem>>, vector<8x32xf32>
      tpu.vector_store %arg14[%c72_99, %c0_100], %442 {strides = array<i32>} : memref<128x32xf32, #tpu.memory_space<vmem>>, vector<8x32xf32>,
      %c80 = arith.constant 80 : index
      %c0_101 = arith.constant 0 : index
      %444 = vector.load %arg13[%c80, %c0_101] : memref<128x128xf32, #tpu.memory_space<vmem>>, vector<8x128xf32>
      %cst_102 = arith.constant dense<0.000000e+00> : vector<8x128xf32>
      %445 = tpu.matmul %435, %22, %cst_102 {dimension_numbers = #tpu.dot_dimension_numbers<[1], [0], [0], [1], [0, 0, 1, 1], [], []>} : vector<8x32xf32>, vector<32x128xf32>, vector<8x128xf32> -> vector<8x128xf32>
      %446 = arith.addf %444, %445 : vector<8x128xf32>
      %447 = vector.extract_strided_slice %446 {offsets = [0, 0], sizes = [8, 32], strides = [1, 1]} : vector<8x128xf32> to vector<8x32xf32>
      %448 = arith.negf %447 : vector<8x32xf32>
      %449 = math.exp %448 : vector<8x32xf32>
      %cst_103 = arith.constant 1.000000e+00 : f32
      %450 = vector.broadcast %cst_103 : f32 to vector<8x32xf32>
      %451 = arith.addf %450, %449 : vector<8x32xf32>
      %452 = arith.divf %450, %451 : vector<8x32xf32>
      %453 = vector.extract_strided_slice %446 {offsets = [0, 32], sizes = [8, 32], strides = [1, 1]} : vector<8x128xf32> to vector<8x32xf32>
      %454 = arith.negf %453 : vector<8x32xf32>
      %455 = math.exp %454 : vector<8x32xf32>
      %cst_104 = arith.constant 1.000000e+00 : f32
      %456 = vector.broadcast %cst_104 : f32 to vector<8x32xf32>
      %457 = arith.addf %456, %455 : vector<8x32xf32>
      %458 = arith.divf %456, %457 : vector<8x32xf32>
      %459 = vector.extract_strided_slice %446 {offsets = [0, 64], sizes = [8, 32], strides = [1, 1]} : vector<8x128xf32> to vector<8x32xf32>
      %460 = math.tanh %459 : vector<8x32xf32>
      %461 = vector.extract_strided_slice %446 {offsets = [0, 96], sizes = [8, 32], strides = [1, 1]} : vector<8x128xf32> to vector<8x32xf32>
      %462 = arith.negf %461 : vector<8x32xf32>
      %463 = math.exp %462 : vector<8x32xf32>
      %cst_105 = arith.constant 1.000000e+00 : f32
      %464 = vector.broadcast %cst_105 : f32 to vector<8x32xf32>
      %465 = arith.addf %464, %463 : vector<8x32xf32>
      %466 = arith.divf %464, %465 : vector<8x32xf32>
      %467 = arith.mulf %458, %438 : vector<8x32xf32>
      %468 = arith.mulf %452, %460 : vector<8x32xf32>
      %469 = arith.addf %467, %468 : vector<8x32xf32>
      %470 = math.tanh %469 : vector<8x32xf32>
      %471 = arith.mulf %466, %470 : vector<8x32xf32>
      %c10_i32 = arith.constant 10 : i32
      %472 = arith.addi %0, %c10_i32 : i32
      %473 = vector.broadcast %472 : i32 to vector<8x1xi32>
      %474 = arith.cmpi sgt, %23, %473 : vector<8x1xi32>
      %475 = vector.shape_cast %474 : vector<8x1xi1> to vector<8x1xi1>
      %476 = vector.broadcast %475 : vector<8x1xi1> to vector<8x32xi1>
      %477 = arith.select %476, %471, %435 : vector<8x32xi1>, vector<8x32xf32>
      %478 = vector.shape_cast %474 : vector<8x1xi1> to vector<8x1xi1>
      %479 = vector.broadcast %478 : vector<8x1xi1> to vector<8x32xi1>
      %480 = arith.select %479, %469, %438 : vector<8x32xi1>, vector<8x32xf32>
      %cst_106 = arith.constant 0.000000e+00 : f32
      %481 = vector.shape_cast %474 : vector<8x1xi1> to vector<8x1xi1>
      %482 = vector.broadcast %481 : vector<8x1xi1> to vector<8x32xi1>
      %483 = vector.broadcast %cst_106 : f32 to vector<8x32xf32>
      %484 = arith.select %482, %471, %483 : vector<8x32xi1>, vector<8x32xf32>
      %c80_107 = arith.constant 80 : index
      %c0_108 = arith.constant 0 : index
      %485 = vector.load %arg14[%c80_107, %c0_108] : memref<128x32xf32, #tpu.memory_space<vmem>>, vector<8x32xf32>
      tpu.vector_store %arg14[%c80_107, %c0_108], %484 {strides = array<i32>} : memref<128x32xf32, #tpu.memory_space<vmem>>, vector<8x32xf32>,
      %c88 = arith.constant 88 : index
      %c0_109 = arith.constant 0 : index
      %486 = vector.load %arg13[%c88, %c0_109] : memref<128x128xf32, #tpu.memory_space<vmem>>, vector<8x128xf32>
      %cst_110 = arith.constant dense<0.000000e+00> : vector<8x128xf32>
      %487 = tpu.matmul %477, %22, %cst_110 {dimension_numbers = #tpu.dot_dimension_numbers<[1], [0], [0], [1], [0, 0, 1, 1], [], []>} : vector<8x32xf32>, vector<32x128xf32>, vector<8x128xf32> -> vector<8x128xf32>
      %488 = arith.addf %486, %487 : vector<8x128xf32>
      %489 = vector.extract_strided_slice %488 {offsets = [0, 0], sizes = [8, 32], strides = [1, 1]} : vector<8x128xf32> to vector<8x32xf32>
      %490 = arith.negf %489 : vector<8x32xf32>
      %491 = math.exp %490 : vector<8x32xf32>
      %cst_111 = arith.constant 1.000000e+00 : f32
      %492 = vector.broadcast %cst_111 : f32 to vector<8x32xf32>
      %493 = arith.addf %492, %491 : vector<8x32xf32>
      %494 = arith.divf %492, %493 : vector<8x32xf32>
      %495 = vector.extract_strided_slice %488 {offsets = [0, 32], sizes = [8, 32], strides = [1, 1]} : vector<8x128xf32> to vector<8x32xf32>
      %496 = arith.negf %495 : vector<8x32xf32>
      %497 = math.exp %496 : vector<8x32xf32>
      %cst_112 = arith.constant 1.000000e+00 : f32
      %498 = vector.broadcast %cst_112 : f32 to vector<8x32xf32>
      %499 = arith.addf %498, %497 : vector<8x32xf32>
      %500 = arith.divf %498, %499 : vector<8x32xf32>
      %501 = vector.extract_strided_slice %488 {offsets = [0, 64], sizes = [8, 32], strides = [1, 1]} : vector<8x128xf32> to vector<8x32xf32>
      %502 = math.tanh %501 : vector<8x32xf32>
      %503 = vector.extract_strided_slice %488 {offsets = [0, 96], sizes = [8, 32], strides = [1, 1]} : vector<8x128xf32> to vector<8x32xf32>
      %504 = arith.negf %503 : vector<8x32xf32>
      %505 = math.exp %504 : vector<8x32xf32>
      %cst_113 = arith.constant 1.000000e+00 : f32
      %506 = vector.broadcast %cst_113 : f32 to vector<8x32xf32>
      %507 = arith.addf %506, %505 : vector<8x32xf32>
      %508 = arith.divf %506, %507 : vector<8x32xf32>
      %509 = arith.mulf %500, %480 : vector<8x32xf32>
      %510 = arith.mulf %494, %502 : vector<8x32xf32>
      %511 = arith.addf %509, %510 : vector<8x32xf32>
      %512 = math.tanh %511 : vector<8x32xf32>
      %513 = arith.mulf %508, %512 : vector<8x32xf32>
      %c11_i32 = arith.constant 11 : i32
      %514 = arith.addi %0, %c11_i32 : i32
      %515 = vector.broadcast %514 : i32 to vector<8x1xi32>
      %516 = arith.cmpi sgt, %23, %515 : vector<8x1xi32>
      %517 = vector.shape_cast %516 : vector<8x1xi1> to vector<8x1xi1>
      %518 = vector.broadcast %517 : vector<8x1xi1> to vector<8x32xi1>
      %519 = arith.select %518, %513, %477 : vector<8x32xi1>, vector<8x32xf32>
      %520 = vector.shape_cast %516 : vector<8x1xi1> to vector<8x1xi1>
      %521 = vector.broadcast %520 : vector<8x1xi1> to vector<8x32xi1>
      %522 = arith.select %521, %511, %480 : vector<8x32xi1>, vector<8x32xf32>
      %cst_114 = arith.constant 0.000000e+00 : f32
      %523 = vector.shape_cast %516 : vector<8x1xi1> to vector<8x1xi1>
      %524 = vector.broadcast %523 : vector<8x1xi1> to vector<8x32xi1>
      %525 = vector.broadcast %cst_114 : f32 to vector<8x32xf32>
      %526 = arith.select %524, %513, %525 : vector<8x32xi1>, vector<8x32xf32>
      %c88_115 = arith.constant 88 : index
      %c0_116 = arith.constant 0 : index
      %527 = vector.load %arg14[%c88_115, %c0_116] : memref<128x32xf32, #tpu.memory_space<vmem>>, vector<8x32xf32>
      tpu.vector_store %arg14[%c88_115, %c0_116], %526 {strides = array<i32>} : memref<128x32xf32, #tpu.memory_space<vmem>>, vector<8x32xf32>,
      %c96 = arith.constant 96 : index
      %c0_117 = arith.constant 0 : index
      %528 = vector.load %arg13[%c96, %c0_117] : memref<128x128xf32, #tpu.memory_space<vmem>>, vector<8x128xf32>
      %cst_118 = arith.constant dense<0.000000e+00> : vector<8x128xf32>
      %529 = tpu.matmul %519, %22, %cst_118 {dimension_numbers = #tpu.dot_dimension_numbers<[1], [0], [0], [1], [0, 0, 1, 1], [], []>} : vector<8x32xf32>, vector<32x128xf32>, vector<8x128xf32> -> vector<8x128xf32>
      %530 = arith.addf %528, %529 : vector<8x128xf32>
      %531 = vector.extract_strided_slice %530 {offsets = [0, 0], sizes = [8, 32], strides = [1, 1]} : vector<8x128xf32> to vector<8x32xf32>
      %532 = arith.negf %531 : vector<8x32xf32>
      %533 = math.exp %532 : vector<8x32xf32>
      %cst_119 = arith.constant 1.000000e+00 : f32
      %534 = vector.broadcast %cst_119 : f32 to vector<8x32xf32>
      %535 = arith.addf %534, %533 : vector<8x32xf32>
      %536 = arith.divf %534, %535 : vector<8x32xf32>
      %537 = vector.extract_strided_slice %530 {offsets = [0, 32], sizes = [8, 32], strides = [1, 1]} : vector<8x128xf32> to vector<8x32xf32>
      %538 = arith.negf %537 : vector<8x32xf32>
      %539 = math.exp %538 : vector<8x32xf32>
      %cst_120 = arith.constant 1.000000e+00 : f32
      %540 = vector.broadcast %cst_120 : f32 to vector<8x32xf32>
      %541 = arith.addf %540, %539 : vector<8x32xf32>
      %542 = arith.divf %540, %541 : vector<8x32xf32>
      %543 = vector.extract_strided_slice %530 {offsets = [0, 64], sizes = [8, 32], strides = [1, 1]} : vector<8x128xf32> to vector<8x32xf32>
      %544 = math.tanh %543 : vector<8x32xf32>
      %545 = vector.extract_strided_slice %530 {offsets = [0, 96], sizes = [8, 32], strides = [1, 1]} : vector<8x128xf32> to vector<8x32xf32>
      %546 = arith.negf %545 : vector<8x32xf32>
      %547 = math.exp %546 : vector<8x32xf32>
      %cst_121 = arith.constant 1.000000e+00 : f32
      %548 = vector.broadcast %cst_121 : f32 to vector<8x32xf32>
      %549 = arith.addf %548, %547 : vector<8x32xf32>
      %550 = arith.divf %548, %549 : vector<8x32xf32>
      %551 = arith.mulf %542, %522 : vector<8x32xf32>
      %552 = arith.mulf %536, %544 : vector<8x32xf32>
      %553 = arith.addf %551, %552 : vector<8x32xf32>
      %554 = math.tanh %553 : vector<8x32xf32>
      %555 = arith.mulf %550, %554 : vector<8x32xf32>
      %c12_i32 = arith.constant 12 : i32
      %556 = arith.addi %0, %c12_i32 : i32
      %557 = vector.broadcast %556 : i32 to vector<8x1xi32>
      %558 = arith.cmpi sgt, %23, %557 : vector<8x1xi32>
      %559 = vector.shape_cast %558 : vector<8x1xi1> to vector<8x1xi1>
      %560 = vector.broadcast %559 : vector<8x1xi1> to vector<8x32xi1>
      %561 = arith.select %560, %555, %519 : vector<8x32xi1>, vector<8x32xf32>
      %562 = vector.shape_cast %558 : vector<8x1xi1> to vector<8x1xi1>
      %563 = vector.broadcast %562 : vector<8x1xi1> to vector<8x32xi1>
      %564 = arith.select %563, %553, %522 : vector<8x32xi1>, vector<8x32xf32>
      %cst_122 = arith.constant 0.000000e+00 : f32
      %565 = vector.shape_cast %558 : vector<8x1xi1> to vector<8x1xi1>
      %566 = vector.broadcast %565 : vector<8x1xi1> to vector<8x32xi1>
      %567 = vector.broadcast %cst_122 : f32 to vector<8x32xf32>
      %568 = arith.select %566, %555, %567 : vector<8x32xi1>, vector<8x32xf32>
      %c96_123 = arith.constant 96 : index
      %c0_124 = arith.constant 0 : index
      %569 = vector.load %arg14[%c96_123, %c0_124] : memref<128x32xf32, #tpu.memory_space<vmem>>, vector<8x32xf32>
      tpu.vector_store %arg14[%c96_123, %c0_124], %568 {strides = array<i32>} : memref<128x32xf32, #tpu.memory_space<vmem>>, vector<8x32xf32>,
      %c104 = arith.constant 104 : index
      %c0_125 = arith.constant 0 : index
      %570 = vector.load %arg13[%c104, %c0_125] : memref<128x128xf32, #tpu.memory_space<vmem>>, vector<8x128xf32>
      %cst_126 = arith.constant dense<0.000000e+00> : vector<8x128xf32>
      %571 = tpu.matmul %561, %22, %cst_126 {dimension_numbers = #tpu.dot_dimension_numbers<[1], [0], [0], [1], [0, 0, 1, 1], [], []>} : vector<8x32xf32>, vector<32x128xf32>, vector<8x128xf32> -> vector<8x128xf32>
      %572 = arith.addf %570, %571 : vector<8x128xf32>
      %573 = vector.extract_strided_slice %572 {offsets = [0, 0], sizes = [8, 32], strides = [1, 1]} : vector<8x128xf32> to vector<8x32xf32>
      %574 = arith.negf %573 : vector<8x32xf32>
      %575 = math.exp %574 : vector<8x32xf32>
      %cst_127 = arith.constant 1.000000e+00 : f32
      %576 = vector.broadcast %cst_127 : f32 to vector<8x32xf32>
      %577 = arith.addf %576, %575 : vector<8x32xf32>
      %578 = arith.divf %576, %577 : vector<8x32xf32>
      %579 = vector.extract_strided_slice %572 {offsets = [0, 32], sizes = [8, 32], strides = [1, 1]} : vector<8x128xf32> to vector<8x32xf32>
      %580 = arith.negf %579 : vector<8x32xf32>
      %581 = math.exp %580 : vector<8x32xf32>
      %cst_128 = arith.constant 1.000000e+00 : f32
      %582 = vector.broadcast %cst_128 : f32 to vector<8x32xf32>
      %583 = arith.addf %582, %581 : vector<8x32xf32>
      %584 = arith.divf %582, %583 : vector<8x32xf32>
      %585 = vector.extract_strided_slice %572 {offsets = [0, 64], sizes = [8, 32], strides = [1, 1]} : vector<8x128xf32> to vector<8x32xf32>
      %586 = math.tanh %585 : vector<8x32xf32>
      %587 = vector.extract_strided_slice %572 {offsets = [0, 96], sizes = [8, 32], strides = [1, 1]} : vector<8x128xf32> to vector<8x32xf32>
      %588 = arith.negf %587 : vector<8x32xf32>
      %589 = math.exp %588 : vector<8x32xf32>
      %cst_129 = arith.constant 1.000000e+00 : f32
      %590 = vector.broadcast %cst_129 : f32 to vector<8x32xf32>
      %591 = arith.addf %590, %589 : vector<8x32xf32>
      %592 = arith.divf %590, %591 : vector<8x32xf32>
      %593 = arith.mulf %584, %564 : vector<8x32xf32>
      %594 = arith.mulf %578, %586 : vector<8x32xf32>
      %595 = arith.addf %593, %594 : vector<8x32xf32>
      %596 = math.tanh %595 : vector<8x32xf32>
      %597 = arith.mulf %592, %596 : vector<8x32xf32>
      %c13_i32 = arith.constant 13 : i32
      %598 = arith.addi %0, %c13_i32 : i32
      %599 = vector.broadcast %598 : i32 to vector<8x1xi32>
      %600 = arith.cmpi sgt, %23, %599 : vector<8x1xi32>
      %601 = vector.shape_cast %600 : vector<8x1xi1> to vector<8x1xi1>
      %602 = vector.broadcast %601 : vector<8x1xi1> to vector<8x32xi1>
      %603 = arith.select %602, %597, %561 : vector<8x32xi1>, vector<8x32xf32>
      %604 = vector.shape_cast %600 : vector<8x1xi1> to vector<8x1xi1>
      %605 = vector.broadcast %604 : vector<8x1xi1> to vector<8x32xi1>
      %606 = arith.select %605, %595, %564 : vector<8x32xi1>, vector<8x32xf32>
      %cst_130 = arith.constant 0.000000e+00 : f32
      %607 = vector.shape_cast %600 : vector<8x1xi1> to vector<8x1xi1>
      %608 = vector.broadcast %607 : vector<8x1xi1> to vector<8x32xi1>
      %609 = vector.broadcast %cst_130 : f32 to vector<8x32xf32>
      %610 = arith.select %608, %597, %609 : vector<8x32xi1>, vector<8x32xf32>
      %c104_131 = arith.constant 104 : index
      %c0_132 = arith.constant 0 : index
      %611 = vector.load %arg14[%c104_131, %c0_132] : memref<128x32xf32, #tpu.memory_space<vmem>>, vector<8x32xf32>
      tpu.vector_store %arg14[%c104_131, %c0_132], %610 {strides = array<i32>} : memref<128x32xf32, #tpu.memory_space<vmem>>, vector<8x32xf32>,
      %c112 = arith.constant 112 : index
      %c0_133 = arith.constant 0 : index
      %612 = vector.load %arg13[%c112, %c0_133] : memref<128x128xf32, #tpu.memory_space<vmem>>, vector<8x128xf32>
      %cst_134 = arith.constant dense<0.000000e+00> : vector<8x128xf32>
      %613 = tpu.matmul %603, %22, %cst_134 {dimension_numbers = #tpu.dot_dimension_numbers<[1], [0], [0], [1], [0, 0, 1, 1], [], []>} : vector<8x32xf32>, vector<32x128xf32>, vector<8x128xf32> -> vector<8x128xf32>
      %614 = arith.addf %612, %613 : vector<8x128xf32>
      %615 = vector.extract_strided_slice %614 {offsets = [0, 0], sizes = [8, 32], strides = [1, 1]} : vector<8x128xf32> to vector<8x32xf32>
      %616 = arith.negf %615 : vector<8x32xf32>
      %617 = math.exp %616 : vector<8x32xf32>
      %cst_135 = arith.constant 1.000000e+00 : f32
      %618 = vector.broadcast %cst_135 : f32 to vector<8x32xf32>
      %619 = arith.addf %618, %617 : vector<8x32xf32>
      %620 = arith.divf %618, %619 : vector<8x32xf32>
      %621 = vector.extract_strided_slice %614 {offsets = [0, 32], sizes = [8, 32], strides = [1, 1]} : vector<8x128xf32> to vector<8x32xf32>
      %622 = arith.negf %621 : vector<8x32xf32>
      %623 = math.exp %622 : vector<8x32xf32>
      %cst_136 = arith.constant 1.000000e+00 : f32
      %624 = vector.broadcast %cst_136 : f32 to vector<8x32xf32>
      %625 = arith.addf %624, %623 : vector<8x32xf32>
      %626 = arith.divf %624, %625 : vector<8x32xf32>
      %627 = vector.extract_strided_slice %614 {offsets = [0, 64], sizes = [8, 32], strides = [1, 1]} : vector<8x128xf32> to vector<8x32xf32>
      %628 = math.tanh %627 : vector<8x32xf32>
      %629 = vector.extract_strided_slice %614 {offsets = [0, 96], sizes = [8, 32], strides = [1, 1]} : vector<8x128xf32> to vector<8x32xf32>
      %630 = arith.negf %629 : vector<8x32xf32>
      %631 = math.exp %630 : vector<8x32xf32>
      %cst_137 = arith.constant 1.000000e+00 : f32
      %632 = vector.broadcast %cst_137 : f32 to vector<8x32xf32>
      %633 = arith.addf %632, %631 : vector<8x32xf32>
      %634 = arith.divf %632, %633 : vector<8x32xf32>
      %635 = arith.mulf %626, %606 : vector<8x32xf32>
      %636 = arith.mulf %620, %628 : vector<8x32xf32>
      %637 = arith.addf %635, %636 : vector<8x32xf32>
      %638 = math.tanh %637 : vector<8x32xf32>
      %639 = arith.mulf %634, %638 : vector<8x32xf32>
      %c14_i32 = arith.constant 14 : i32
      %640 = arith.addi %0, %c14_i32 : i32
      %641 = vector.broadcast %640 : i32 to vector<8x1xi32>
      %642 = arith.cmpi sgt, %23, %641 : vector<8x1xi32>
      %643 = vector.shape_cast %642 : vector<8x1xi1> to vector<8x1xi1>
      %644 = vector.broadcast %643 : vector<8x1xi1> to vector<8x32xi1>
      %645 = arith.select %644, %639, %603 : vector<8x32xi1>, vector<8x32xf32>
      %646 = vector.shape_cast %642 : vector<8x1xi1> to vector<8x1xi1>
      %647 = vector.broadcast %646 : vector<8x1xi1> to vector<8x32xi1>
      %648 = arith.select %647, %637, %606 : vector<8x32xi1>, vector<8x32xf32>
      %cst_138 = arith.constant 0.000000e+00 : f32
      %649 = vector.shape_cast %642 : vector<8x1xi1> to vector<8x1xi1>
      %650 = vector.broadcast %649 : vector<8x1xi1> to vector<8x32xi1>
      %651 = vector.broadcast %cst_138 : f32 to vector<8x32xf32>
      %652 = arith.select %650, %639, %651 : vector<8x32xi1>, vector<8x32xf32>
      %c112_139 = arith.constant 112 : index
      %c0_140 = arith.constant 0 : index
      %653 = vector.load %arg14[%c112_139, %c0_140] : memref<128x32xf32, #tpu.memory_space<vmem>>, vector<8x32xf32>
      tpu.vector_store %arg14[%c112_139, %c0_140], %652 {strides = array<i32>} : memref<128x32xf32, #tpu.memory_space<vmem>>, vector<8x32xf32>,
      %c120 = arith.constant 120 : index
      %c0_141 = arith.constant 0 : index
      %654 = vector.load %arg13[%c120, %c0_141] : memref<128x128xf32, #tpu.memory_space<vmem>>, vector<8x128xf32>
      %cst_142 = arith.constant dense<0.000000e+00> : vector<8x128xf32>
      %655 = tpu.matmul %645, %22, %cst_142 {dimension_numbers = #tpu.dot_dimension_numbers<[1], [0], [0], [1], [0, 0, 1, 1], [], []>} : vector<8x32xf32>, vector<32x128xf32>, vector<8x128xf32> -> vector<8x128xf32>
      %656 = arith.addf %654, %655 : vector<8x128xf32>
      %657 = vector.extract_strided_slice %656 {offsets = [0, 0], sizes = [8, 32], strides = [1, 1]} : vector<8x128xf32> to vector<8x32xf32>
      %658 = arith.negf %657 : vector<8x32xf32>
      %659 = math.exp %658 : vector<8x32xf32>
      %cst_143 = arith.constant 1.000000e+00 : f32
      %660 = vector.broadcast %cst_143 : f32 to vector<8x32xf32>
      %661 = arith.addf %660, %659 : vector<8x32xf32>
      %662 = arith.divf %660, %661 : vector<8x32xf32>
      %663 = vector.extract_strided_slice %656 {offsets = [0, 32], sizes = [8, 32], strides = [1, 1]} : vector<8x128xf32> to vector<8x32xf32>
      %664 = arith.negf %663 : vector<8x32xf32>
      %665 = math.exp %664 : vector<8x32xf32>
      %cst_144 = arith.constant 1.000000e+00 : f32
      %666 = vector.broadcast %cst_144 : f32 to vector<8x32xf32>
      %667 = arith.addf %666, %665 : vector<8x32xf32>
      %668 = arith.divf %666, %667 : vector<8x32xf32>
      %669 = vector.extract_strided_slice %656 {offsets = [0, 64], sizes = [8, 32], strides = [1, 1]} : vector<8x128xf32> to vector<8x32xf32>
      %670 = math.tanh %669 : vector<8x32xf32>
      %671 = vector.extract_strided_slice %656 {offsets = [0, 96], sizes = [8, 32], strides = [1, 1]} : vector<8x128xf32> to vector<8x32xf32>
      %672 = arith.negf %671 : vector<8x32xf32>
      %673 = math.exp %672 : vector<8x32xf32>
      %cst_145 = arith.constant 1.000000e+00 : f32
      %674 = vector.broadcast %cst_145 : f32 to vector<8x32xf32>
      %675 = arith.addf %674, %673 : vector<8x32xf32>
      %676 = arith.divf %674, %675 : vector<8x32xf32>
      %677 = arith.mulf %668, %648 : vector<8x32xf32>
      %678 = arith.mulf %662, %670 : vector<8x32xf32>
      %679 = arith.addf %677, %678 : vector<8x32xf32>
      %680 = math.tanh %679 : vector<8x32xf32>
      %681 = arith.mulf %676, %680 : vector<8x32xf32>
      %c15_i32 = arith.constant 15 : i32
      %682 = arith.addi %0, %c15_i32 : i32
      %683 = vector.broadcast %682 : i32 to vector<8x1xi32>
      %684 = arith.cmpi sgt, %23, %683 : vector<8x1xi32>
      %685 = vector.shape_cast %684 : vector<8x1xi1> to vector<8x1xi1>
      %686 = vector.broadcast %685 : vector<8x1xi1> to vector<8x32xi1>
      %687 = arith.select %686, %681, %645 : vector<8x32xi1>, vector<8x32xf32>
      %688 = vector.shape_cast %684 : vector<8x1xi1> to vector<8x1xi1>
      %689 = vector.broadcast %688 : vector<8x1xi1> to vector<8x32xi1>
      %690 = arith.select %689, %679, %648 : vector<8x32xi1>, vector<8x32xf32>
      %cst_146 = arith.constant 0.000000e+00 : f32
      %691 = vector.shape_cast %684 : vector<8x1xi1> to vector<8x1xi1>
      %692 = vector.broadcast %691 : vector<8x1xi1> to vector<8x32xi1>
      %693 = vector.broadcast %cst_146 : f32 to vector<8x32xf32>
      %694 = arith.select %692, %681, %693 : vector<8x32xi1>, vector<8x32xf32>
      %c120_147 = arith.constant 120 : index
      %c0_148 = arith.constant 0 : index
      %695 = vector.load %arg14[%c120_147, %c0_148] : memref<128x32xf32, #tpu.memory_space<vmem>>, vector<8x32xf32>
      tpu.vector_store %arg14[%c120_147, %c0_148], %694 {strides = array<i32>} : memref<128x32xf32, #tpu.memory_space<vmem>>, vector<8x32xf32>,
      %c0_149 = arith.constant 0 : index
      %c0_150 = arith.constant 0 : index
      %696 = vector.load %arg11[%c0_149, %c0_150] : memref<8x32xf32, #tpu.memory_space<vmem>>, vector<8x32xf32>
      tpu.vector_store %arg11[%c0_149, %c0_150], %687 {strides = array<i32>} : memref<8x32xf32, #tpu.memory_space<vmem>>, vector<8x32xf32>,
      %c0_151 = arith.constant 0 : index
      %c0_152 = arith.constant 0 : index
      %697 = vector.load %arg12[%c0_151, %c0_152] : memref<8x32xf32, #tpu.memory_space<vmem>>, vector<8x32xf32>
      tpu.vector_store %arg12[%c0_151, %c0_152], %690 {strides = array<i32>} : memref<8x32xf32, #tpu.memory_space<vmem>>, vector<8x32xf32>,
      %c0_153 = arith.constant 0 : index
      %c0_154 = arith.constant 0 : index
      %698 = vector.load %arg14[%c0_153, %c0_154] : memref<128x32xf32, #tpu.memory_space<vmem>>, vector<128x32xf32>
      %c0_155 = arith.constant 0 : index
      %c0_156 = arith.constant 0 : index
      %699 = vector.load %arg8[%c0_155, %c0_156] : memref<32x16xf32, #tpu.memory_space<vmem>>, vector<32x16xf32>
      %cst_157 = arith.constant dense<0.000000e+00> : vector<128x16xf32>
      %700 = tpu.matmul %698, %699, %cst_157 {dimension_numbers = #tpu.dot_dimension_numbers<[1], [0], [0], [1], [0, 0, 1, 1], [], []>} : vector<128x32xf32>, vector<32x16xf32>, vector<128x16xf32> -> vector<128x16xf32>
      %c0_158 = arith.constant 0 : index
      %c0_159 = arith.constant 0 : index
      %701 = vector.load %arg9[%c0_158, %c0_159] : memref<1x16xf32, #tpu.memory_space<vmem>>, vector<1x16xf32>
      %702 = vector.broadcast %701 : vector<1x16xf32> to vector<128x16xf32>
      %703 = arith.addf %700, %702 : vector<128x16xf32>
      %704 = vector.shape_cast %703 : vector<128x16xf32> to vector<16x8x16xf32>
      %c0_160 = arith.constant 0 : index
      %c0_161 = arith.constant 0 : index
      %c0_162 = arith.constant 0 : index
      %705 = vector.load %arg10[%c0_160, %c0_161, %c0_162] : memref<16x8x16xf32, #tpu.memory_space<vmem>>, vector<16x8x16xf32>
      tpu.vector_store %arg10[%c0_160, %c0_161, %c0_162], %704 {strides = array<i32>} : memref<16x8x16xf32, #tpu.memory_space<vmem>>, vector<16x8x16xf32>,
    } else {
    }
    %9 = arith.cmpi sge, %0, %5 : i32
    %10 = arith.extui %9 : i1 to i32
    %c0_i32_2 = arith.constant 0 : i32
    %11 = arith.cmpi ne, %10, %c0_i32_2 : i32
    scf.if %11 {
      %c0 = arith.constant 0 : index
      %c0_3 = arith.constant 0 : index
      %12 = vector.load %arg9[%c0, %c0_3] : memref<1x16xf32, #tpu.memory_space<vmem>>, vector<1x16xf32>
      %13 = vector.shape_cast %12 : vector<1x16xf32> to vector<1x1x16xf32>
      %14 = vector.broadcast %13 : vector<1x1x16xf32> to vector<16x8x16xf32>
      %c0_4 = arith.constant 0 : index
      %c0_5 = arith.constant 0 : index
      %c0_6 = arith.constant 0 : index
      %15 = vector.load %arg10[%c0_4, %c0_5, %c0_6] : memref<16x8x16xf32, #tpu.memory_space<vmem>>, vector<16x8x16xf32>
      tpu.vector_store %arg10[%c0_4, %c0_5, %c0_6], %14 {strides = array<i32>} : memref<16x8x16xf32, #tpu.memory_space<vmem>>, vector<16x8x16xf32>,
    } else {
    }
    return
  }
  func.func @transform_0(%arg0: i32, %arg1: i32, %arg2: memref<1xi32, #tpu.memory_space<smem>>) -> (i32, i32, i32) {
    %c0_i32 = arith.constant 0 : i32
    %c0_i32_0 = arith.constant 0 : i32
    return %arg1, %arg0, %c0_i32 : i32, i32, i32
  }
  func.func @transform_1(%arg0: i32, %arg1: i32, %arg2: memref<1xi32, #tpu.memory_space<smem>>) -> (i32, i32) {
    %c0_i32 = arith.constant 0 : i32
    %c0_i32_0 = arith.constant 0 : i32
    return %arg0, %c0_i32 : i32, i32
  }
  func.func @transform_2(%arg0: i32, %arg1: i32, %arg2: memref<1xi32, #tpu.memory_space<smem>>) -> (i32, i32) {
    %c0_i32 = arith.constant 0 : i32
    %c0_i32_0 = arith.constant 0 : i32
    %c0_i32_1 = arith.constant 0 : i32
    return %c0_i32, %c0_i32_0 : i32, i32
  }
  func.func @transform_3(%arg0: i32, %arg1: i32, %arg2: memref<1xi32, #tpu.memory_space<smem>>) -> (i32, i32) {
    %c0_i32 = arith.constant 0 : i32
    %c0_i32_0 = arith.constant 0 : i32
    %c0_i32_1 = arith.constant 0 : i32
    return %c0_i32, %c0_i32_0 : i32, i32
  }
  func.func @transform_4(%arg0: i32, %arg1: i32, %arg2: memref<1xi32, #tpu.memory_space<smem>>) -> (i32, i32) {
    %c0_i32 = arith.constant 0 : i32
    %c0_i32_0 = arith.constant 0 : i32
    %c0_i32_1 = arith.constant 0 : i32
    return %c0_i32, %c0_i32_0 : i32, i32
  }
  func.func @transform_5(%arg0: i32, %arg1: i32, %arg2: memref<1xi32, #tpu.memory_space<smem>>) -> (i32, i32) {
    %c0_i32 = arith.constant 0 : i32
    %c0_i32_0 = arith.constant 0 : i32
    %c0_i32_1 = arith.constant 0 : i32
    return %c0_i32, %c0_i32_0 : i32, i32
  }
  func.func @transform_6(%arg0: i32, %arg1: i32, %arg2: memref<1xi32, #tpu.memory_space<smem>>) -> (i32, i32) {
    %c0_i32 = arith.constant 0 : i32
    %c0_i32_0 = arith.constant 0 : i32
    %c0_i32_1 = arith.constant 0 : i32
    return %c0_i32, %c0_i32_0 : i32, i32
  }
  func.func @transform_7(%arg0: i32, %arg1: i32, %arg2: memref<1xi32, #tpu.memory_space<smem>>) -> (i32, i32, i32) {
    %c0_i32 = arith.constant 0 : i32
    %c0_i32_0 = arith.constant 0 : i32
    return %arg1, %arg0, %c0_i32 : i32, i32, i32
  }
}

</mosaic_0001>

<llo_original>
// kernel: tpu_custom_call.1
$region0: #{tpu_custom_call.1}
  #allocation0 [shape = 'u32[]', space=smem, size = 0x4, offset = 0x4, fixed_abs, tag = 'smem constant byte address 0x4 - core index']
  #allocation1 [shape = 'u32[144,128]{1,0:T(1,128)}', space=vmem, size = 0x12000, scoped, tag = 'internal scratch']
  #allocation2 [shape = 'f32[8,32]{1,0:T(8,128)}', space=vmem, size = 0x1000, scoped, tag = 'scratch operand']
  #allocation3 [shape = 'f32[8,32]{1,0:T(8,128)}', space=vmem, size = 0x1000, scoped, tag = 'scratch operand']
  #allocation4 [shape = 'f32[128,128]{1,0:T(8,128)}', space=vmem, size = 0x10000, scoped, tag = 'scratch operand']
  #allocation5 [shape = 'f32[128,32]{1,0:T(8,128)}', space=vmem, size = 0x10000, scoped, tag = 'scratch operand']
  #allocation6 [shape = 's32[1]{0}', space=sflag, size = 0x4, scoped, tag = 'scoped memory for tpu_custom_call.1']
  #allocation7 [shape = 's32[1]{0:T(128)S(6)}', space=smem, size = 0x200, scoped, tag = 'prefetched SMEM operand 0']
  %s0 = inlined_call_operand.<no memory space> [shape: s32[1], index: 0, kind: input, shape index: {}]
  %s1 = inlined_call_operand.hbm [shape: f32[16,8,32], index: 1, kind: input, shape index: {}]
  %s2 = inlined_call_operand.vmem [shape: s32[8,1], index: 2, kind: input, shape index: {}]
  %s3 = inlined_call_operand.vmem [shape: f32[32,128], index: 3, kind: input, shape index: {}]
  %s4 = inlined_call_operand.vmem [shape: f32[32,128], index: 4, kind: input, shape index: {}]
  %s5 = inlined_call_operand.vmem [shape: f32[1,128], index: 5, kind: input, shape index: {}]
  %s6 = inlined_call_operand.vmem [shape: f32[32,16], index: 6, kind: input, shape index: {}]
  %s7 = inlined_call_operand.vmem [shape: f32[1,16], index: 7, kind: input, shape index: {}]
  %s8 = inlined_call_operand.hbm [shape: f32[16,8,16], index: 8, kind: output, shape index: {}]
  %s9 = sld [smem:[#allocation0]]
  $region54: #{tpu_custom_call.1} parent=0
    _
  %s11 = ssub.s32 1, %s9
  %s12 = scalar_select 0, %s11, %s9
  %13 = sst [smem:[#allocation7]] %s0
  $region1: #{tpu_custom_call.1} parent=0
    #allocation8 [shape = 'u8[65536]{0}', space=vmem, size = 0x10000, scoped, tag = 'input window, operand 1, single buffered']
    #allocation9 [shape = 's32[1]{0}', space=sflag, size = 0x4, scoped, tag = 'scoped memory for tpu_custom_call.1']
    #allocation10 [shape = 's32[1]{0}', space=sflag, size = 0x4, scoped, tag = 'scoped memory for tpu_custom_call.1']
    #allocation11 [shape = 'u8[65536]{0}', space=vmem, size = 0x10000, scoped, tag = 'output window, operand 0, single buffered']
    %14 = vsyncpa [#allocation9], 0
    %15 = vsyncpa [#allocation10], 0
    // Predicated region
    $region2: #{tpu_custom_call.1} parent=1 // pred_check
      _
    $region3: #{tpu_custom_call.1} parent=1 // pred_check_branch
      %17 = sbr.rel (0) target = $region5
    $region4: #{tpu_custom_call.1} parent=1 // pred_region
      %s19 = ssub.s32 2048, 2048
      %20 = vsyncadd [#allocation9], %s19
      %s21 = sshll.u32 [#allocation8], 4
      %s22 = int_to_ptr.vmem [resolvable:$true] %s21
      %27 = dma.hbm_to_vmem [thread:$0]  %s1, 2048, %s22, [#allocation9], 128, 128, 8
    $region5: #{tpu_custom_call.1} parent=1 // pred_fallthru
      _
    // Predicated region
    $region6: #{tpu_custom_call.1} parent=1 // pred_check
      _
    $region7: #{tpu_custom_call.1} parent=1 // pred_check_branch
      %29 = sbr.rel (0) target = $region9
    $region8: #{tpu_custom_call.1} parent=1 // pred_region
      _
    $region9: #{tpu_custom_call.1} parent=1 // pred_fallthru
      _
    // Predicated region
    $region10: #{tpu_custom_call.1} parent=1 // pred_check
      _
    $region11: #{tpu_custom_call.1} parent=1 // pred_check_branch
      %31 = sbr.rel (0) target = $region13
    $region12: #{tpu_custom_call.1} parent=1 // pred_region
      _
    $region13: #{tpu_custom_call.1} parent=1 // pred_fallthru
      _
    // Predicated region
    $region14: #{tpu_custom_call.1} parent=1 // pred_check
      _
    $region15: #{tpu_custom_call.1} parent=1 // pred_check_branch
      %33 = sbr.rel (0) target = $region17
    $region16: #{tpu_custom_call.1} parent=1 // pred_region
      _
    $region17: #{tpu_custom_call.1} parent=1 // pred_fallthru
      _
    // Predicated region
    $region18: #{tpu_custom_call.1} parent=1 // pred_check
      _
    $region19: #{tpu_custom_call.1} parent=1 // pred_check_branch
      %35 = sbr.rel (0) target = $region21
    $region20: #{tpu_custom_call.1} parent=1 // pred_region
      _
    $region21: #{tpu_custom_call.1} parent=1 // pred_fallthru
      _
    // Predicated region
    $region22: #{tpu_custom_call.1} parent=1 // pred_check
      _
    $region23: #{tpu_custom_call.1} parent=1 // pred_check_branch
      %37 = sbr.rel (0) target = $region25
    $region24: #{tpu_custom_call.1} parent=1 // pred_region
      _
    $region25: #{tpu_custom_call.1} parent=1 // pred_fallthru
      _
    // Predicated region
    $region26: #{tpu_custom_call.1} parent=1 // pred_check
      _
    $region27: #{tpu_custom_call.1} parent=1 // pred_check_branch
      %39 = sbr.rel (0) target = $region29
    $region28: #{tpu_custom_call.1} parent=1 // pred_region
      _
    $region29: #{tpu_custom_call.1} parent=1 // pred_fallthru
      _
    // Predicated region
    $region30: #{tpu_custom_call.1} parent=1 // pred_check
      _
    $region31: #{tpu_custom_call.1} parent=1 // pred_check_branch
      %41 = sbr.rel (0) target = $region33
    $region32: #{tpu_custom_call.1} parent=1 // pred_region
      %42 = dma.done [#allocation9], 2048
    $region33: #{tpu_custom_call.1} parent=1 // pred_fallthru
      _
    %s43 = smul.u32 0, 16
    %p44 = scmp.eq.s32.totalorder 0, 0
    // Predicated region
    $region34: #{tpu_custom_call.1} parent=1 // pred_check
      %p45 = pneg %p44
    $region35: #{tpu_custom_call.1} parent=1 // pred_check_branch
      %47 = sbr.rel (%p45) target = $region37
    $region36: #{tpu_custom_call.1} parent=1 // pred_region
      %vm48 = vcmask 261120
      %49 = vst.msk [vmem:[#allocation2] sm:$0xff] %vm48, 0.0
      %50 = vst.msk [vmem:[#allocation3] sm:$0xff] %vm48, 0.0
    $region37: #{tpu_custom_call.1} parent=1 // pred_fallthru
      _
    %s51 = sld [smem:[#allocation7]]
    %p52 = scmp.lt.s32.totalorder %s43, %s51
    // Predicated region
    $region38: #{tpu_custom_call.1} parent=1 // pred_check
      %p53 = pneg %p52
    $region39: #{tpu_custom_call.1} parent=1 // pred_check_branch
      %55 = sbr.rel (%p53) target = $region41
    $region40: #{tpu_custom_call.1} parent=1 // pred_region
      %v56 = vld [vmem:[#allocation8] sm:$0xff]
      %v57 = vld [vmem:[#allocation8 + $0x8] sm:$0xff]
      %v58 = vld [vmem:[#allocation8 + $0x10] sm:$0xff]
      %v59 = vld [vmem:[#allocation8 + $0x18] sm:$0xff]
      %v60 = vld [vmem:[#allocation8 + $0x20] sm:$0xff]
      %v61 = vld [vmem:[#allocation8 + $0x28] sm:$0xff]
      %v62 = vld [vmem:[#allocation8 + $0x30] sm:$0xff]
      %v63 = vld [vmem:[#allocation8 + $0x38] sm:$0xff]
      %v64 = vld [vmem:[#allocation8 + $0x40] sm:$0xff]
      %v65 = vld [vmem:[#allocation8 + $0x48] sm:$0xff]
      %v66 = vld [vmem:[#allocation8 + $0x50] sm:$0xff]
      %v67 = vld [vmem:[#allocation8 + $0x58] sm:$0xff]
      %v68 = vld [vmem:[#allocation8 + $0x60] sm:$0xff]
      %v69 = vld [vmem:[#allocation8 + $0x68] sm:$0xff]
      %v70 = vld [vmem:[#allocation8 + $0x70] sm:$0xff]
      %v71 = vld [vmem:[#allocation8 + $0x78] sm:$0xff]
      %v72 = vld [vmem:[%s3] sm:$0xff]
      %v73 = vld [vmem:[%s3 + $0x8] sm:$0xff]
      %v74 = vld [vmem:[%s3 + $0x10] sm:$0xff]
      %v75 = vld [vmem:[%s3 + $0x18] sm:$0xff]
      %v76 = vld [vmem:[%s5] sm:$0x1]
      %v78 = vlaneseq
      %v79 = vshrl.u32 %v78, 7
      %v80 = vsub.s32 0, %v79
      %v81 = vrot.slane %v76, %v80
      %vm83 = vcmask 261120
      %v85 = vsel %vm83, %v56, 0
      %v88 = vsel %vm83, %v57, 0
      %v91 = vsel %vm83, %v58, 0
      %v94 = vsel %vm83, %v59, 0
      %v97 = vsel %vm83, %v60, 0
      %v100 = vsel %vm83, %v61, 0
      %v103 = vsel %vm83, %v62, 0
      %v106 = vsel %vm83, %v63, 0
      %v109 = vsel %vm83, %v64, 0
      %v112 = vsel %vm83, %v65, 0
      %v115 = vsel %vm83, %v66, 0
      %v118 = vsel %vm83, %v67, 0
      %v121 = vsel %vm83, %v68, 0
      %v124 = vsel %vm83, %v69, 0
      %v127 = vsel %vm83, %v70, 0
      %v130 = vsel %vm83, %v71, 0
      %132 = vmatprep.subr.mxu0 0.0
      %133 = vmatpush1.msra.mxu0 %v72
      %134 = vmatprep.subr.mxu0 0.0
      %135 = vmatpush1.msra.mxu0 %v73
      %136 = vmatprep.subr.mxu0 0.0
      %137 = vmatpush1.msra.mxu0 %v74
      %138 = vmatprep.subr.mxu0 0.0
      %139 = vmatpush1.msra.mxu0 %v75
      %140 = vmatprep.subr.mxu0 0.0
      %141 = vmatpush1.msra.mxu0 0.0
      %142 = vmatprep.subr.mxu0 0.0
      %143 = vmatpush1.msra.mxu0 0.0
      %144 = vmatprep.subr.mxu0 0.0
      %145 = vmatpush1.msra.mxu0 0.0
      %146 = vmatprep.subr.mxu0 0.0
      %147 = vmatpush1.msra.mxu0 0.0
      %148 = vmatprep.subr.mxu0 0.0
      %149 = vmatpush1.msra.mxu0 0.0
      %150 = vmatprep.subr.mxu0 0.0
      %151 = vmatpush1.msra.mxu0 0.0
      %152 = vmatprep.subr.mxu0 0.0
      %153 = vmatpush1.msra.mxu0 0.0
      %154 = vmatprep.subr.mxu0 0.0
      %155 = vmatpush1.msra.mxu0 0.0
      %156 = vmatprep.subr.mxu0 0.0
      %157 = vmatpush1.msra.mxu0 0.0
      %158 = vmatprep.subr.mxu0 0.0
      %159 = vmatpush1.msra.mxu0 0.0
      %160 = vmatprep.subr.mxu0 0.0
      %161 = vmatpush1.msra.mxu0 0.0
      %162 = vmatprep.subr.mxu0 0.0
      %163 = vmatpush1.msra.mxu0 0.0
      %164 = vmatprep.subr.mxu0 0.0
      %165 = vmatpush1.msra.mxu0 0.0
      %166 = vmatprep.subr.mxu0 0.0
      %167 = vmatpush1.msra.mxu0 0.0
      %168 = vmatprep.subr.mxu0 0.0
      %169 = vmatpush1.msra.mxu0 0.0
      %170 = vmatprep.subr.mxu0 0.0
      %171 = vmatpush1.msra.mxu0 0.0
      %172 = vmatprep.subr.mxu0 0.0
      %173 = vmatpush1.msra.mxu0 0.0
      %174 = vmatprep.subr.mxu0 0.0
      %175 = vmatpush1.msra.mxu0 0.0
      %176 = vmatprep.subr.mxu0 0.0
      %177 = vmatpush1.msra.mxu0 0.0
      %178 = vmatprep.subr.mxu0 0.0
      %179 = vmatpush1.msra.mxu0 0.0
      %180 = vmatprep.subr.mxu0 0.0
      %181 = vmatpush1.msra.mxu0 0.0
      %182 = vmatprep.subr.mxu0 0.0
      %183 = vmatpush1.msra.mxu0 0.0
      %184 = vmatprep.subr.mxu0 0.0
      %185 = vmatpush1.msra.mxu0 0.0
      %186 = vmatprep.subr.mxu0 0.0
      %187 = vmatpush1.msra.mxu0 0.0
      %188 = vmatprep.subr.mxu0 0.0
      %189 = vmatpush1.msra.mxu0 0.0
      %190 = vmatprep.subr.mxu0 0.0
      %191 = vmatpush1.msra.mxu0 0.0
      %192 = vmatprep.subr.mxu0 0.0
      %193 = vmatpush1.msra.mxu0 0.0
      %194 = vmatprep.subr.mxu0 0.0
      %195 = vmatpush1.msra.mxu0 0.0
      %196 = vmatprep.mubr.f32.mxu0 0.0
      %197 = vmatmul.mubr.f32.gmra.mrb[0].mxu0 %v85
      %v198 = vpop.f32.mrb[0].mxu0
      %v199 = vadd.f32 %v81, %v198
      %v200 = vpop.f32.mrb[0].mxu0
      %201 = vmatprep.mubr.f32.mxu0 0.0
      %202 = vmatmul.mubr.f32.gmra.mrb[0].mxu0 %v88
      %v203 = vpop.f32.mrb[0].mxu0
      %v204 = vadd.f32 %v81, %v203
      %v205 = vpop.f32.mrb[0].mxu0
      %206 = vmatprep.mubr.f32.mxu0 0.0
      %207 = vmatmul.mubr.f32.gmra.mrb[0].mxu0 %v91
      %v208 = vpop.f32.mrb[0].mxu0
      %v209 = vadd.f32 %v81, %v208
      %v210 = vpop.f32.mrb[0].mxu0
      %211 = vmatprep.mubr.f32.mxu0 0.0
      %212 = vmatmul.mubr.f32.gmra.mrb[0].mxu0 %v94
      %v213 = vpop.f32.mrb[0].mxu0
      %v214 = vadd.f32 %v81, %v213
      %v215 = vpop.f32.mrb[0].mxu0
      %216 = vmatprep.mubr.f32.mxu0 0.0
      %217 = vmatmul.mubr.f32.gmra.mrb[0].mxu0 %v97
      %v218 = vpop.f32.mrb[0].mxu0
      %v219 = vadd.f32 %v81, %v218
      %v220 = vpop.f32.mrb[0].mxu0
      %221 = vmatprep.mubr.f32.mxu0 0.0
      %222 = vmatmul.mubr.f32.gmra.mrb[0].mxu0 %v100
      %v223 = vpop.f32.mrb[0].mxu0
      %v224 = vadd.f32 %v81, %v223
      %v225 = vpop.f32.mrb[0].mxu0
      %226 = vmatprep.mubr.f32.mxu0 0.0
      %227 = vmatmul.mubr.f32.gmra.mrb[0].mxu0 %v103
      %v228 = vpop.f32.mrb[0].mxu0
      %v229 = vadd.f32 %v81, %v228
      %v230 = vpop.f32.mrb[0].mxu0
      %231 = vmatprep.mubr.f32.mxu0 0.0
      %232 = vmatmul.mubr.f32.gmra.mrb[0].mxu0 %v106
      %v233 = vpop.f32.mrb[0].mxu0
      %v234 = vadd.f32 %v81, %v233
      %v235 = vpop.f32.mrb[0].mxu0
      %236 = vmatprep.mubr.f32.mxu0 0.0
      %237 = vmatmul.mubr.f32.gmra.mrb[0].mxu0 %v109
      %v238 = vpop.f32.mrb[0].mxu0
      %v239 = vadd.f32 %v81, %v238
      %v240 = vpop.f32.mrb[0].mxu0
      %241 = vmatprep.mubr.f32.mxu0 0.0
      %242 = vmatmul.mubr.f32.gmra.mrb[0].mxu0 %v112
      %v243 = vpop.f32.mrb[0].mxu0
      %v244 = vadd.f32 %v81, %v243
      %v245 = vpop.f32.mrb[0].mxu0
      %246 = vmatprep.mubr.f32.mxu0 0.0
      %247 = vmatmul.mubr.f32.gmra.mrb[0].mxu0 %v115
      %v248 = vpop.f32.mrb[0].mxu0
      %v249 = vadd.f32 %v81, %v248
      %v250 = vpop.f32.mrb[0].mxu0
      %251 = vmatprep.mubr.f32.mxu0 0.0
      %252 = vmatmul.mubr.f32.gmra.mrb[0].mxu0 %v118
      %v253 = vpop.f32.mrb[0].mxu0
      %v254 = vadd.f32 %v81, %v253
      %v255 = vpop.f32.mrb[0].mxu0
      %256 = vmatprep.mubr.f32.mxu0 0.0
      %257 = vmatmul.mubr.f32.gmra.mrb[0].mxu0 %v121
      %v258 = vpop.f32.mrb[0].mxu0
      %v259 = vadd.f32 %v81, %v258
      %v260 = vpop.f32.mrb[0].mxu0
      %261 = vmatprep.mubr.f32.mxu0 0.0
      %262 = vmatmul.mubr.f32.gmra.mrb[0].mxu0 %v124
      %v263 = vpop.f32.mrb[0].mxu0
      %v264 = vadd.f32 %v81, %v263
      %v265 = vpop.f32.mrb[0].mxu0
      %266 = vmatprep.mubr.f32.mxu0 0.0
      %267 = vmatmul.mubr.f32.gmra.mrb[0].mxu0 %v127
      %v268 = vpop.f32.mrb[0].mxu0
      %v269 = vadd.f32 %v81, %v268
      %v270 = vpop.f32.mrb[0].mxu0
      %271 = vmatprep.mubr.f32.mxu0 0.0
      %272 = vmatmul.mubr.f32.gmra.mrb[0].mxu0 %v130
      %v273 = vpop.f32.mrb[0].mxu0
      %v274 = vadd.f32 %v81, %v273
      %v275 = vpop.f32.mrb[0].mxu0
      %276 = vdwg.mxu0
      %277 = vst [vmem:[#allocation4] sm:$0xff] %v199
      %278 = vst [vmem:[#allocation4 + $0x8] sm:$0xff] %v204
      %279 = vst [vmem:[#allocation4 + $0x10] sm:$0xff] %v209
      %280 = vst [vmem:[#allocation4 + $0x18] sm:$0xff] %v214
      %281 = vst [vmem:[#allocation4 + $0x20] sm:$0xff] %v219
      %282 = vst [vmem:[#allocation4 + $0x28] sm:$0xff] %v224
      %283 = vst [vmem:[#allocation4 + $0x30] sm:$0xff] %v229
      %284 = vst [vmem:[#allocation4 + $0x38] sm:$0xff] %v234
      %285 = vst [vmem:[#allocation4 + $0x40] sm:$0xff] %v239
      %286 = vst [vmem:[#allocation4 + $0x48] sm:$0xff] %v244
      %287 = vst [vmem:[#allocation4 + $0x50] sm:$0xff] %v249
      %288 = vst [vmem:[#allocation4 + $0x58] sm:$0xff] %v254
      %289 = vst [vmem:[#allocation4 + $0x60] sm:$0xff] %v259
      %290 = vst [vmem:[#allocation4 + $0x68] sm:$0xff] %v264
      %291 = vst [vmem:[#allocation4 + $0x70] sm:$0xff] %v269
      %292 = vst [vmem:[#allocation4 + $0x78] sm:$0xff] %v274
      %v293 = vld [vmem:[#allocation2] sm:$0xff]
      %v294 = vld [vmem:[#allocation3] sm:$0xff]
      %v295 = vld [vmem:[%s4] sm:$0xff]
      %v296 = vld [vmem:[%s4 + $0x8] sm:$0xff]
      %v297 = vld [vmem:[%s4 + $0x10] sm:$0xff]
      %v298 = vld [vmem:[%s4 + $0x18] sm:$0xff]
      %v299 = vld [vmem:[%s2] sm:$0xff]
      %v300 = vld [vmem:[#allocation4] sm:$0xff]
      %v302 = vsel %vm83, %v293, 0
      %304 = vmatprep.subr.mxu0 0.0
      %305 = vmatpush1.msra.mxu0 %v295
      %306 = vmatprep.subr.mxu0 0.0
      %307 = vmatpush1.msra.mxu0 %v296
      %308 = vmatprep.subr.mxu0 0.0
      %309 = vmatpush1.msra.mxu0 %v297
      %310 = vmatprep.subr.mxu0 0.0
      %311 = vmatpush1.msra.mxu0 %v298
      %312 = vmatprep.subr.mxu0 0.0
      %313 = vmatpush1.msra.mxu0 0.0
      %314 = vmatprep.subr.mxu0 0.0
      %315 = vmatpush1.msra.mxu0 0.0
      %316 = vmatprep.subr.mxu0 0.0
      %317 = vmatpush1.msra.mxu0 0.0
      %318 = vmatprep.subr.mxu0 0.0
      %319 = vmatpush1.msra.mxu0 0.0
      %320 = vmatprep.subr.mxu0 0.0
      %321 = vmatpush1.msra.mxu0 0.0
      %322 = vmatprep.subr.mxu0 0.0
      %323 = vmatpush1.msra.mxu0 0.0
      %324 = vmatprep.subr.mxu0 0.0
      %325 = vmatpush1.msra.mxu0 0.0
      %326 = vmatprep.subr.mxu0 0.0
      %327 = vmatpush1.msra.mxu0 0.0
      %328 = vmatprep.subr.mxu0 0.0
      %329 = vmatpush1.msra.mxu0 0.0
      %330 = vmatprep.subr.mxu0 0.0
      %331 = vmatpush1.msra.mxu0 0.0
      %332 = vmatprep.subr.mxu0 0.0
      %333 = vmatpush1.msra.mxu0 0.0
      %334 = vmatprep.subr.mxu0 0.0
      %335 = vmatpush1.msra.mxu0 0.0
      %336 = vmatprep.subr.mxu0 0.0
      %337 = vmatpush1.msra.mxu0 0.0
      %338 = vmatprep.subr.mxu0 0.0
      %339 = vmatpush1.msra.mxu0 0.0
      %340 = vmatprep.subr.mxu0 0.0
      %341 = vmatpush1.msra.mxu0 0.0
      %342 = vmatprep.subr.mxu0 0.0
      %343 = vmatpush1.msra.mxu0 0.0
      %344 = vmatprep.subr.mxu0 0.0
      %345 = vmatpush1.msra.mxu0 0.0
      %346 = vmatprep.subr.mxu0 0.0
      %347 = vmatpush1.msra.mxu0 0.0
      %348 = vmatprep.subr.mxu0 0.0
      %349 = vmatpush1.msra.mxu0 0.0
      %350 = vmatprep.subr.mxu0 0.0
      %351 = vmatpush1.msra.mxu0 0.0
      %352 = vmatprep.subr.mxu0 0.0
      %353 = vmatpush1.msra.mxu0 0.0
      %354 = vmatprep.subr.mxu0 0.0
      %355 = vmatpush1.msra.mxu0 0.0
      %356 = vmatprep.subr.mxu0 0.0
      %357 = vmatpush1.msra.mxu0 0.0
      %358 = vmatprep.subr.mxu0 0.0
      %359 = vmatpush1.msra.mxu0 0.0
      %360 = vmatprep.subr.mxu0 0.0
      %361 = vmatpush1.msra.mxu0 0.0
      %362 = vmatprep.subr.mxu0 0.0
      %363 = vmatpush1.msra.mxu0 0.0
      %364 = vmatprep.subr.mxu0 0.0
      %365 = vmatpush1.msra.mxu0 0.0
      %366 = vmatprep.subr.mxu0 0.0
      %367 = vmatpush1.msra.mxu0 0.0
      %368 = vmatprep.mubr.f32.mxu0 0.0
      %369 = vmatmul.mubr.f32.gmra.mrb[0].mxu0 %v302
      %v370 = vpop.f32.mrb[0].mxu0
      %v371 = vadd.f32 0.0, %v370
      %v372 = vpop.f32.mrb[0].mxu0
      %373 = vdwg.mxu0
      %v374 = vadd.f32 %v300, %v371
      %v375 = vxor.u32 %v374, 2147483648
      %v376 = vmul.f32 %v375, 1.442695
      %v377 = vpow.pop %v376
      %v378 = vadd.f32 %v377, 1.0
      %v379 = vrcp.pop %v378
      %v380 = vmul.f32 1.0, %v379
      %v381 = vtanh.pop %v374
      %383 = vrot.lane.b32.xlu0 %v294, 32
      %v384 = vpop.permute.xlu0 %383
      %v386 = vmul.f32 %v380, %v384
      %388 = vrot.lane.b32.xlu0 %v381, 64
      %v389 = vpop.permute.xlu0 %388
      %v391 = vmul.f32 %v380, %v389
      %393 = vrot.lane.b32.xlu0 %v391, 32
      %v394 = vpop.permute.xlu0 %393
      %v396 = vadd.f32 %v386, %v394
      %v397 = vtanh.pop %v396
      %399 = vrot.lane.b32.xlu0 %v397, 64
      %v400 = vpop.permute.xlu0 %399
      %v402 = vmul.f32 %v380, %v400
      %v403 = vstv %s43
      %vm404 = vcmp.gt.s32.totalorder %v299, %v403
      %v405 = vsel %vm404, 1, 0
      %406 = vset.pattern.permute.xlu0 0
      %407 = vperm.xlu0 %406, %v405
      %v408 = vpop.permute.xlu0 %407
      %vm409 = vcmp.eq.s32.totalorder %v408, 1
      %410 = vrot.lane.b32.xlu0 %v293, 96
      %v411 = vpop.permute.xlu0 %410
      %v413 = vsel %vm409, %v402, %v411
      %v414 = vsel %vm409, %v396, %v384
      %v415 = vsel %vm409, %v402, 0.0
      %417 = vrot.lane.b32.xlu0 %v415, 32
      %v418 = vpop.permute.xlu0 %417
      %420 = vst.msk [vmem:[#allocation5] sm:$0xff] %vm83, %v418
      %v421 = vld [vmem:[#allocation4 + $0x8] sm:$0xff]
      %423 = vrot.lane.b32.xlu0 %v413, 32
      %v424 = vpop.permute.xlu0 %423
      %v425 = vsel %vm83, %v424, 0
      %427 = vmatprep.subr.mxu0 0.0
      %428 = vmatpush1.msra.mxu0 %v295
      %429 = vmatprep.subr.mxu0 0.0
      %430 = vmatpush1.msra.mxu0 %v296
      %431 = vmatprep.subr.mxu0 0.0
      %432 = vmatpush1.msra.mxu0 %v297
      %433 = vmatprep.subr.mxu0 0.0
      %434 = vmatpush1.msra.mxu0 %v298
      %435 = vmatprep.subr.mxu0 0.0
      %436 = vmatpush1.msra.mxu0 0.0
      %437 = vmatprep.subr.mxu0 0.0
      %438 = vmatpush1.msra.mxu0 0.0
      %439 = vmatprep.subr.mxu0 0.0
      %440 = vmatpush1.msra.mxu0 0.0
      %441 = vmatprep.subr.mxu0 0.0
      %442 = vmatpush1.msra.mxu0 0.0
      %443 = vmatprep.subr.mxu0 0.0
      %444 = vmatpush1.msra.mxu0 0.0
      %445 = vmatprep.subr.mxu0 0.0
      %446 = vmatpush1.msra.mxu0 0.0
      %447 = vmatprep.subr.mxu0 0.0
      %448 = vmatpush1.msra.mxu0 0.0
      %449 = vmatprep.subr.mxu0 0.0
      %450 = vmatpush1.msra.mxu0 0.0
      %451 = vmatprep.subr.mxu0 0.0
      %452 = vmatpush1.msra.mxu0 0.0
      %453 = vmatprep.subr.mxu0 0.0
      %454 = vmatpush1.msra.mxu0 0.0
      %455 = vmatprep.subr.mxu0 0.0
      %456 = vmatpush1.msra.mxu0 0.0
      %457 = vmatprep.subr.mxu0 0.0
      %458 = vmatpush1.msra.mxu0 0.0
      %459 = vmatprep.subr.mxu0 0.0
      %460 = vmatpush1.msra.mxu0 0.0
      %461 = vmatprep.subr.mxu0 0.0
      %462 = vmatpush1.msra.mxu0 0.0
      %463 = vmatprep.subr.mxu0 0.0
      %464 = vmatpush1.msra.mxu0 0.0
      %465 = vmatprep.subr.mxu0 0.0
      %466 = vmatpush1.msra.mxu0 0.0
      %467 = vmatprep.subr.mxu0 0.0
      %468 = vmatpush1.msra.mxu0 0.0
      %469 = vmatprep.subr.mxu0 0.0
      %470 = vmatpush1.msra.mxu0 0.0
      %471 = vmatprep.subr.mxu0 0.0
      %472 = vmatpush1.msra.mxu0 0.0
      %473 = vmatprep.subr.mxu0 0.0
      %474 = vmatpush1.msra.mxu0 0.0
      %475 = vmatprep.subr.mxu0 0.0
      %476 = vmatpush1.msra.mxu0 0.0
      %477 = vmatprep.subr.mxu0 0.0
      %478 = vmatpush1.msra.mxu0 0.0
      %479 = vmatprep.subr.mxu0 0.0
      %480 = vmatpush1.msra.mxu0 0.0
      %481 = vmatprep.subr.mxu0 0.0
      %482 = vmatpush1.msra.mxu0 0.0
      %483 = vmatprep.subr.mxu0 0.0
      %484 = vmatpush1.msra.mxu0 0.0
      %485 = vmatprep.subr.mxu0 0.0
      %486 = vmatpush1.msra.mxu0 0.0
      %487 = vmatprep.subr.mxu0 0.0
      %488 = vmatpush1.msra.mxu0 0.0
      %489 = vmatprep.subr.mxu0 0.0
      %490 = vmatpush1.msra.mxu0 0.0
      %491 = vmatprep.mubr.f32.mxu0 0.0
      %492 = vmatmul.mubr.f32.gmra.mrb[0].mxu0 %v425
      %v493 = vpop.f32.mrb[0].mxu0
      %v494 = vadd.f32 0.0, %v493
      %v495 = vpop.f32.mrb[0].mxu0
      %496 = vdwg.mxu0
      %v497 = vadd.f32 %v421, %v494
      %v498 = vxor.u32 %v497, 2147483648
      %v499 = vmul.f32 %v498, 1.442695
      %v500 = vpow.pop %v499
      %v501 = vadd.f32 %v500, 1.0
      %v502 = vrcp.pop %v501
      %v503 = vmul.f32 1.0, %v502
      %v504 = vtanh.pop %v497
      %v505 = vmul.f32 %v503, %v414
      %507 = vrot.lane.b32.xlu0 %v504, 64
      %v508 = vpop.permute.xlu0 %507
      %v510 = vmul.f32 %v503, %v508
      %512 = vrot.lane.b32.xlu0 %v510, 32
      %v513 = vpop.permute.xlu0 %512
      %v515 = vadd.f32 %v505, %v513
      %v516 = vtanh.pop %v515
      %518 = vrot.lane.b32.xlu0 %v516, 64
      %v519 = vpop.permute.xlu0 %518
      %v521 = vmul.f32 %v503, %v519
      %s522 = sadd.s32 %s43, 1
      %v523 = vstv %s522
      %vm524 = vcmp.gt.s32.totalorder %v299, %v523
      %v525 = vsel %vm524, 1, 0
      %526 = vset.pattern.permute.xlu0 0
      %527 = vperm.xlu0 %526, %v525
      %v528 = vpop.permute.xlu0 %527
      %vm529 = vcmp.eq.s32.totalorder %v528, 1
      %v530 = vsel %vm529, %v521, %v413
      %v531 = vsel %vm529, %v515, %v414
      %v532 = vsel %vm529, %v521, 0.0
      %534 = vrot.lane.b32.xlu0 %v532, 32
      %v535 = vpop.permute.xlu0 %534
      %537 = vst.msk [vmem:[#allocation5 + $0x8] sm:$0xff] %vm83, %v535
      %v538 = vld [vmem:[#allocation4 + $0x10] sm:$0xff]
      %540 = vrot.lane.b32.xlu0 %v530, 32
      %v541 = vpop.permute.xlu0 %540
      %v542 = vsel %vm83, %v541, 0
      %544 = vmatprep.subr.mxu0 0.0
      %545 = vmatpush1.msra.mxu0 %v295
      %546 = vmatprep.subr.mxu0 0.0
      %547 = vmatpush1.msra.mxu0 %v296
      %548 = vmatprep.subr.mxu0 0.0
      %549 = vmatpush1.msra.mxu0 %v297
      %550 = vmatprep.subr.mxu0 0.0
      %551 = vmatpush1.msra.mxu0 %v298
      %552 = vmatprep.subr.mxu0 0.0
      %553 = vmatpush1.msra.mxu0 0.0
      %554 = vmatprep.subr.mxu0 0.0
      %555 = vmatpush1.msra.mxu0 0.0
      %556 = vmatprep.subr.mxu0 0.0
      %557 = vmatpush1.msra.mxu0 0.0
      %558 = vmatprep.subr.mxu0 0.0
      %559 = vmatpush1.msra.mxu0 0.0
      %560 = vmatprep.subr.mxu0 0.0
      %561 = vmatpush1.msra.mxu0 0.0
      %562 = vmatprep.subr.mxu0 0.0
      %563 = vmatpush1.msra.mxu0 0.0
      %564 = vmatprep.subr.mxu0 0.0
      %565 = vmatpush1.msra.mxu0 0.0
      %566 = vmatprep.subr.mxu0 0.0
      %567 = vmatpush1.msra.mxu0 0.0
      %568 = vmatprep.subr.mxu0 0.0
      %569 = vmatpush1.msra.mxu0 0.0
      %570 = vmatprep.subr.mxu0 0.0
      %571 = vmatpush1.msra.mxu0 0.0
      %572 = vmatprep.subr.mxu0 0.0
      %573 = vmatpush1.msra.mxu0 0.0
      %574 = vmatprep.subr.mxu0 0.0
      %575 = vmatpush1.msra.mxu0 0.0
      %576 = vmatprep.subr.mxu0 0.0
      %577 = vmatpush1.msra.mxu0 0.0
      %578 = vmatprep.subr.mxu0 0.0
      %579 = vmatpush1.msra.mxu0 0.0
      %580 = vmatprep.subr.mxu0 0.0
      %581 = vmatpush1.msra.mxu0 0.0
      %582 = vmatprep.subr.mxu0 0.0
      %583 = vmatpush1.msra.mxu0 0.0
      %584 = vmatprep.subr.mxu0 0.0
      %585 = vmatpush1.msra.mxu0 0.0
      %586 = vmatprep.subr.mxu0 0.0
      %587 = vmatpush1.msra.mxu0 0.0
      %588 = vmatprep.subr.mxu0 0.0
      %589 = vmatpush1.msra.mxu0 0.0
      %590 = vmatprep.subr.mxu0 0.0
      %591 = vmatpush1.msra.mxu0 0.0
      %592 = vmatprep.subr.mxu0 0.0
      %593 = vmatpush1.msra.mxu0 0.0
      %594 = vmatprep.subr.mxu0 0.0
      %595 = vmatpush1.msra.mxu0 0.0
      %596 = vmatprep.subr.mxu0 0.0
      %597 = vmatpush1.msra.mxu0 0.0
      %598 = vmatprep.subr.mxu0 0.0
      %599 = vmatpush1.msra.mxu0 0.0
      %600 = vmatprep.subr.mxu0 0.0
      %601 = vmatpush1.msra.mxu0 0.0
      %602 = vmatprep.subr.mxu0 0.0
      %603 = vmatpush1.msra.mxu0 0.0
      %604 = vmatprep.subr.mxu0 0.0
      %605 = vmatpush1.msra.mxu0 0.0
      %606 = vmatprep.subr.mxu0 0.0
      %607 = vmatpush1.msra.mxu0 0.0
      %608 = vmatprep.mubr.f32.mxu0 0.0
      %609 = vmatmul.mubr.f32.gmra.mrb[0].mxu0 %v542
      %v610 = vpop.f32.mrb[0].mxu0
      %v611 = vadd.f32 0.0, %v610
      %v612 = vpop.f32.mrb[0].mxu0
      %613 = vdwg.mxu0
      %v614 = vadd.f32 %v538, %v611
      %v615 = vxor.u32 %v614, 2147483648
      %v616 = vmul.f32 %v615, 1.442695
      %v617 = vpow.pop %v616
      %v618 = vadd.f32 %v617, 1.0
      %v619 = vrcp.pop %v618
      %v620 = vmul.f32 1.0, %v619
      %v621 = vtanh.pop %v614
      %v622 = vmul.f32 %v620, %v531
      %624 = vrot.lane.b32.xlu0 %v621, 64
      %v625 = vpop.permute.xlu0 %624
      %v627 = vmul.f32 %v620, %v625
      %629 = vrot.lane.b32.xlu0 %v627, 32
      %v630 = vpop.permute.xlu0 %629
      %v632 = vadd.f32 %v622, %v630
      %v633 = vtanh.pop %v632
      %635 = vrot.lane.b32.xlu0 %v633, 64
      %v636 = vpop.permute.xlu0 %635
      %v638 = vmul.f32 %v620, %v636
      %s639 = sadd.s32 %s43, 2
      %v640 = vstv %s639
      %vm641 = vcmp.gt.s32.totalorder %v299, %v640
      %v642 = vsel %vm641, 1, 0
      %643 = vset.pattern.permute.xlu0 0
      %644 = vperm.xlu0 %643, %v642
      %v645 = vpop.permute.xlu0 %644
      %vm646 = vcmp.eq.s32.totalorder %v645, 1
      %v647 = vsel %vm646, %v638, %v530
      %v648 = vsel %vm646, %v632, %v531
      %v649 = vsel %vm646, %v638, 0.0
      %651 = vrot.lane.b32.xlu0 %v649, 32
      %v652 = vpop.permute.xlu0 %651
      %654 = vst.msk [vmem:[#allocation5 + $0x10] sm:$0xff] %vm83, %v652
      %v655 = vld [vmem:[#allocation4 + $0x18] sm:$0xff]
      %657 = vrot.lane.b32.xlu0 %v647, 32
      %v658 = vpop.permute.xlu0 %657
      %v659 = vsel %vm83, %v658, 0
      %661 = vmatprep.subr.mxu0 0.0
      %662 = vmatpush1.msra.mxu0 %v295
      %663 = vmatprep.subr.mxu0 0.0
      %664 = vmatpush1.msra.mxu0 %v296
      %665 = vmatprep.subr.mxu0 0.0
      %666 = vmatpush1.msra.mxu0 %v297
      %667 = vmatprep.subr.mxu0 0.0
      %668 = vmatpush1.msra.mxu0 %v298
      %669 = vmatprep.subr.mxu0 0.0
      %670 = vmatpush1.msra.mxu0 0.0
      %671 = vmatprep.subr.mxu0 0.0
      %672 = vmatpush1.msra.mxu0 0.0
      %673 = vmatprep.subr.mxu0 0.0
      %674 = vmatpush1.msra.mxu0 0.0
      %675 = vmatprep.subr.mxu0 0.0
      %676 = vmatpush1.msra.mxu0 0.0
      %677 = vmatprep.subr.mxu0 0.0
      %678 = vmatpush1.msra.mxu0 0.0
      %679 = vmatprep.subr.mxu0 0.0
      %680 = vmatpush1.msra.mxu0 0.0
      %681 = vmatprep.subr.mxu0 0.0
      %682 = vmatpush1.msra.mxu0 0.0
      %683 = vmatprep.subr.mxu0 0.0
      %684 = vmatpush1.msra.mxu0 0.0
      %685 = vmatprep.subr.mxu0 0.0
      %686 = vmatpush1.msra.mxu0 0.0
      %687 = vmatprep.subr.mxu0 0.0
      %688 = vmatpush1.msra.mxu0 0.0
      %689 = vmatprep.subr.mxu0 0.0
      %690 = vmatpush1.msra.mxu0 0.0
      %691 = vmatprep.subr.mxu0 0.0
      %692 = vmatpush1.msra.mxu0 0.0
      %693 = vmatprep.subr.mxu0 0.0
      %694 = vmatpush1.msra.mxu0 0.0
      %695 = vmatprep.subr.mxu0 0.0
      %696 = vmatpush1.msra.mxu0 0.0
      %697 = vmatprep.subr.mxu0 0.0
      %698 = vmatpush1.msra.mxu0 0.0
      %699 = vmatprep.subr.mxu0 0.0
      %700 = vmatpush1.msra.mxu0 0.0
      %701 = vmatprep.subr.mxu0 0.0
      %702 = vmatpush1.msra.mxu0 0.0
      %703 = vmatprep.subr.mxu0 0.0
      %704 = vmatpush1.msra.mxu0 0.0
      %705 = vmatprep.subr.mxu0 0.0
      %706 = vmatpush1.msra.mxu0 0.0
      %707 = vmatprep.subr.mxu0 0.0
      %708 = vmatpush1.msra.mxu0 0.0
      %709 = vmatprep.subr.mxu0 0.0
      %710 = vmatpush1.msra.mxu0 0.0
      %711 = vmatprep.subr.mxu0 0.0
      %712 = vmatpush1.msra.mxu0 0.0
      %713 = vmatprep.subr.mxu0 0.0
      %714 = vmatpush1.msra.mxu0 0.0
      %715 = vmatprep.subr.mxu0 0.0
      %716 = vmatpush1.msra.mxu0 0.0
      %717 = vmatprep.subr.mxu0 0.0
      %718 = vmatpush1.msra.mxu0 0.0
      %719 = vmatprep.subr.mxu0 0.0
      %720 = vmatpush1.msra.mxu0 0.0
      %721 = vmatprep.subr.mxu0 0.0
      %722 = vmatpush1.msra.mxu0 0.0
      %723 = vmatprep.subr.mxu0 0.0
      %724 = vmatpush1.msra.mxu0 0.0
      %725 = vmatprep.mubr.f32.mxu0 0.0
      %726 = vmatmul.mubr.f32.gmra.mrb[0].mxu0 %v659
      %v727 = vpop.f32.mrb[0].mxu0
      %v728 = vadd.f32 0.0, %v727
      %v729 = vpop.f32.mrb[0].mxu0
      %730 = vdwg.mxu0
      %v731 = vadd.f32 %v655, %v728
      %v732 = vxor.u32 %v731, 2147483648
      %v733 = vmul.f32 %v732, 1.442695
      %v734 = vpow.pop %v733
      %v735 = vadd.f32 %v734, 1.0
      %v736 = vrcp.pop %v735
      %v737 = vmul.f32 1.0, %v736
      %v738 = vtanh.pop %v731
      %v739 = vmul.f32 %v737, %v648
      %741 = vrot.lane.b32.xlu0 %v738, 64
      %v742 = vpop.permute.xlu0 %741
      %v744 = vmul.f32 %v737, %v742
      %746 = vrot.lane.b32.xlu0 %v744, 32
      %v747 = vpop.permute.xlu0 %746
      %v749 = vadd.f32 %v739, %v747
      %v750 = vtanh.pop %v749
      %752 = vrot.lane.b32.xlu0 %v750, 64
      %v753 = vpop.permute.xlu0 %752
      %v755 = vmul.f32 %v737, %v753
      %s756 = sadd.s32 %s43, 3
      %v757 = vstv %s756
      %vm758 = vcmp.gt.s32.totalorder %v299, %v757
      %v759 = vsel %vm758, 1, 0
      %760 = vset.pattern.permute.xlu0 0
      %761 = vperm.xlu0 %760, %v759
      %v762 = vpop.permute.xlu0 %761
      %vm763 = vcmp.eq.s32.totalorder %v762, 1
      %v764 = vsel %vm763, %v755, %v647
      %v765 = vsel %vm763, %v749, %v648
      %v766 = vsel %vm763, %v755, 0.0
      %768 = vrot.lane.b32.xlu0 %v766, 32
      %v769 = vpop.permute.xlu0 %768
      %771 = vst.msk [vmem:[#allocation5 + $0x18] sm:$0xff] %vm83, %v769
      %v772 = vld [vmem:[#allocation4 + $0x20] sm:$0xff]
      %774 = vrot.lane.b32.xlu0 %v764, 32
      %v775 = vpop.permute.xlu0 %774
      %v776 = vsel %vm83, %v775, 0
      %778 = vmatprep.subr.mxu0 0.0
      %779 = vmatpush1.msra.mxu0 %v295
      %780 = vmatprep.subr.mxu0 0.0
      %781 = vmatpush1.msra.mxu0 %v296
      %782 = vmatprep.subr.mxu0 0.0
      %783 = vmatpush1.msra.mxu0 %v297
      %784 = vmatprep.subr.mxu0 0.0
      %785 = vmatpush1.msra.mxu0 %v298
      %786 = vmatprep.subr.mxu0 0.0
      %787 = vmatpush1.msra.mxu0 0.0
      %788 = vmatprep.subr.mxu0 0.0
      %789 = vmatpush1.msra.mxu0 0.0
      %790 = vmatprep.subr.mxu0 0.0
      %791 = vmatpush1.msra.mxu0 0.0
      %792 = vmatprep.subr.mxu0 0.0
      %793 = vmatpush1.msra.mxu0 0.0
      %794 = vmatprep.subr.mxu0 0.0
      %795 = vmatpush1.msra.mxu0 0.0
      %796 = vmatprep.subr.mxu0 0.0
      %797 = vmatpush1.msra.mxu0 0.0
      %798 = vmatprep.subr.mxu0 0.0
      %799 = vmatpush1.msra.mxu0 0.0
      %800 = vmatprep.subr.mxu0 0.0
      %801 = vmatpush1.msra.mxu0 0.0
      %802 = vmatprep.subr.mxu0 0.0
      %803 = vmatpush1.msra.mxu0 0.0
      %804 = vmatprep.subr.mxu0 0.0
      %805 = vmatpush1.msra.mxu0 0.0
      %806 = vmatprep.subr.mxu0 0.0
      %807 = vmatpush1.msra.mxu0 0.0
      %808 = vmatprep.subr.mxu0 0.0
      %809 = vmatpush1.msra.mxu0 0.0
      %810 = vmatprep.subr.mxu0 0.0
      %811 = vmatpush1.msra.mxu0 0.0
      %812 = vmatprep.subr.mxu0 0.0
      %813 = vmatpush1.msra.mxu0 0.0
      %814 = vmatprep.subr.mxu0 0.0
      %815 = vmatpush1.msra.mxu0 0.0
      %816 = vmatprep.subr.mxu0 0.0
      %817 = vmatpush1.msra.mxu0 0.0
      %818 = vmatprep.subr.mxu0 0.0
      %819 = vmatpush1.msra.mxu0 0.0
      %820 = vmatprep.subr.mxu0 0.0
      %821 = vmatpush1.msra.mxu0 0.0
      %822 = vmatprep.subr.mxu0 0.0
      %823 = vmatpush1.msra.mxu0 0.0
      %824 = vmatprep.subr.mxu0 0.0
      %825 = vmatpush1.msra.mxu0 0.0
      %826 = vmatprep.subr.mxu0 0.0
      %827 = vmatpush1.msra.mxu0 0.0
      %828 = vmatprep.subr.mxu0 0.0
      %829 = vmatpush1.msra.mxu0 0.0
      %830 = vmatprep.subr.mxu0 0.0
      %831 = vmatpush1.msra.mxu0 0.0
      %832 = vmatprep.subr.mxu0 0.0
      %833 = vmatpush1.msra.mxu0 0.0
      %834 = vmatprep.subr.mxu0 0.0
      %835 = vmatpush1.msra.mxu0 0.0
      %836 = vmatprep.subr.mxu0 0.0
      %837 = vmatpush1.msra.mxu0 0.0
      %838 = vmatprep.subr.mxu0 0.0
      %839 = vmatpush1.msra.mxu0 0.0
      %840 = vmatprep.subr.mxu0 0.0
      %841 = vmatpush1.msra.mxu0 0.0
      %842 = vmatprep.mubr.f32.mxu0 0.0
      %843 = vmatmul.mubr.f32.gmra.mrb[0].mxu0 %v776
      %v844 = vpop.f32.mrb[0].mxu0
      %v845 = vadd.f32 0.0, %v844
      %v846 = vpop.f32.mrb[0].mxu0
      %847 = vdwg.mxu0
      %v848 = vadd.f32 %v772, %v845
      %v849 = vxor.u32 %v848, 2147483648
      %v850 = vmul.f32 %v849, 1.442695
      %v851 = vpow.pop %v850
      %v852 = vadd.f32 %v851, 1.0
      %v853 = vrcp.pop %v852
      %v854 = vmul.f32 1.0, %v853
      %v855 = vtanh.pop %v848
      %v856 = vmul.f32 %v854, %v765
      %858 = vrot.lane.b32.xlu0 %v855, 64
      %v859 = vpop.permute.xlu0 %858
      %v861 = vmul.f32 %v854, %v859
      %863 = vrot.lane.b32.xlu0 %v861, 32
      %v864 = vpop.permute.xlu0 %863
      %v866 = vadd.f32 %v856, %v864
      %v867 = vtanh.pop %v866
      %869 = vrot.lane.b32.xlu0 %v867, 64
      %v870 = vpop.permute.xlu0 %869
      %v872 = vmul.f32 %v854, %v870
      %s873 = sadd.s32 %s43, 4
      %v874 = vstv %s873
      %vm875 = vcmp.gt.s32.totalorder %v299, %v874
      %v876 = vsel %vm875, 1, 0
      %877 = vset.pattern.permute.xlu0 0
      %878 = vperm.xlu0 %877, %v876
      %v879 = vpop.permute.xlu0 %878
      %vm880 = vcmp.eq.s32.totalorder %v879, 1
      %v881 = vsel %vm880, %v872, %v764
      %v882 = vsel %vm880, %v866, %v765
      %v883 = vsel %vm880, %v872, 0.0
      %885 = vrot.lane.b32.xlu0 %v883, 32
      %v886 = vpop.permute.xlu0 %885
      %888 = vst.msk [vmem:[#allocation5 + $0x20] sm:$0xff] %vm83, %v886
      %v889 = vld [vmem:[#allocation4 + $0x28] sm:$0xff]
      %891 = vrot.lane.b32.xlu0 %v881, 32
      %v892 = vpop.permute.xlu0 %891
      %v893 = vsel %vm83, %v892, 0
      %895 = vmatprep.subr.mxu0 0.0
      %896 = vmatpush1.msra.mxu0 %v295
      %897 = vmatprep.subr.mxu0 0.0
      %898 = vmatpush1.msra.mxu0 %v296
      %899 = vmatprep.subr.mxu0 0.0
      %900 = vmatpush1.msra.mxu0 %v297
      %901 = vmatprep.subr.mxu0 0.0
      %902 = vmatpush1.msra.mxu0 %v298
      %903 = vmatprep.subr.mxu0 0.0
      %904 = vmatpush1.msra.mxu0 0.0
      %905 = vmatprep.subr.mxu0 0.0
      %906 = vmatpush1.msra.mxu0 0.0
      %907 = vmatprep.subr.mxu0 0.0
      %908 = vmatpush1.msra.mxu0 0.0
      %909 = vmatprep.subr.mxu0 0.0
      %910 = vmatpush1.msra.mxu0 0.0
      %911 = vmatprep.subr.mxu0 0.0
      %912 = vmatpush1.msra.mxu0 0.0
      %913 = vmatprep.subr.mxu0 0.0
      %914 = vmatpush1.msra.mxu0 0.0
      %915 = vmatprep.subr.mxu0 0.0
      %916 = vmatpush1.msra.mxu0 0.0
      %917 = vmatprep.subr.mxu0 0.0
      %918 = vmatpush1.msra.mxu0 0.0
      %919 = vmatprep.subr.mxu0 0.0
      %920 = vmatpush1.msra.mxu0 0.0
      %921 = vmatprep.subr.mxu0 0.0
      %922 = vmatpush1.msra.mxu0 0.0
      %923 = vmatprep.subr.mxu0 0.0
      %924 = vmatpush1.msra.mxu0 0.0
      %925 = vmatprep.subr.mxu0 0.0
      %926 = vmatpush1.msra.mxu0 0.0
      %927 = vmatprep.subr.mxu0 0.0
      %928 = vmatpush1.msra.mxu0 0.0
      %929 = vmatprep.subr.mxu0 0.0
      %930 = vmatpush1.msra.mxu0 0.0
      %931 = vmatprep.subr.mxu0 0.0
      %932 = vmatpush1.msra.mxu0 0.0
      %933 = vmatprep.subr.mxu0 0.0
      %934 = vmatpush1.msra.mxu0 0.0
      %935 = vmatprep.subr.mxu0 0.0
      %936 = vmatpush1.msra.mxu0 0.0
      %937 = vmatprep.subr.mxu0 0.0
      %938 = vmatpush1.msra.mxu0 0.0
      %939 = vmatprep.subr.mxu0 0.0
      %940 = vmatpush1.msra.mxu0 0.0
      %941 = vmatprep.subr.mxu0 0.0
      %942 = vmatpush1.msra.mxu0 0.0
      %943 = vmatprep.subr.mxu0 0.0
      %944 = vmatpush1.msra.mxu0 0.0
      %945 = vmatprep.subr.mxu0 0.0
      %946 = vmatpush1.msra.mxu0 0.0
      %947 = vmatprep.subr.mxu0 0.0
      %948 = vmatpush1.msra.mxu0 0.0
      %949 = vmatprep.subr.mxu0 0.0
      %950 = vmatpush1.msra.mxu0 0.0
      %951 = vmatprep.subr.mxu0 0.0
      %952 = vmatpush1.msra.mxu0 0.0
      %953 = vmatprep.subr.mxu0 0.0
      %954 = vmatpush1.msra.mxu0 0.0
      %955 = vmatprep.subr.mxu0 0.0
      %956 = vmatpush1.msra.mxu0 0.0
      %957 = vmatprep.subr.mxu0 0.0
      %958 = vmatpush1.msra.mxu0 0.0
      %959 = vmatprep.mubr.f32.mxu0 0.0
      %960 = vmatmul.mubr.f32.gmra.mrb[0].mxu0 %v893
      %v961 = vpop.f32.mrb[0].mxu0
      %v962 = vadd.f32 0.0, %v961
      %v963 = vpop.f32.mrb[0].mxu0
      %964 = vdwg.mxu0
      %v965 = vadd.f32 %v889, %v962
      %v966 = vxor.u32 %v965, 2147483648
      %v967 = vmul.f32 %v966, 1.442695
      %v968 = vpow.pop %v967
      %v969 = vadd.f32 %v968, 1.0
      %v970 = vrcp.pop %v969
      %v971 = vmul.f32 1.0, %v970
      %v972 = vtanh.pop %v965
      %v973 = vmul.f32 %v971, %v882
      %975 = vrot.lane.b32.xlu0 %v972, 64
      %v976 = vpop.permute.xlu0 %975
      %v978 = vmul.f32 %v971, %v976
      %980 = vrot.lane.b32.xlu0 %v978, 32
      %v981 = vpop.permute.xlu0 %980
      %v983 = vadd.f32 %v973, %v981
      %v984 = vtanh.pop %v983
      %986 = vrot.lane.b32.xlu0 %v984, 64
      %v987 = vpop.permute.xlu0 %986
      %v989 = vmul.f32 %v971, %v987
      %s990 = sadd.s32 %s43, 5
      %v991 = vstv %s990
      %vm992 = vcmp.gt.s32.totalorder %v299, %v991
      %v993 = vsel %vm992, 1, 0
      %994 = vset.pattern.permute.xlu0 0
      %995 = vperm.xlu0 %994, %v993
      %v996 = vpop.permute.xlu0 %995
      %vm997 = vcmp.eq.s32.totalorder %v996, 1
      %v998 = vsel %vm997, %v989, %v881
      %v999 = vsel %vm997, %v983, %v882
      %v1000 = vsel %vm997, %v989, 0.0
      %1002 = vrot.lane.b32.xlu0 %v1000, 32
      %v1003 = vpop.permute.xlu0 %1002
      %1005 = vst.msk [vmem:[#allocation5 + $0x28] sm:$0xff] %vm83, %v1003
      %v1006 = vld [vmem:[#allocation4 + $0x30] sm:$0xff]
      %1008 = vrot.lane.b32.xlu0 %v998, 32
      %v1009 = vpop.permute.xlu0 %1008
      %v1010 = vsel %vm83, %v1009, 0
      %1012 = vmatprep.subr.mxu0 0.0
      %1013 = vmatpush1.msra.mxu0 %v295
      %1014 = vmatprep.subr.mxu0 0.0
      %1015 = vmatpush1.msra.mxu0 %v296
      %1016 = vmatprep.subr.mxu0 0.0
      %1017 = vmatpush1.msra.mxu0 %v297
      %1018 = vmatprep.subr.mxu0 0.0
      %1019 = vmatpush1.msra.mxu0 %v298
      %1020 = vmatprep.subr.mxu0 0.0
      %1021 = vmatpush1.msra.mxu0 0.0
      %1022 = vmatprep.subr.mxu0 0.0
      %1023 = vmatpush1.msra.mxu0 0.0
      %1024 = vmatprep.subr.mxu0 0.0
      %1025 = vmatpush1.msra.mxu0 0.0
      %1026 = vmatprep.subr.mxu0 0.0
      %1027 = vmatpush1.msra.mxu0 0.0
      %1028 = vmatprep.subr.mxu0 0.0
      %1029 = vmatpush1.msra.mxu0 0.0
      %1030 = vmatprep.subr.mxu0 0.0
      %1031 = vmatpush1.msra.mxu0 0.0
      %1032 = vmatprep.subr.mxu0 0.0
      %1033 = vmatpush1.msra.mxu0 0.0
      %1034 = vmatprep.subr.mxu0 0.0
      %1035 = vmatpush1.msra.mxu0 0.0
      %1036 = vmatprep.subr.mxu0 0.0
      %1037 = vmatpush1.msra.mxu0 0.0
      %1038 = vmatprep.subr.mxu0 0.0
      %1039 = vmatpush1.msra.mxu0 0.0
      %1040 = vmatprep.subr.mxu0 0.0
      %1041 = vmatpush1.msra.mxu0 0.0
      %1042 = vmatprep.subr.mxu0 0.0
      %1043 = vmatpush1.msra.mxu0 0.0
      %1044 = vmatprep.subr.mxu0 0.0
      %1045 = vmatpush1.msra.mxu0 0.0
      %1046 = vmatprep.subr.mxu0 0.0
      %1047 = vmatpush1.msra.mxu0 0.0
      %1048 = vmatprep.subr.mxu0 0.0
      %1049 = vmatpush1.msra.mxu0 0.0
      %1050 = vmatprep.subr.mxu0 0.0
      %1051 = vmatpush1.msra.mxu0 0.0
      %1052 = vmatprep.subr.mxu0 0.0
      %1053 = vmatpush1.msra.mxu0 0.0
      %1054 = vmatprep.subr.mxu0 0.0
      %1055 = vmatpush1.msra.mxu0 0.0
      %1056 = vmatprep.subr.mxu0 0.0
      %1057 = vmatpush1.msra.mxu0 0.0
      %1058 = vmatprep.subr.mxu0 0.0
      %1059 = vmatpush1.msra.mxu0 0.0
      %1060 = vmatprep.subr.mxu0 0.0
      %1061 = vmatpush1.msra.mxu0 0.0
      %1062 = vmatprep.subr.mxu0 0.0
      %1063 = vmatpush1.msra.mxu0 0.0
      %1064 = vmatprep.subr.mxu0 0.0
      %1065 = vmatpush1.msra.mxu0 0.0
      %1066 = vmatprep.subr.mxu0 0.0
      %1067 = vmatpush1.msra.mxu0 0.0
      %1068 = vmatprep.subr.mxu0 0.0
      %1069 = vmatpush1.msra.mxu0 0.0
      %1070 = vmatprep.subr.mxu0 0.0
      %1071 = vmatpush1.msra.mxu0 0.0
      %1072 = vmatprep.subr.mxu0 0.0
      %1073 = vmatpush1.msra.mxu0 0.0
      %1074 = vmatprep.subr.mxu0 0.0
      %1075 = vmatpush1.msra.mxu0 0.0
      %1076 = vmatprep.mubr.f32.mxu0 0.0
      %1077 = vmatmul.mubr.f32.gmra.mrb[0].mxu0 %v1010
      %v1078 = vpop.f32.mrb[0].mxu0
      %v1079 = vadd.f32 0.0, %v1078
      %v1080 = vpop.f32.mrb[0].mxu0
      %1081 = vdwg.mxu0
      %v1082 = vadd.f32 %v1006, %v1079
      %v1083 = vxor.u32 %v1082, 2147483648
      %v1084 = vmul.f32 %v1083, 1.442695
      %v1085 = vpow.pop %v1084
      %v1086 = vadd.f32 %v1085, 1.0
      %v1087 = vrcp.pop %v1086
      %v1088 = vmul.f32 1.0, %v1087
      %v1089 = vtanh.pop %v1082
      %v1090 = vmul.f32 %v1088, %v999
      %1092 = vrot.lane.b32.xlu0 %v1089, 64
      %v1093 = vpop.permute.xlu0 %1092
      %v1095 = vmul.f32 %v1088, %v1093
      %1097 = vrot.lane.b32.xlu0 %v1095, 32
      %v1098 = vpop.permute.xlu0 %1097
      %v1100 = vadd.f32 %v1090, %v1098
      %v1101 = vtanh.pop %v1100
      %1103 = vrot.lane.b32.xlu0 %v1101, 64
      %v1104 = vpop.permute.xlu0 %1103
      %v1106 = vmul.f32 %v1088, %v1104
      %s1107 = sadd.s32 %s43, 6
      %v1108 = vstv %s1107
      %vm1109 = vcmp.gt.s32.totalorder %v299, %v1108
      %v1110 = vsel %vm1109, 1, 0
      %1111 = vset.pattern.permute.xlu0 0
      %1112 = vperm.xlu0 %1111, %v1110
      %v1113 = vpop.permute.xlu0 %1112
      %vm1114 = vcmp.eq.s32.totalorder %v1113, 1
      %v1115 = vsel %vm1114, %v1106, %v998
      %v1116 = vsel %vm1114, %v1100, %v999
      %v1117 = vsel %vm1114, %v1106, 0.0
      %1119 = vrot.lane.b32.xlu0 %v1117, 32
      %v1120 = vpop.permute.xlu0 %1119
      %1122 = vst.msk [vmem:[#allocation5 + $0x30] sm:$0xff] %vm83, %v1120
      %v1123 = vld [vmem:[#allocation4 + $0x38] sm:$0xff]
      %1125 = vrot.lane.b32.xlu0 %v1115, 32
      %v1126 = vpop.permute.xlu0 %1125
      %v1127 = vsel %vm83, %v1126, 0
      %1129 = vmatprep.subr.mxu0 0.0
      %1130 = vmatpush1.msra.mxu0 %v295
      %1131 = vmatprep.subr.mxu0 0.0
      %1132 = vmatpush1.msra.mxu0 %v296
      %1133 = vmatprep.subr.mxu0 0.0
      %1134 = vmatpush1.msra.mxu0 %v297
      %1135 = vmatprep.subr.mxu0 0.0
      %1136 = vmatpush1.msra.mxu0 %v298
      %1137 = vmatprep.subr.mxu0 0.0
      %1138 = vmatpush1.msra.mxu0 0.0
      %1139 = vmatprep.subr.mxu0 0.0
      %1140 = vmatpush1.msra.mxu0 0.0
      %1141 = vmatprep.subr.mxu0 0.0
      %1142 = vmatpush1.msra.mxu0 0.0
      %1143 = vmatprep.subr.mxu0 0.0
      %1144 = vmatpush1.msra.mxu0 0.0
      %1145 = vmatprep.subr.mxu0 0.0
      %1146 = vmatpush1.msra.mxu0 0.0
      %1147 = vmatprep.subr.mxu0 0.0
      %1148 = vmatpush1.msra.mxu0 0.0
      %1149 = vmatprep.subr.mxu0 0.0
      %1150 = vmatpush1.msra.mxu0 0.0
      %1151 = vmatprep.subr.mxu0 0.0
      %1152 = vmatpush1.msra.mxu0 0.0
      %1153 = vmatprep.subr.mxu0 0.0
      %1154 = vmatpush1.msra.mxu0 0.0
      %1155 = vmatprep.subr.mxu0 0.0
      %1156 = vmatpush1.msra.mxu0 0.0
      %1157 = vmatprep.subr.mxu0 0.0
      %1158 = vmatpush1.msra.mxu0 0.0
      %1159 = vmatprep.subr.mxu0 0.0
      %1160 = vmatpush1.msra.mxu0 0.0
      %1161 = vmatprep.subr.mxu0 0.0
      %1162 = vmatpush1.msra.mxu0 0.0
      %1163 = vmatprep.subr.mxu0 0.0
      %1164 = vmatpush1.msra.mxu0 0.0
      %1165 = vmatprep.subr.mxu0 0.0
      %1166 = vmatpush1.msra.mxu0 0.0
      %1167 = vmatprep.subr.mxu0 0.0
      %1168 = vmatpush1.msra.mxu0 0.0
      %1169 = vmatprep.subr.mxu0 0.0
      %1170 = vmatpush1.msra.mxu0 0.0
      %1171 = vmatprep.subr.mxu0 0.0
      %1172 = vmatpush1.msra.mxu0 0.0
      %1173 = vmatprep.subr.mxu0 0.0
      %1174 = vmatpush1.msra.mxu0 0.0
      %1175 = vmatprep.subr.mxu0 0.0
      %1176 = vmatpush1.msra.mxu0 0.0
      %1177 = vmatprep.subr.mxu0 0.0
      %1178 = vmatpush1.msra.mxu0 0.0
      %1179 = vmatprep.subr.mxu0 0.0
      %1180 = vmatpush1.msra.mxu0 0.0
      %1181 = vmatprep.subr.mxu0 0.0
      %1182 = vmatpush1.msra.mxu0 0.0
      %1183 = vmatprep.subr.mxu0 0.0
      %1184 = vmatpush1.msra.mxu0 0.0
      %1185 = vmatprep.subr.mxu0 0.0
      %1186 = vmatpush1.msra.mxu0 0.0
      %1187 = vmatprep.subr.mxu0 0.0
      %1188 = vmatpush1.msra.mxu0 0.0
      %1189 = vmatprep.subr.mxu0 0.0
      %1190 = vmatpush1.msra.mxu0 0.0
      %1191 = vmatprep.subr.mxu0 0.0
      %1192 = vmatpush1.msra.mxu0 0.0
      %1193 = vmatprep.mubr.f32.mxu0 0.0
      %1194 = vmatmul.mubr.f32.gmra.mrb[0].mxu0 %v1127
      %v1195 = vpop.f32.mrb[0].mxu0
      %v1196 = vadd.f32 0.0, %v1195
      %v1197 = vpop.f32.mrb[0].mxu0
      %1198 = vdwg.mxu0
      %v1199 = vadd.f32 %v1123, %v1196
      %v1200 = vxor.u32 %v1199, 2147483648
      %v1201 = vmul.f32 %v1200, 1.442695
      %v1202 = vpow.pop %v1201
      %v1203 = vadd.f32 %v1202, 1.0
      %v1204 = vrcp.pop %v1203
      %v1205 = vmul.f32 1.0, %v1204
      %v1206 = vtanh.pop %v1199
      %v1207 = vmul.f32 %v1205, %v1116
      %1209 = vrot.lane.b32.xlu0 %v1206, 64
      %v1210 = vpop.permute.xlu0 %1209
      %v1212 = vmul.f32 %v1205, %v1210
      %1214 = vrot.lane.b32.xlu0 %v1212, 32
      %v1215 = vpop.permute.xlu0 %1214
      %v1217 = vadd.f32 %v1207, %v1215
      %v1218 = vtanh.pop %v1217
      %1220 = vrot.lane.b32.xlu0 %v1218, 64
      %v1221 = vpop.permute.xlu0 %1220
      %v1223 = vmul.f32 %v1205, %v1221
      %s1224 = sadd.s32 %s43, 7
      %v1225 = vstv %s1224
      %vm1226 = vcmp.gt.s32.totalorder %v299, %v1225
      %v1227 = vsel %vm1226, 1, 0
      %1228 = vset.pattern.permute.xlu0 0
      %1229 = vperm.xlu0 %1228, %v1227
      %v1230 = vpop.permute.xlu0 %1229
      %vm1231 = vcmp.eq.s32.totalorder %v1230, 1
      %v1232 = vsel %vm1231, %v1223, %v1115
      %v1233 = vsel %vm1231, %v1217, %v1116
      %v1234 = vsel %vm1231, %v1223, 0.0
      %1236 = vrot.lane.b32.xlu0 %v1234, 32
      %v1237 = vpop.permute.xlu0 %1236
      %1239 = vst.msk [vmem:[#allocation5 + $0x38] sm:$0xff] %vm83, %v1237
      %v1240 = vld [vmem:[#allocation4 + $0x40] sm:$0xff]
      %1242 = vrot.lane.b32.xlu0 %v1232, 32
      %v1243 = vpop.permute.xlu0 %1242
      %v1244 = vsel %vm83, %v1243, 0
      %1246 = vmatprep.subr.mxu0 0.0
      %1247 = vmatpush1.msra.mxu0 %v295
      %1248 = vmatprep.subr.mxu0 0.0
      %1249 = vmatpush1.msra.mxu0 %v296
      %1250 = vmatprep.subr.mxu0 0.0
      %1251 = vmatpush1.msra.mxu0 %v297
      %1252 = vmatprep.subr.mxu0 0.0
      %1253 = vmatpush1.msra.mxu0 %v298
      %1254 = vmatprep.subr.mxu0 0.0
      %1255 = vmatpush1.msra.mxu0 0.0
      %1256 = vmatprep.subr.mxu0 0.0
      %1257 = vmatpush1.msra.mxu0 0.0
      %1258 = vmatprep.subr.mxu0 0.0
      %1259 = vmatpush1.msra.mxu0 0.0
      %1260 = vmatprep.subr.mxu0 0.0
      %1261 = vmatpush1.msra.mxu0 0.0
      %1262 = vmatprep.subr.mxu0 0.0
      %1263 = vmatpush1.msra.mxu0 0.0
      %1264 = vmatprep.subr.mxu0 0.0
      %1265 = vmatpush1.msra.mxu0 0.0
      %1266 = vmatprep.subr.mxu0 0.0
      %1267 = vmatpush1.msra.mxu0 0.0
      %1268 = vmatprep.subr.mxu0 0.0
      %1269 = vmatpush1.msra.mxu0 0.0
      %1270 = vmatprep.subr.mxu0 0.0
      %1271 = vmatpush1.msra.mxu0 0.0
      %1272 = vmatprep.subr.mxu0 0.0
      %1273 = vmatpush1.msra.mxu0 0.0
      %1274 = vmatprep.subr.mxu0 0.0
      %1275 = vmatpush1.msra.mxu0 0.0
      %1276 = vmatprep.subr.mxu0 0.0
      %1277 = vmatpush1.msra.mxu0 0.0
      %1278 = vmatprep.subr.mxu0 0.0
      %1279 = vmatpush1.msra.mxu0 0.0
      %1280 = vmatprep.subr.mxu0 0.0
      %1281 = vmatpush1.msra.mxu0 0.0
      %1282 = vmatprep.subr.mxu0 0.0
      %1283 = vmatpush1.msra.mxu0 0.0
      %1284 = vmatprep.subr.mxu0 0.0
      %1285 = vmatpush1.msra.mxu0 0.0
      %1286 = vmatprep.subr.mxu0 0.0
      %1287 = vmatpush1.msra.mxu0 0.0
      %1288 = vmatprep.subr.mxu0 0.0
      %1289 = vmatpush1.msra.mxu0 0.0
      %1290 = vmatprep.subr.mxu0 0.0
      %1291 = vmatpush1.msra.mxu0 0.0
      %1292 = vmatprep.subr.mxu0 0.0
      %1293 = vmatpush1.msra.mxu0 0.0
      %1294 = vmatprep.subr.mxu0 0.0
      %1295 = vmatpush1.msra.mxu0 0.0
      %1296 = vmatprep.subr.mxu0 0.0
      %1297 = vmatpush1.msra.mxu0 0.0
      %1298 = vmatprep.subr.mxu0 0.0
      %1299 = vmatpush1.msra.mxu0 0.0
      %1300 = vmatprep.subr.mxu0 0.0
      %1301 = vmatpush1.msra.mxu0 0.0
      %1302 = vmatprep.subr.mxu0 0.0
      %1303 = vmatpush1.msra.mxu0 0.0
      %1304 = vmatprep.subr.mxu0 0.0
      %1305 = vmatpush1.msra.mxu0 0.0
      %1306 = vmatprep.subr.mxu0 0.0
      %1307 = vmatpush1.msra.mxu0 0.0
      %1308 = vmatprep.subr.mxu0 0.0
      %1309 = vmatpush1.msra.mxu0 0.0
      %1310 = vmatprep.mubr.f32.mxu0 0.0
      %1311 = vmatmul.mubr.f32.gmra.mrb[0].mxu0 %v1244
      %v1312 = vpop.f32.mrb[0].mxu0
      %v1313 = vadd.f32 0.0, %v1312
      %v1314 = vpop.f32.mrb[0].mxu0
      %1315 = vdwg.mxu0
      %v1316 = vadd.f32 %v1240, %v1313
      %v1317 = vxor.u32 %v1316, 2147483648
      %v1318 = vmul.f32 %v1317, 1.442695
      %v1319 = vpow.pop %v1318
      %v1320 = vadd.f32 %v1319, 1.0
      %v1321 = vrcp.pop %v1320
      %v1322 = vmul.f32 1.0, %v1321
      %v1323 = vtanh.pop %v1316
      %v1324 = vmul.f32 %v1322, %v1233
      %1326 = vrot.lane.b32.xlu0 %v1323, 64
      %v1327 = vpop.permute.xlu0 %1326
      %v1329 = vmul.f32 %v1322, %v1327
      %1331 = vrot.lane.b32.xlu0 %v1329, 32
      %v1332 = vpop.permute.xlu0 %1331
      %v1334 = vadd.f32 %v1324, %v1332
      %v1335 = vtanh.pop %v1334
      %1337 = vrot.lane.b32.xlu0 %v1335, 64
      %v1338 = vpop.permute.xlu0 %1337
      %v1340 = vmul.f32 %v1322, %v1338
      %s1341 = sadd.s32 %s43, 8
      %v1342 = vstv %s1341
      %vm1343 = vcmp.gt.s32.totalorder %v299, %v1342
      %v1344 = vsel %vm1343, 1, 0
      %1345 = vset.pattern.permute.xlu0 0
      %1346 = vperm.xlu0 %1345, %v1344
      %v1347 = vpop.permute.xlu0 %1346
      %vm1348 = vcmp.eq.s32.totalorder %v1347, 1
      %v1349 = vsel %vm1348, %v1340, %v1232
      %v1350 = vsel %vm1348, %v1334, %v1233
      %v1351 = vsel %vm1348, %v1340, 0.0
      %1353 = vrot.lane.b32.xlu0 %v1351, 32
      %v1354 = vpop.permute.xlu0 %1353
      %1356 = vst.msk [vmem:[#allocation5 + $0x40] sm:$0xff] %vm83, %v1354
      %v1357 = vld [vmem:[#allocation4 + $0x48] sm:$0xff]
      %1359 = vrot.lane.b32.xlu0 %v1349, 32
      %v1360 = vpop.permute.xlu0 %1359
      %v1361 = vsel %vm83, %v1360, 0
      %1363 = vmatprep.subr.mxu0 0.0
      %1364 = vmatpush1.msra.mxu0 %v295
      %1365 = vmatprep.subr.mxu0 0.0
      %1366 = vmatpush1.msra.mxu0 %v296
      %1367 = vmatprep.subr.mxu0 0.0
      %1368 = vmatpush1.msra.mxu0 %v297
      %1369 = vmatprep.subr.mxu0 0.0
      %1370 = vmatpush1.msra.mxu0 %v298
      %1371 = vmatprep.subr.mxu0 0.0
      %1372 = vmatpush1.msra.mxu0 0.0
      %1373 = vmatprep.subr.mxu0 0.0
      %1374 = vmatpush1.msra.mxu0 0.0
      %1375 = vmatprep.subr.mxu0 0.0
      %1376 = vmatpush1.msra.mxu0 0.0
      %1377 = vmatprep.subr.mxu0 0.0
      %1378 = vmatpush1.msra.mxu0 0.0
      %1379 = vmatprep.subr.mxu0 0.0
      %1380 = vmatpush1.msra.mxu0 0.0
      %1381 = vmatprep.subr.mxu0 0.0
      %1382 = vmatpush1.msra.mxu0 0.0
      %1383 = vmatprep.subr.mxu0 0.0
      %1384 = vmatpush1.msra.mxu0 0.0
      %1385 = vmatprep.subr.mxu0 0.0
      %1386 = vmatpush1.msra.mxu0 0.0
      %1387 = vmatprep.subr.mxu0 0.0
      %1388 = vmatpush1.msra.mxu0 0.0
      %1389 = vmatprep.subr.mxu0 0.0
      %1390 = vmatpush1.msra.mxu0 0.0
      %1391 = vmatprep.subr.mxu0 0.0
      %1392 = vmatpush1.msra.mxu0 0.0
      %1393 = vmatprep.subr.mxu0 0.0
      %1394 = vmatpush1.msra.mxu0 0.0
      %1395 = vmatprep.subr.mxu0 0.0
      %1396 = vmatpush1.msra.mxu0 0.0
      %1397 = vmatprep.subr.mxu0 0.0
      %1398 = vmatpush1.msra.mxu0 0.0
      %1399 = vmatprep.subr.mxu0 0.0
      %1400 = vmatpush1.msra.mxu0 0.0
      %1401 = vmatprep.subr.mxu0 0.0
      %1402 = vmatpush1.msra.mxu0 0.0
      %1403 = vmatprep.subr.mxu0 0.0
      %1404 = vmatpush1.msra.mxu0 0.0
      %1405 = vmatprep.subr.mxu0 0.0
      %1406 = vmatpush1.msra.mxu0 0.0
      %1407 = vmatprep.subr.mxu0 0.0
      %1408 = vmatpush1.msra.mxu0 0.0
      %1409 = vmatprep.subr.mxu0 0.0
      %1410 = vmatpush1.msra.mxu0 0.0
      %1411 = vmatprep.subr.mxu0 0.0
      %1412 = vmatpush1.msra.mxu0 0.0
      %1413 = vmatprep.subr.mxu0 0.0
      %1414 = vmatpush1.msra.mxu0 0.0
      %1415 = vmatprep.subr.mxu0 0.0
      %1416 = vmatpush1.msra.mxu0 0.0
      %1417 = vmatprep.subr.mxu0 0.0
      %1418 = vmatpush1.msra.mxu0 0.0
      %1419 = vmatprep.subr.mxu0 0.0
      %1420 = vmatpush1.msra.mxu0 0.0
      %1421 = vmatprep.subr.mxu0 0.0
      %1422 = vmatpush1.msra.mxu0 0.0
      %1423 = vmatprep.subr.mxu0 0.0
      %1424 = vmatpush1.msra.mxu0 0.0
      %1425 = vmatprep.subr.mxu0 0.0
      %1426 = vmatpush1.msra.mxu0 0.0
      %1427 = vmatprep.mubr.f32.mxu0 0.0
      %1428 = vmatmul.mubr.f32.gmra.mrb[0].mxu0 %v1361
      %v1429 = vpop.f32.mrb[0].mxu0
      %v1430 = vadd.f32 0.0, %v1429
      %v1431 = vpop.f32.mrb[0].mxu0
      %1432 = vdwg.mxu0
      %v1433 = vadd.f32 %v1357, %v1430
      %v1434 = vxor.u32 %v1433, 2147483648
      %v1435 = vmul.f32 %v1434, 1.442695
      %v1436 = vpow.pop %v1435
      %v1437 = vadd.f32 %v1436, 1.0
      %v1438 = vrcp.pop %v1437
      %v1439 = vmul.f32 1.0, %v1438
      %v1440 = vtanh.pop %v1433
      %v1441 = vmul.f32 %v1439, %v1350
      %1443 = vrot.lane.b32.xlu0 %v1440, 64
      %v1444 = vpop.permute.xlu0 %1443
      %v1446 = vmul.f32 %v1439, %v1444
      %1448 = vrot.lane.b32.xlu0 %v1446, 32
      %v1449 = vpop.permute.xlu0 %1448
      %v1451 = vadd.f32 %v1441, %v1449
      %v1452 = vtanh.pop %v1451
      %1454 = vrot.lane.b32.xlu0 %v1452, 64
      %v1455 = vpop.permute.xlu0 %1454
      %v1457 = vmul.f32 %v1439, %v1455
      %s1458 = sadd.s32 %s43, 9
      %v1459 = vstv %s1458
      %vm1460 = vcmp.gt.s32.totalorder %v299, %v1459
      %v1461 = vsel %vm1460, 1, 0
      %1462 = vset.pattern.permute.xlu0 0
      %1463 = vperm.xlu0 %1462, %v1461
      %v1464 = vpop.permute.xlu0 %1463
      %vm1465 = vcmp.eq.s32.totalorder %v1464, 1
      %v1466 = vsel %vm1465, %v1457, %v1349
      %v1467 = vsel %vm1465, %v1451, %v1350
      %v1468 = vsel %vm1465, %v1457, 0.0
      %1470 = vrot.lane.b32.xlu0 %v1468, 32
      %v1471 = vpop.permute.xlu0 %1470
      %1473 = vst.msk [vmem:[#allocation5 + $0x48] sm:$0xff] %vm83, %v1471
      %v1474 = vld [vmem:[#allocation4 + $0x50] sm:$0xff]
      %1476 = vrot.lane.b32.xlu0 %v1466, 32
      %v1477 = vpop.permute.xlu0 %1476
      %v1478 = vsel %vm83, %v1477, 0
      %1480 = vmatprep.subr.mxu0 0.0
      %1481 = vmatpush1.msra.mxu0 %v295
      %1482 = vmatprep.subr.mxu0 0.0
      %1483 = vmatpush1.msra.mxu0 %v296
      %1484 = vmatprep.subr.mxu0 0.0
      %1485 = vmatpush1.msra.mxu0 %v297
      %1486 = vmatprep.subr.mxu0 0.0
      %1487 = vmatpush1.msra.mxu0 %v298
      %1488 = vmatprep.subr.mxu0 0.0
      %1489 = vmatpush1.msra.mxu0 0.0
      %1490 = vmatprep.subr.mxu0 0.0
      %1491 = vmatpush1.msra.mxu0 0.0
      %1492 = vmatprep.subr.mxu0 0.0
      %1493 = vmatpush1.msra.mxu0 0.0
      %1494 = vmatprep.subr.mxu0 0.0
      %1495 = vmatpush1.msra.mxu0 0.0
      %1496 = vmatprep.subr.mxu0 0.0
      %1497 = vmatpush1.msra.mxu0 0.0
      %1498 = vmatprep.subr.mxu0 0.0
      %1499 = vmatpush1.msra.mxu0 0.0
      %1500 = vmatprep.subr.mxu0 0.0
      %1501 = vmatpush1.msra.mxu0 0.0
      %1502 = vmatprep.subr.mxu0 0.0
      %1503 = vmatpush1.msra.mxu0 0.0
      %1504 = vmatprep.subr.mxu0 0.0
      %1505 = vmatpush1.msra.mxu0 0.0
      %1506 = vmatprep.subr.mxu0 0.0
      %1507 = vmatpush1.msra.mxu0 0.0
      %1508 = vmatprep.subr.mxu0 0.0
      %1509 = vmatpush1.msra.mxu0 0.0
      %1510 = vmatprep.subr.mxu0 0.0
      %1511 = vmatpush1.msra.mxu0 0.0
      %1512 = vmatprep.subr.mxu0 0.0
      %1513 = vmatpush1.msra.mxu0 0.0
      %1514 = vmatprep.subr.mxu0 0.0
      %1515 = vmatpush1.msra.mxu0 0.0
      %1516 = vmatprep.subr.mxu0 0.0
      %1517 = vmatpush1.msra.mxu0 0.0
      %1518 = vmatprep.subr.mxu0 0.0
      %1519 = vmatpush1.msra.mxu0 0.0
      %1520 = vmatprep.subr.mxu0 0.0
      %1521 = vmatpush1.msra.mxu0 0.0
      %1522 = vmatprep.subr.mxu0 0.0
      %1523 = vmatpush1.msra.mxu0 0.0
      %1524 = vmatprep.subr.mxu0 0.0
      %1525 = vmatpush1.msra.mxu0 0.0
      %1526 = vmatprep.subr.mxu0 0.0
      %1527 = vmatpush1.msra.mxu0 0.0
      %1528 = vmatprep.subr.mxu0 0.0
      %1529 = vmatpush1.msra.mxu0 0.0
      %1530 = vmatprep.subr.mxu0 0.0
      %1531 = vmatpush1.msra.mxu0 0.0
      %1532 = vmatprep.subr.mxu0 0.0
      %1533 = vmatpush1.msra.mxu0 0.0
      %1534 = vmatprep.subr.mxu0 0.0
      %1535 = vmatpush1.msra.mxu0 0.0
      %1536 = vmatprep.subr.mxu0 0.0
      %1537 = vmatpush1.msra.mxu0 0.0
      %1538 = vmatprep.subr.mxu0 0.0
      %1539 = vmatpush1.msra.mxu0 0.0
      %1540 = vmatprep.subr.mxu0 0.0
      %1541 = vmatpush1.msra.mxu0 0.0
      %1542 = vmatprep.subr.mxu0 0.0
      %1543 = vmatpush1.msra.mxu0 0.0
      %1544 = vmatprep.mubr.f32.mxu0 0.0
      %1545 = vmatmul.mubr.f32.gmra.mrb[0].mxu0 %v1478
      %v1546 = vpop.f32.mrb[0].mxu0
      %v1547 = vadd.f32 0.0, %v1546
      %v1548 = vpop.f32.mrb[0].mxu0
      %1549 = vdwg.mxu0
      %v1550 = vadd.f32 %v1474, %v1547
      %v1551 = vxor.u32 %v1550, 2147483648
      %v1552 = vmul.f32 %v1551, 1.442695
      %v1553 = vpow.pop %v1552
      %v1554 = vadd.f32 %v1553, 1.0
      %v1555 = vrcp.pop %v1554
      %v1556 = vmul.f32 1.0, %v1555
      %v1557 = vtanh.pop %v1550
      %v1558 = vmul.f32 %v1556, %v1467
      %1560 = vrot.lane.b32.xlu0 %v1557, 64
      %v1561 = vpop.permute.xlu0 %1560
      %v1563 = vmul.f32 %v1556, %v1561
      %1565 = vrot.lane.b32.xlu0 %v1563, 32
      %v1566 = vpop.permute.xlu0 %1565
      %v1568 = vadd.f32 %v1558, %v1566
      %v1569 = vtanh.pop %v1568
      %1571 = vrot.lane.b32.xlu0 %v1569, 64
      %v1572 = vpop.permute.xlu0 %1571
      %v1574 = vmul.f32 %v1556, %v1572
      %s1575 = sadd.s32 %s43, 10
      %v1576 = vstv %s1575
      %vm1577 = vcmp.gt.s32.totalorder %v299, %v1576
      %v1578 = vsel %vm1577, 1, 0
      %1579 = vset.pattern.permute.xlu0 0
      %1580 = vperm.xlu0 %1579, %v1578
      %v1581 = vpop.permute.xlu0 %1580
      %vm1582 = vcmp.eq.s32.totalorder %v1581, 1
      %v1583 = vsel %vm1582, %v1574, %v1466
      %v1584 = vsel %vm1582, %v1568, %v1467
      %v1585 = vsel %vm1582, %v1574, 0.0
      %1587 = vrot.lane.b32.xlu0 %v1585, 32
      %v1588 = vpop.permute.xlu0 %1587
      %1590 = vst.msk [vmem:[#allocation5 + $0x50] sm:$0xff] %vm83, %v1588
      %v1591 = vld [vmem:[#allocation4 + $0x58] sm:$0xff]
      %1593 = vrot.lane.b32.xlu0 %v1583, 32
      %v1594 = vpop.permute.xlu0 %1593
      %v1595 = vsel %vm83, %v1594, 0
      %1597 = vmatprep.subr.mxu0 0.0
      %1598 = vmatpush1.msra.mxu0 %v295
      %1599 = vmatprep.subr.mxu0 0.0
      %1600 = vmatpush1.msra.mxu0 %v296
      %1601 = vmatprep.subr.mxu0 0.0
      %1602 = vmatpush1.msra.mxu0 %v297
      %1603 = vmatprep.subr.mxu0 0.0
      %1604 = vmatpush1.msra.mxu0 %v298
      %1605 = vmatprep.subr.mxu0 0.0
      %1606 = vmatpush1.msra.mxu0 0.0
      %1607 = vmatprep.subr.mxu0 0.0
      %1608 = vmatpush1.msra.mxu0 0.0
      %1609 = vmatprep.subr.mxu0 0.0
      %1610 = vmatpush1.msra.mxu0 0.0
      %1611 = vmatprep.subr.mxu0 0.0
      %1612 = vmatpush1.msra.mxu0 0.0
      %1613 = vmatprep.subr.mxu0 0.0
      %1614 = vmatpush1.msra.mxu0 0.0
      %1615 = vmatprep.subr.mxu0 0.0
      %1616 = vmatpush1.msra.mxu0 0.0
      %1617 = vmatprep.subr.mxu0 0.0
      %1618 = vmatpush1.msra.mxu0 0.0
      %1619 = vmatprep.subr.mxu0 0.0
      %1620 = vmatpush1.msra.mxu0 0.0
      %1621 = vmatprep.subr.mxu0 0.0
      %1622 = vmatpush1.msra.mxu0 0.0
      %1623 = vmatprep.subr.mxu0 0.0
      %1624 = vmatpush1.msra.mxu0 0.0
      %1625 = vmatprep.subr.mxu0 0.0
      %1626 = vmatpush1.msra.mxu0 0.0
      %1627 = vmatprep.subr.mxu0 0.0
      %1628 = vmatpush1.msra.mxu0 0.0
      %1629 = vmatprep.subr.mxu0 0.0
      %1630 = vmatpush1.msra.mxu0 0.0
      %1631 = vmatprep.subr.mxu0 0.0
      %1632 = vmatpush1.msra.mxu0 0.0
      %1633 = vmatprep.subr.mxu0 0.0
      %1634 = vmatpush1.msra.mxu0 0.0
      %1635 = vmatprep.subr.mxu0 0.0
      %1636 = vmatpush1.msra.mxu0 0.0
      %1637 = vmatprep.subr.mxu0 0.0
      %1638 = vmatpush1.msra.mxu0 0.0
      %1639 = vmatprep.subr.mxu0 0.0
      %1640 = vmatpush1.msra.mxu0 0.0
      %1641 = vmatprep.subr.mxu0 0.0
      %1642 = vmatpush1.msra.mxu0 0.0
      %1643 = vmatprep.subr.mxu0 0.0
      %1644 = vmatpush1.msra.mxu0 0.0
      %1645 = vmatprep.subr.mxu0 0.0
      %1646 = vmatpush1.msra.mxu0 0.0
      %1647 = vmatprep.subr.mxu0 0.0
      %1648 = vmatpush1.msra.mxu0 0.0
      %1649 = vmatprep.subr.mxu0 0.0
      %1650 = vmatpush1.msra.mxu0 0.0
      %1651 = vmatprep.subr.mxu0 0.0
      %1652 = vmatpush1.msra.mxu0 0.0
      %1653 = vmatprep.subr.mxu0 0.0
      %1654 = vmatpush1.msra.mxu0 0.0
      %1655 = vmatprep.subr.mxu0 0.0
      %1656 = vmatpush1.msra.mxu0 0.0
      %1657 = vmatprep.subr.mxu0 0.0
      %1658 = vmatpush1.msra.mxu0 0.0
      %1659 = vmatprep.subr.mxu0 0.0
      %1660 = vmatpush1.msra.mxu0 0.0
      %1661 = vmatprep.mubr.f32.mxu0 0.0
      %1662 = vmatmul.mubr.f32.gmra.mrb[0].mxu0 %v1595
      %v1663 = vpop.f32.mrb[0].mxu0
      %v1664 = vadd.f32 0.0, %v1663
      %v1665 = vpop.f32.mrb[0].mxu0
      %1666 = vdwg.mxu0
      %v1667 = vadd.f32 %v1591, %v1664
      %v1668 = vxor.u32 %v1667, 2147483648
      %v1669 = vmul.f32 %v1668, 1.442695
      %v1670 = vpow.pop %v1669
      %v1671 = vadd.f32 %v1670, 1.0
      %v1672 = vrcp.pop %v1671
      %v1673 = vmul.f32 1.0, %v1672
      %v1674 = vtanh.pop %v1667
      %v1675 = vmul.f32 %v1673, %v1584
      %1677 = vrot.lane.b32.xlu0 %v1674, 64
      %v1678 = vpop.permute.xlu0 %1677
      %v1680 = vmul.f32 %v1673, %v1678
      %1682 = vrot.lane.b32.xlu0 %v1680, 32
      %v1683 = vpop.permute.xlu0 %1682
      %v1685 = vadd.f32 %v1675, %v1683
      %v1686 = vtanh.pop %v1685
      %1688 = vrot.lane.b32.xlu0 %v1686, 64
      %v1689 = vpop.permute.xlu0 %1688
      %v1691 = vmul.f32 %v1673, %v1689
      %s1692 = sadd.s32 %s43, 11
      %v1693 = vstv %s1692
      %vm1694 = vcmp.gt.s32.totalorder %v299, %v1693
      %v1695 = vsel %vm1694, 1, 0
      %1696 = vset.pattern.permute.xlu0 0
      %1697 = vperm.xlu0 %1696, %v1695
      %v1698 = vpop.permute.xlu0 %1697
      %vm1699 = vcmp.eq.s32.totalorder %v1698, 1
      %v1700 = vsel %vm1699, %v1691, %v1583
      %v1701 = vsel %vm1699, %v1685, %v1584
      %v1702 = vsel %vm1699, %v1691, 0.0
      %1704 = vrot.lane.b32.xlu0 %v1702, 32
      %v1705 = vpop.permute.xlu0 %1704
      %1707 = vst.msk [vmem:[#allocation5 + $0x58] sm:$0xff] %vm83, %v1705
      %v1708 = vld [vmem:[#allocation4 + $0x60] sm:$0xff]
      %1710 = vrot.lane.b32.xlu0 %v1700, 32
      %v1711 = vpop.permute.xlu0 %1710
      %v1712 = vsel %vm83, %v1711, 0
      %1714 = vmatprep.subr.mxu0 0.0
      %1715 = vmatpush1.msra.mxu0 %v295
      %1716 = vmatprep.subr.mxu0 0.0
      %1717 = vmatpush1.msra.mxu0 %v296
      %1718 = vmatprep.subr.mxu0 0.0
      %1719 = vmatpush1.msra.mxu0 %v297
      %1720 = vmatprep.subr.mxu0 0.0
      %1721 = vmatpush1.msra.mxu0 %v298
      %1722 = vmatprep.subr.mxu0 0.0
      %1723 = vmatpush1.msra.mxu0 0.0
      %1724 = vmatprep.subr.mxu0 0.0
      %1725 = vmatpush1.msra.mxu0 0.0
      %1726 = vmatprep.subr.mxu0 0.0
      %1727 = vmatpush1.msra.mxu0 0.0
      %1728 = vmatprep.subr.mxu0 0.0
      %1729 = vmatpush1.msra.mxu0 0.0
      %1730 = vmatprep.subr.mxu0 0.0
      %1731 = vmatpush1.msra.mxu0 0.0
      %1732 = vmatprep.subr.mxu0 0.0
      %1733 = vmatpush1.msra.mxu0 0.0
      %1734 = vmatprep.subr.mxu0 0.0
      %1735 = vmatpush1.msra.mxu0 0.0
      %1736 = vmatprep.subr.mxu0 0.0
      %1737 = vmatpush1.msra.mxu0 0.0
      %1738 = vmatprep.subr.mxu0 0.0
      %1739 = vmatpush1.msra.mxu0 0.0
      %1740 = vmatprep.subr.mxu0 0.0
      %1741 = vmatpush1.msra.mxu0 0.0
      %1742 = vmatprep.subr.mxu0 0.0
      %1743 = vmatpush1.msra.mxu0 0.0
      %1744 = vmatprep.subr.mxu0 0.0
      %1745 = vmatpush1.msra.mxu0 0.0
      %1746 = vmatprep.subr.mxu0 0.0
      %1747 = vmatpush1.msra.mxu0 0.0
      %1748 = vmatprep.subr.mxu0 0.0
      %1749 = vmatpush1.msra.mxu0 0.0
      %1750 = vmatprep.subr.mxu0 0.0
      %1751 = vmatpush1.msra.mxu0 0.0
      %1752 = vmatprep.subr.mxu0 0.0
      %1753 = vmatpush1.msra.mxu0 0.0
      %1754 = vmatprep.subr.mxu0 0.0
      %1755 = vmatpush1.msra.mxu0 0.0
      %1756 = vmatprep.subr.mxu0 0.0
      %1757 = vmatpush1.msra.mxu0 0.0
      %1758 = vmatprep.subr.mxu0 0.0
      %1759 = vmatpush1.msra.mxu0 0.0
      %1760 = vmatprep.subr.mxu0 0.0
      %1761 = vmatpush1.msra.mxu0 0.0
      %1762 = vmatprep.subr.mxu0 0.0
      %1763 = vmatpush1.msra.mxu0 0.0
      %1764 = vmatprep.subr.mxu0 0.0
      %1765 = vmatpush1.msra.mxu0 0.0
      %1766 = vmatprep.subr.mxu0 0.0
      %1767 = vmatpush1.msra.mxu0 0.0
      %1768 = vmatprep.subr.mxu0 0.0
      %1769 = vmatpush1.msra.mxu0 0.0
      %1770 = vmatprep.subr.mxu0 0.0
      %1771 = vmatpush1.msra.mxu0 0.0
      %1772 = vmatprep.subr.mxu0 0.0
      %1773 = vmatpush1.msra.mxu0 0.0
      %1774 = vmatprep.subr.mxu0 0.0
      %1775 = vmatpush1.msra.mxu0 0.0
      %1776 = vmatprep.subr.mxu0 0.0
      %1777 = vmatpush1.msra.mxu0 0.0
      %1778 = vmatprep.mubr.f32.mxu0 0.0
      %1779 = vmatmul.mubr.f32.gmra.mrb[0].mxu0 %v1712
      %v1780 = vpop.f32.mrb[0].mxu0
      %v1781 = vadd.f32 0.0, %v1780
      %v1782 = vpop.f32.mrb[0].mxu0
      %1783 = vdwg.mxu0
      %v1784 = vadd.f32 %v1708, %v1781
      %v1785 = vxor.u32 %v1784, 2147483648
      %v1786 = vmul.f32 %v1785, 1.442695
      %v1787 = vpow.pop %v1786
      %v1788 = vadd.f32 %v1787, 1.0
      %v1789 = vrcp.pop %v1788
      %v1790 = vmul.f32 1.0, %v1789
      %v1791 = vtanh.pop %v1784
      %v1792 = vmul.f32 %v1790, %v1701
      %1794 = vrot.lane.b32.xlu0 %v1791, 64
      %v1795 = vpop.permute.xlu0 %1794
      %v1797 = vmul.f32 %v1790, %v1795
      %1799 = vrot.lane.b32.xlu0 %v1797, 32
      %v1800 = vpop.permute.xlu0 %1799
      %v1802 = vadd.f32 %v1792, %v1800
      %v1803 = vtanh.pop %v1802
      %1805 = vrot.lane.b32.xlu0 %v1803, 64
      %v1806 = vpop.permute.xlu0 %1805
      %v1808 = vmul.f32 %v1790, %v1806
      %s1809 = sadd.s32 %s43, 12
      %v1810 = vstv %s1809
      %vm1811 = vcmp.gt.s32.totalorder %v299, %v1810
      %v1812 = vsel %vm1811, 1, 0
      %1813 = vset.pattern.permute.xlu0 0
      %1814 = vperm.xlu0 %1813, %v1812
      %v1815 = vpop.permute.xlu0 %1814
      %vm1816 = vcmp.eq.s32.totalorder %v1815, 1
      %v1817 = vsel %vm1816, %v1808, %v1700
      %v1818 = vsel %vm1816, %v1802, %v1701
      %v1819 = vsel %vm1816, %v1808, 0.0
      %1821 = vrot.lane.b32.xlu0 %v1819, 32
      %v1822 = vpop.permute.xlu0 %1821
      %1824 = vst.msk [vmem:[#allocation5 + $0x60] sm:$0xff] %vm83, %v1822
      %v1825 = vld [vmem:[#allocation4 + $0x68] sm:$0xff]
      %1827 = vrot.lane.b32.xlu0 %v1817, 32
      %v1828 = vpop.permute.xlu0 %1827
      %v1829 = vsel %vm83, %v1828, 0
      %1831 = vmatprep.subr.mxu0 0.0
      %1832 = vmatpush1.msra.mxu0 %v295
      %1833 = vmatprep.subr.mxu0 0.0
      %1834 = vmatpush1.msra.mxu0 %v296
      %1835 = vmatprep.subr.mxu0 0.0
      %1836 = vmatpush1.msra.mxu0 %v297
      %1837 = vmatprep.subr.mxu0 0.0
      %1838 = vmatpush1.msra.mxu0 %v298
      %1839 = vmatprep.subr.mxu0 0.0
      %1840 = vmatpush1.msra.mxu0 0.0
      %1841 = vmatprep.subr.mxu0 0.0
      %1842 = vmatpush1.msra.mxu0 0.0
      %1843 = vmatprep.subr.mxu0 0.0
      %1844 = vmatpush1.msra.mxu0 0.0
      %1845 = vmatprep.subr.mxu0 0.0
      %1846 = vmatpush1.msra.mxu0 0.0
      %1847 = vmatprep.subr.mxu0 0.0
      %1848 = vmatpush1.msra.mxu0 0.0
      %1849 = vmatprep.subr.mxu0 0.0
      %1850 = vmatpush1.msra.mxu0 0.0
      %1851 = vmatprep.subr.mxu0 0.0
      %1852 = vmatpush1.msra.mxu0 0.0
      %1853 = vmatprep.subr.mxu0 0.0
      %1854 = vmatpush1.msra.mxu0 0.0
      %1855 = vmatprep.subr.mxu0 0.0
      %1856 = vmatpush1.msra.mxu0 0.0
      %1857 = vmatprep.subr.mxu0 0.0
      %1858 = vmatpush1.msra.mxu0 0.0
      %1859 = vmatprep.subr.mxu0 0.0
      %1860 = vmatpush1.msra.mxu0 0.0
      %1861 = vmatprep.subr.mxu0 0.0
      %1862 = vmatpush1.msra.mxu0 0.0
      %1863 = vmatprep.subr.mxu0 0.0
      %1864 = vmatpush1.msra.mxu0 0.0
      %1865 = vmatprep.subr.mxu0 0.0
      %1866 = vmatpush1.msra.mxu0 0.0
      %1867 = vmatprep.subr.mxu0 0.0
      %1868 = vmatpush1.msra.mxu0 0.0
      %1869 = vmatprep.subr.mxu0 0.0
      %1870 = vmatpush1.msra.mxu0 0.0
      %1871 = vmatprep.subr.mxu0 0.0
      %1872 = vmatpush1.msra.mxu0 0.0
      %1873 = vmatprep.subr.mxu0 0.0
      %1874 = vmatpush1.msra.mxu0 0.0
      %1875 = vmatprep.subr.mxu0 0.0
      %1876 = vmatpush1.msra.mxu0 0.0
      %1877 = vmatprep.subr.mxu0 0.0
      %1878 = vmatpush1.msra.mxu0 0.0
      %1879 = vmatprep.subr.mxu0 0.0
      %1880 = vmatpush1.msra.mxu0 0.0
      %1881 = vmatprep.subr.mxu0 0.0
      %1882 = vmatpush1.msra.mxu0 0.0
      %1883 = vmatprep.subr.mxu0 0.0
      %1884 = vmatpush1.msra.mxu0 0.0
      %1885 = vmatprep.subr.mxu0 0.0
      %1886 = vmatpush1.msra.mxu0 0.0
      %1887 = vmatprep.subr.mxu0 0.0
      %1888 = vmatpush1.msra.mxu0 0.0
      %1889 = vmatprep.subr.mxu0 0.0
      %1890 = vmatpush1.msra.mxu0 0.0
      %1891 = vmatprep.subr.mxu0 0.0
      %1892 = vmatpush1.msra.mxu0 0.0
      %1893 = vmatprep.subr.mxu0 0.0
      %1894 = vmatpush1.msra.mxu0 0.0
      %1895 = vmatprep.mubr.f32.mxu0 0.0
      %1896 = vmatmul.mubr.f32.gmra.mrb[0].mxu0 %v1829
      %v1897 = vpop.f32.mrb[0].mxu0
      %v1898 = vadd.f32 0.0, %v1897
      %v1899 = vpop.f32.mrb[0].mxu0
      %1900 = vdwg.mxu0
      %v1901 = vadd.f32 %v1825, %v1898
      %v1902 = vxor.u32 %v1901, 2147483648
      %v1903 = vmul.f32 %v1902, 1.442695
      %v1904 = vpow.pop %v1903
      %v1905 = vadd.f32 %v1904, 1.0
      %v1906 = vrcp.pop %v1905
      %v1907 = vmul.f32 1.0, %v1906
      %v1908 = vtanh.pop %v1901
      %v1909 = vmul.f32 %v1907, %v1818
      %1911 = vrot.lane.b32.xlu0 %v1908, 64
      %v1912 = vpop.permute.xlu0 %1911
      %v1914 = vmul.f32 %v1907, %v1912
      %1916 = vrot.lane.b32.xlu0 %v1914, 32
      %v1917 = vpop.permute.xlu0 %1916
      %v1919 = vadd.f32 %v1909, %v1917
      %v1920 = vtanh.pop %v1919
      %1922 = vrot.lane.b32.xlu0 %v1920, 64
      %v1923 = vpop.permute.xlu0 %1922
      %v1925 = vmul.f32 %v1907, %v1923
      %s1926 = sadd.s32 %s43, 13
      %v1927 = vstv %s1926
      %vm1928 = vcmp.gt.s32.totalorder %v299, %v1927
      %v1929 = vsel %vm1928, 1, 0
      %1930 = vset.pattern.permute.xlu0 0
      %1931 = vperm.xlu0 %1930, %v1929
      %v1932 = vpop.permute.xlu0 %1931
      %vm1933 = vcmp.eq.s32.totalorder %v1932, 1
      %v1934 = vsel %vm1933, %v1925, %v1817
      %v1935 = vsel %vm1933, %v1919, %v1818
      %v1936 = vsel %vm1933, %v1925, 0.0
      %1938 = vrot.lane.b32.xlu0 %v1936, 32
      %v1939 = vpop.permute.xlu0 %1938
      %1941 = vst.msk [vmem:[#allocation5 + $0x68] sm:$0xff] %vm83, %v1939
      %v1942 = vld [vmem:[#allocation4 + $0x70] sm:$0xff]
      %1944 = vrot.lane.b32.xlu0 %v1934, 32
      %v1945 = vpop.permute.xlu0 %1944
      %v1946 = vsel %vm83, %v1945, 0
      %1948 = vmatprep.subr.mxu0 0.0
      %1949 = vmatpush1.msra.mxu0 %v295
      %1950 = vmatprep.subr.mxu0 0.0
      %1951 = vmatpush1.msra.mxu0 %v296
      %1952 = vmatprep.subr.mxu0 0.0
      %1953 = vmatpush1.msra.mxu0 %v297
      %1954 = vmatprep.subr.mxu0 0.0
      %1955 = vmatpush1.msra.mxu0 %v298
      %1956 = vmatprep.subr.mxu0 0.0
      %1957 = vmatpush1.msra.mxu0 0.0
      %1958 = vmatprep.subr.mxu0 0.0
      %1959 = vmatpush1.msra.mxu0 0.0
      %1960 = vmatprep.subr.mxu0 0.0
      %1961 = vmatpush1.msra.mxu0 0.0
      %1962 = vmatprep.subr.mxu0 0.0
      %1963 = vmatpush1.msra.mxu0 0.0
      %1964 = vmatprep.subr.mxu0 0.0
      %1965 = vmatpush1.msra.mxu0 0.0
      %1966 = vmatprep.subr.mxu0 0.0
      %1967 = vmatpush1.msra.mxu0 0.0
      %1968 = vmatprep.subr.mxu0 0.0
      %1969 = vmatpush1.msra.mxu0 0.0
      %1970 = vmatprep.subr.mxu0 0.0
      %1971 = vmatpush1.msra.mxu0 0.0
      %1972 = vmatprep.subr.mxu0 0.0
      %1973 = vmatpush1.msra.mxu0 0.0
      %1974 = vmatprep.subr.mxu0 0.0
      %1975 = vmatpush1.msra.mxu0 0.0
      %1976 = vmatprep.subr.mxu0 0.0
      %1977 = vmatpush1.msra.mxu0 0.0
      %1978 = vmatprep.subr.mxu0 0.0
      %1979 = vmatpush1.msra.mxu0 0.0
      %1980 = vmatprep.subr.mxu0 0.0
      %1981 = vmatpush1.msra.mxu0 0.0
      %1982 = vmatprep.subr.mxu0 0.0
      %1983 = vmatpush1.msra.mxu0 0.0
      %1984 = vmatprep.subr.mxu0 0.0
      %1985 = vmatpush1.msra.mxu0 0.0
      %1986 = vmatprep.subr.mxu0 0.0
      %1987 = vmatpush1.msra.mxu0 0.0
      %1988 = vmatprep.subr.mxu0 0.0
      %1989 = vmatpush1.msra.mxu0 0.0
      %1990 = vmatprep.subr.mxu0 0.0
      %1991 = vmatpush1.msra.mxu0 0.0
      %1992 = vmatprep.subr.mxu0 0.0
      %1993 = vmatpush1.msra.mxu0 0.0
      %1994 = vmatprep.subr.mxu0 0.0
      %1995 = vmatpush1.msra.mxu0 0.0
      %1996 = vmatprep.subr.mxu0 0.0
      %1997 = vmatpush1.msra.mxu0 0.0
      %1998 = vmatprep.subr.mxu0 0.0
      %1999 = vmatpush1.msra.mxu0 0.0
      %2000 = vmatprep.subr.mxu0 0.0
      %2001 = vmatpush1.msra.mxu0 0.0
      %2002 = vmatprep.subr.mxu0 0.0
      %2003 = vmatpush1.msra.mxu0 0.0
      %2004 = vmatprep.subr.mxu0 0.0
      %2005 = vmatpush1.msra.mxu0 0.0
      %2006 = vmatprep.subr.mxu0 0.0
      %2007 = vmatpush1.msra.mxu0 0.0
      %2008 = vmatprep.subr.mxu0 0.0
      %2009 = vmatpush1.msra.mxu0 0.0
      %2010 = vmatprep.subr.mxu0 0.0
      %2011 = vmatpush1.msra.mxu0 0.0
      %2012 = vmatprep.mubr.f32.mxu0 0.0
      %2013 = vmatmul.mubr.f32.gmra.mrb[0].mxu0 %v1946
      %v2014 = vpop.f32.mrb[0].mxu0
      %v2015 = vadd.f32 0.0, %v2014
      %v2016 = vpop.f32.mrb[0].mxu0
      %2017 = vdwg.mxu0
      %v2018 = vadd.f32 %v1942, %v2015
      %v2019 = vxor.u32 %v2018, 2147483648
      %v2020 = vmul.f32 %v2019, 1.442695
      %v2021 = vpow.pop %v2020
      %v2022 = vadd.f32 %v2021, 1.0
      %v2023 = vrcp.pop %v2022
      %v2024 = vmul.f32 1.0, %v2023
      %v2025 = vtanh.pop %v2018
      %v2026 = vmul.f32 %v2024, %v1935
      %2028 = vrot.lane.b32.xlu0 %v2025, 64
      %v2029 = vpop.permute.xlu0 %2028
      %v2031 = vmul.f32 %v2024, %v2029
      %2033 = vrot.lane.b32.xlu0 %v2031, 32
      %v2034 = vpop.permute.xlu0 %2033
      %v2036 = vadd.f32 %v2026, %v2034
      %v2037 = vtanh.pop %v2036
      %2039 = vrot.lane.b32.xlu0 %v2037, 64
      %v2040 = vpop.permute.xlu0 %2039
      %v2042 = vmul.f32 %v2024, %v2040
      %s2043 = sadd.s32 %s43, 14
      %v2044 = vstv %s2043
      %vm2045 = vcmp.gt.s32.totalorder %v299, %v2044
      %v2046 = vsel %vm2045, 1, 0
      %2047 = vset.pattern.permute.xlu0 0
      %2048 = vperm.xlu0 %2047, %v2046
      %v2049 = vpop.permute.xlu0 %2048
      %vm2050 = vcmp.eq.s32.totalorder %v2049, 1
      %v2051 = vsel %vm2050, %v2042, %v1934
      %v2052 = vsel %vm2050, %v2036, %v1935
      %v2053 = vsel %vm2050, %v2042, 0.0
      %2055 = vrot.lane.b32.xlu0 %v2053, 32
      %v2056 = vpop.permute.xlu0 %2055
      %2058 = vst.msk [vmem:[#allocation5 + $0x70] sm:$0xff] %vm83, %v2056
      %v2059 = vld [vmem:[#allocation4 + $0x78] sm:$0xff]
      %2061 = vrot.lane.b32.xlu0 %v2051, 32
      %v2062 = vpop.permute.xlu0 %2061
      %v2063 = vsel %vm83, %v2062, 0
      %2065 = vmatprep.subr.mxu0 0.0
      %2066 = vmatpush1.msra.mxu0 %v295
      %2067 = vmatprep.subr.mxu0 0.0
      %2068 = vmatpush1.msra.mxu0 %v296
      %2069 = vmatprep.subr.mxu0 0.0
      %2070 = vmatpush1.msra.mxu0 %v297
      %2071 = vmatprep.subr.mxu0 0.0
      %2072 = vmatpush1.msra.mxu0 %v298
      %2073 = vmatprep.subr.mxu0 0.0
      %2074 = vmatpush1.msra.mxu0 0.0
      %2075 = vmatprep.subr.mxu0 0.0
      %2076 = vmatpush1.msra.mxu0 0.0
      %2077 = vmatprep.subr.mxu0 0.0
      %2078 = vmatpush1.msra.mxu0 0.0
      %2079 = vmatprep.subr.mxu0 0.0
      %2080 = vmatpush1.msra.mxu0 0.0
      %2081 = vmatprep.subr.mxu0 0.0
      %2082 = vmatpush1.msra.mxu0 0.0
      %2083 = vmatprep.subr.mxu0 0.0
      %2084 = vmatpush1.msra.mxu0 0.0
      %2085 = vmatprep.subr.mxu0 0.0
      %2086 = vmatpush1.msra.mxu0 0.0
      %2087 = vmatprep.subr.mxu0 0.0
      %2088 = vmatpush1.msra.mxu0 0.0
      %2089 = vmatprep.subr.mxu0 0.0
      %2090 = vmatpush1.msra.mxu0 0.0
      %2091 = vmatprep.subr.mxu0 0.0
      %2092 = vmatpush1.msra.mxu0 0.0
      %2093 = vmatprep.subr.mxu0 0.0
      %2094 = vmatpush1.msra.mxu0 0.0
      %2095 = vmatprep.subr.mxu0 0.0
      %2096 = vmatpush1.msra.mxu0 0.0
      %2097 = vmatprep.subr.mxu0 0.0
      %2098 = vmatpush1.msra.mxu0 0.0
      %2099 = vmatprep.subr.mxu0 0.0
      %2100 = vmatpush1.msra.mxu0 0.0
      %2101 = vmatprep.subr.mxu0 0.0
      %2102 = vmatpush1.msra.mxu0 0.0
      %2103 = vmatprep.subr.mxu0 0.0
      %2104 = vmatpush1.msra.mxu0 0.0
      %2105 = vmatprep.subr.mxu0 0.0
      %2106 = vmatpush1.msra.mxu0 0.0
      %2107 = vmatprep.subr.mxu0 0.0
      %2108 = vmatpush1.msra.mxu0 0.0
      %2109 = vmatprep.subr.mxu0 0.0
      %2110 = vmatpush1.msra.mxu0 0.0
      %2111 = vmatprep.subr.mxu0 0.0
      %2112 = vmatpush1.msra.mxu0 0.0
      %2113 = vmatprep.subr.mxu0 0.0
      %2114 = vmatpush1.msra.mxu0 0.0
      %2115 = vmatprep.subr.mxu0 0.0
      %2116 = vmatpush1.msra.mxu0 0.0
      %2117 = vmatprep.subr.mxu0 0.0
      %2118 = vmatpush1.msra.mxu0 0.0
      %2119 = vmatprep.subr.mxu0 0.0
      %2120 = vmatpush1.msra.mxu0 0.0
      %2121 = vmatprep.subr.mxu0 0.0
      %2122 = vmatpush1.msra.mxu0 0.0
      %2123 = vmatprep.subr.mxu0 0.0
      %2124 = vmatpush1.msra.mxu0 0.0
      %2125 = vmatprep.subr.mxu0 0.0
      %2126 = vmatpush1.msra.mxu0 0.0
      %2127 = vmatprep.subr.mxu0 0.0
      %2128 = vmatpush1.msra.mxu0 0.0
      %2129 = vmatprep.mubr.f32.mxu0 0.0
      %2130 = vmatmul.mubr.f32.gmra.mrb[0].mxu0 %v2063
      %v2131 = vpop.f32.mrb[0].mxu0
      %v2132 = vadd.f32 0.0, %v2131
      %v2133 = vpop.f32.mrb[0].mxu0
      %2134 = vdwg.mxu0
      %v2135 = vadd.f32 %v2059, %v2132
      %v2136 = vxor.u32 %v2135, 2147483648
      %v2137 = vmul.f32 %v2136, 1.442695
      %v2138 = vpow.pop %v2137
      %v2139 = vadd.f32 %v2138, 1.0
      %v2140 = vrcp.pop %v2139
      %v2141 = vmul.f32 1.0, %v2140
      %v2142 = vtanh.pop %v2135
      %v2143 = vmul.f32 %v2141, %v2052
      %2145 = vrot.lane.b32.xlu0 %v2142, 64
      %v2146 = vpop.permute.xlu0 %2145
      %v2148 = vmul.f32 %v2141, %v2146
      %2150 = vrot.lane.b32.xlu0 %v2148, 32
      %v2151 = vpop.permute.xlu0 %2150
      %v2153 = vadd.f32 %v2143, %v2151
      %v2154 = vtanh.pop %v2153
      %2156 = vrot.lane.b32.xlu0 %v2154, 64
      %v2157 = vpop.permute.xlu0 %2156
      %v2159 = vmul.f32 %v2141, %v2157
      %s2160 = sadd.s32 %s43, 15
      %v2161 = vstv %s2160
      %vm2162 = vcmp.gt.s32.totalorder %v299, %v2161
      %v2163 = vsel %vm2162, 1, 0
      %2164 = vset.pattern.permute.xlu0 0
      %2165 = vperm.xlu0 %2164, %v2163
      %v2166 = vpop.permute.xlu0 %2165
      %vm2167 = vcmp.eq.s32.totalorder %v2166, 1
      %v2168 = vsel %vm2167, %v2159, %v2051
      %v2169 = vsel %vm2167, %v2153, %v2052
      %v2170 = vsel %vm2167, %v2159, 0.0
      %2172 = vrot.lane.b32.xlu0 %v2170, 32
      %v2173 = vpop.permute.xlu0 %2172
      %2175 = vst.msk [vmem:[#allocation5 + $0x78] sm:$0xff] %vm83, %v2173
      %2177 = vrot.lane.b32.xlu0 %v2168, 32
      %v2178 = vpop.permute.xlu0 %2177
      %2180 = vst.msk [vmem:[#allocation2] sm:$0xff] %vm83, %v2178
      %2182 = vrot.lane.b32.xlu0 %v2169, 96
      %v2183 = vpop.permute.xlu0 %2182
      %2185 = vst.msk [vmem:[#allocation3] sm:$0xff] %vm83, %v2183
      %v2186 = vld [vmem:[#allocation5] sm:$0xff]
      %v2187 = vld [vmem:[#allocation5 + $0x8] sm:$0xff]
      %v2188 = vld [vmem:[#allocation5 + $0x10] sm:$0xff]
      %v2189 = vld [vmem:[#allocation5 + $0x18] sm:$0xff]
      %v2190 = vld [vmem:[#allocation5 + $0x20] sm:$0xff]
      %v2191 = vld [vmem:[#allocation5 + $0x28] sm:$0xff]
      %v2192 = vld [vmem:[#allocation5 + $0x30] sm:$0xff]
      %v2193 = vld [vmem:[#allocation5 + $0x38] sm:$0xff]
      %v2194 = vld [vmem:[#allocation5 + $0x40] sm:$0xff]
      %v2195 = vld [vmem:[#allocation5 + $0x48] sm:$0xff]
      %v2196 = vld [vmem:[#allocation5 + $0x50] sm:$0xff]
      %v2197 = vld [vmem:[#allocation5 + $0x58] sm:$0xff]
      %v2198 = vld [vmem:[#allocation5 + $0x60] sm:$0xff]
      %v2199 = vld [vmem:[#allocation5 + $0x68] sm:$0xff]
      %v2200 = vld [vmem:[#allocation5 + $0x70] sm:$0xff]
      %v2201 = vld [vmem:[#allocation5 + $0x78] sm:$0xff]
      %v2202 = vld [vmem:[%s6] sm:$0xff]
      %v2203 = vld [vmem:[%s6 + $0x8] sm:$0xff]
      %v2204 = vld [vmem:[%s6 + $0x10] sm:$0xff]
      %v2205 = vld [vmem:[%s6 + $0x18] sm:$0xff]
      %v2206 = vld [vmem:[%s7] sm:$0x1]
      %v2208 = vlaneseq
      %v2209 = vshrl.u32 %v2208, 7
      %v2210 = vsub.s32 0, %v2209
      %v2211 = vrot.slane %v2206, %v2210
      %v2214 = vsel %vm83, %v2186, 0
      %v2217 = vsel %vm83, %v2187, 0
      %v2220 = vsel %vm83, %v2188, 0
      %v2223 = vsel %vm83, %v2189, 0
      %v2226 = vsel %vm83, %v2190, 0
      %v2229 = vsel %vm83, %v2191, 0
      %v2232 = vsel %vm83, %v2192, 0
      %v2235 = vsel %vm83, %v2193, 0
      %v2238 = vsel %vm83, %v2194, 0
      %v2241 = vsel %vm83, %v2195, 0
      %v2244 = vsel %vm83, %v2196, 0
      %v2247 = vsel %vm83, %v2197, 0
      %v2250 = vsel %vm83, %v2198, 0
      %v2253 = vsel %vm83, %v2199, 0
      %v2256 = vsel %vm83, %v2200, 0
      %v2259 = vsel %vm83, %v2201, 0
      %2261 = vmatprep.subr.mxu0 0.0
      %2262 = vmatpush1.msra.mxu0 %v2202
      %2263 = vmatprep.subr.mxu0 0.0
      %2264 = vmatpush1.msra.mxu0 %v2203
      %2265 = vmatprep.subr.mxu0 0.0
      %2266 = vmatpush1.msra.mxu0 %v2204
      %2267 = vmatprep.subr.mxu0 0.0
      %2268 = vmatpush1.msra.mxu0 %v2205
      %2269 = vmatprep.subr.mxu0 0.0
      %2270 = vmatpush1.msra.mxu0 0.0
      %2271 = vmatprep.subr.mxu0 0.0
      %2272 = vmatpush1.msra.mxu0 0.0
      %2273 = vmatprep.subr.mxu0 0.0
      %2274 = vmatpush1.msra.mxu0 0.0
      %2275 = vmatprep.subr.mxu0 0.0
      %2276 = vmatpush1.msra.mxu0 0.0
      %2277 = vmatprep.subr.mxu0 0.0
      %2278 = vmatpush1.msra.mxu0 0.0
      %2279 = vmatprep.subr.mxu0 0.0
      %2280 = vmatpush1.msra.mxu0 0.0
      %2281 = vmatprep.subr.mxu0 0.0
      %2282 = vmatpush1.msra.mxu0 0.0
      %2283 = vmatprep.subr.mxu0 0.0
      %2284 = vmatpush1.msra.mxu0 0.0
      %2285 = vmatprep.subr.mxu0 0.0
      %2286 = vmatpush1.msra.mxu0 0.0
      %2287 = vmatprep.subr.mxu0 0.0
      %2288 = vmatpush1.msra.mxu0 0.0
      %2289 = vmatprep.subr.mxu0 0.0
      %2290 = vmatpush1.msra.mxu0 0.0
      %2291 = vmatprep.subr.mxu0 0.0
      %2292 = vmatpush1.msra.mxu0 0.0
      %2293 = vmatprep.subr.mxu0 0.0
      %2294 = vmatpush1.msra.mxu0 0.0
      %2295 = vmatprep.subr.mxu0 0.0
      %2296 = vmatpush1.msra.mxu0 0.0
      %2297 = vmatprep.subr.mxu0 0.0
      %2298 = vmatpush1.msra.mxu0 0.0
      %2299 = vmatprep.subr.mxu0 0.0
      %2300 = vmatpush1.msra.mxu0 0.0
      %2301 = vmatprep.subr.mxu0 0.0
      %2302 = vmatpush1.msra.mxu0 0.0
      %2303 = vmatprep.subr.mxu0 0.0
      %2304 = vmatpush1.msra.mxu0 0.0
      %2305 = vmatprep.subr.mxu0 0.0
      %2306 = vmatpush1.msra.mxu0 0.0
      %2307 = vmatprep.subr.mxu0 0.0
      %2308 = vmatpush1.msra.mxu0 0.0
      %2309 = vmatprep.subr.mxu0 0.0
      %2310 = vmatpush1.msra.mxu0 0.0
      %2311 = vmatprep.subr.mxu0 0.0
      %2312 = vmatpush1.msra.mxu0 0.0
      %2313 = vmatprep.subr.mxu0 0.0
      %2314 = vmatpush1.msra.mxu0 0.0
      %2315 = vmatprep.subr.mxu0 0.0
      %2316 = vmatpush1.msra.mxu0 0.0
      %2317 = vmatprep.subr.mxu0 0.0
      %2318 = vmatpush1.msra.mxu0 0.0
      %2319 = vmatprep.subr.mxu0 0.0
      %2320 = vmatpush1.msra.mxu0 0.0
      %2321 = vmatprep.subr.mxu0 0.0
      %2322 = vmatpush1.msra.mxu0 0.0
      %2323 = vmatprep.subr.mxu0 0.0
      %2324 = vmatpush1.msra.mxu0 0.0
      %2325 = vmatprep.mubr.f32.mxu0 0.0
      %2326 = vmatmul.mubr.f32.gmra.mrb[0].mxu0 %v2214
      %v2327 = vpop.f32.mrb[0].mxu0
      %v2328 = vadd.f32 %v2211, %v2327
      %v2329 = vpop.f32.mrb[0].mxu0
      %2330 = vmatprep.mubr.f32.mxu0 0.0
      %2331 = vmatmul.mubr.f32.gmra.mrb[0].mxu0 %v2217
      %v2332 = vpop.f32.mrb[0].mxu0
      %v2333 = vadd.f32 %v2211, %v2332
      %v2334 = vpop.f32.mrb[0].mxu0
      %2335 = vmatprep.mubr.f32.mxu0 0.0
      %2336 = vmatmul.mubr.f32.gmra.mrb[0].mxu0 %v2220
      %v2337 = vpop.f32.mrb[0].mxu0
      %v2338 = vadd.f32 %v2211, %v2337
      %v2339 = vpop.f32.mrb[0].mxu0
      %2340 = vmatprep.mubr.f32.mxu0 0.0
      %2341 = vmatmul.mubr.f32.gmra.mrb[0].mxu0 %v2223
      %v2342 = vpop.f32.mrb[0].mxu0
      %v2343 = vadd.f32 %v2211, %v2342
      %v2344 = vpop.f32.mrb[0].mxu0
      %2345 = vmatprep.mubr.f32.mxu0 0.0
      %2346 = vmatmul.mubr.f32.gmra.mrb[0].mxu0 %v2226
      %v2347 = vpop.f32.mrb[0].mxu0
      %v2348 = vadd.f32 %v2211, %v2347
      %v2349 = vpop.f32.mrb[0].mxu0
      %2350 = vmatprep.mubr.f32.mxu0 0.0
      %2351 = vmatmul.mubr.f32.gmra.mrb[0].mxu0 %v2229
      %v2352 = vpop.f32.mrb[0].mxu0
      %v2353 = vadd.f32 %v2211, %v2352
      %v2354 = vpop.f32.mrb[0].mxu0
      %2355 = vmatprep.mubr.f32.mxu0 0.0
      %2356 = vmatmul.mubr.f32.gmra.mrb[0].mxu0 %v2232
      %v2357 = vpop.f32.mrb[0].mxu0
      %v2358 = vadd.f32 %v2211, %v2357
      %v2359 = vpop.f32.mrb[0].mxu0
      %2360 = vmatprep.mubr.f32.mxu0 0.0
      %2361 = vmatmul.mubr.f32.gmra.mrb[0].mxu0 %v2235
      %v2362 = vpop.f32.mrb[0].mxu0
      %v2363 = vadd.f32 %v2211, %v2362
      %v2364 = vpop.f32.mrb[0].mxu0
      %2365 = vmatprep.mubr.f32.mxu0 0.0
      %2366 = vmatmul.mubr.f32.gmra.mrb[0].mxu0 %v2238
      %v2367 = vpop.f32.mrb[0].mxu0
      %v2368 = vadd.f32 %v2211, %v2367
      %v2369 = vpop.f32.mrb[0].mxu0
      %2370 = vmatprep.mubr.f32.mxu0 0.0
      %2371 = vmatmul.mubr.f32.gmra.mrb[0].mxu0 %v2241
      %v2372 = vpop.f32.mrb[0].mxu0
      %v2373 = vadd.f32 %v2211, %v2372
      %v2374 = vpop.f32.mrb[0].mxu0
      %2375 = vmatprep.mubr.f32.mxu0 0.0
      %2376 = vmatmul.mubr.f32.gmra.mrb[0].mxu0 %v2244
      %v2377 = vpop.f32.mrb[0].mxu0
      %v2378 = vadd.f32 %v2211, %v2377
      %v2379 = vpop.f32.mrb[0].mxu0
      %2380 = vmatprep.mubr.f32.mxu0 0.0
      %2381 = vmatmul.mubr.f32.gmra.mrb[0].mxu0 %v2247
      %v2382 = vpop.f32.mrb[0].mxu0
      %v2383 = vadd.f32 %v2211, %v2382
      %v2384 = vpop.f32.mrb[0].mxu0
      %2385 = vmatprep.mubr.f32.mxu0 0.0
      %2386 = vmatmul.mubr.f32.gmra.mrb[0].mxu0 %v2250
      %v2387 = vpop.f32.mrb[0].mxu0
      %v2388 = vadd.f32 %v2211, %v2387
      %v2389 = vpop.f32.mrb[0].mxu0
      %2390 = vmatprep.mubr.f32.mxu0 0.0
      %2391 = vmatmul.mubr.f32.gmra.mrb[0].mxu0 %v2253
      %v2392 = vpop.f32.mrb[0].mxu0
      %v2393 = vadd.f32 %v2211, %v2392
      %v2394 = vpop.f32.mrb[0].mxu0
      %2395 = vmatprep.mubr.f32.mxu0 0.0
      %2396 = vmatmul.mubr.f32.gmra.mrb[0].mxu0 %v2256
      %v2397 = vpop.f32.mrb[0].mxu0
      %v2398 = vadd.f32 %v2211, %v2397
      %v2399 = vpop.f32.mrb[0].mxu0
      %2400 = vmatprep.mubr.f32.mxu0 0.0
      %2401 = vmatmul.mubr.f32.gmra.mrb[0].mxu0 %v2259
      %v2402 = vpop.f32.mrb[0].mxu0
      %v2403 = vadd.f32 %v2211, %v2402
      %v2404 = vpop.f32.mrb[0].mxu0
      %2405 = vdwg.mxu0
      %vm2406 = vcmask 130048
      %2407 = vst.msk [vmem:[#allocation11] sm:$0xff] %vm2406, %v2328
      %2408 = vst.msk [vmem:[#allocation11 + $0x8] sm:$0xff] %vm2406, %v2333
      %2409 = vst.msk [vmem:[#allocation11 + $0x10] sm:$0xff] %vm2406, %v2338
      %2410 = vst.msk [vmem:[#allocation11 + $0x18] sm:$0xff] %vm2406, %v2343
      %2411 = vst.msk [vmem:[#allocation11 + $0x20] sm:$0xff] %vm2406, %v2348
      %2412 = vst.msk [vmem:[#allocation11 + $0x28] sm:$0xff] %vm2406, %v2353
      %2413 = vst.msk [vmem:[#allocation11 + $0x30] sm:$0xff] %vm2406, %v2358
      %2414 = vst.msk [vmem:[#allocation11 + $0x38] sm:$0xff] %vm2406, %v2363
      %2415 = vst.msk [vmem:[#allocation11 + $0x40] sm:$0xff] %vm2406, %v2368
      %2416 = vst.msk [vmem:[#allocation11 + $0x48] sm:$0xff] %vm2406, %v2373
      %2417 = vst.msk [vmem:[#allocation11 + $0x50] sm:$0xff] %vm2406, %v2378
      %2418 = vst.msk [vmem:[#allocation11 + $0x58] sm:$0xff] %vm2406, %v2383
      %2419 = vst.msk [vmem:[#allocation11 + $0x60] sm:$0xff] %vm2406, %v2388
      %2420 = vst.msk [vmem:[#allocation11 + $0x68] sm:$0xff] %vm2406, %v2393
      %2421 = vst.msk [vmem:[#allocation11 + $0x70] sm:$0xff] %vm2406, %v2398
      %2422 = vst.msk [vmem:[#allocation11 + $0x78] sm:$0xff] %vm2406, %v2403
    $region41: #{tpu_custom_call.1} parent=1 // pred_fallthru
      _
    %p2423 = scmp.ge.s32.totalorder %s43, %s51
    // Predicated region
    $region42: #{tpu_custom_call.1} parent=1 // pred_check
      %p2424 = pneg %p2423
    $region43: #{tpu_custom_call.1} parent=1 // pred_check_branch
      %2426 = sbr.rel (%p2424) target = $region45
    $region44: #{tpu_custom_call.1} parent=1 // pred_region
      %v2427 = vld [vmem:[%s7] sm:$0x1]
      %v2429 = vlaneseq
      %v2430 = vshrl.u32 %v2429, 7
      %v2431 = vsub.s32 0, %v2430
      %v2432 = vrot.slane %v2427, %v2431
      %vm2434 = vcmask 130048
      %2435 = vst.msk [vmem:[#allocation11] sm:$0xff] %vm2434, %v2432
      %2436 = vst.msk [vmem:[#allocation11 + $0x8] sm:$0xff] %vm2434, %v2432
      %2437 = vst.msk [vmem:[#allocation11 + $0x10] sm:$0xff] %vm2434, %v2432
      %2438 = vst.msk [vmem:[#allocation11 + $0x18] sm:$0xff] %vm2434, %v2432
      %2439 = vst.msk [vmem:[#allocation11 + $0x20] sm:$0xff] %vm2434, %v2432
      %2440 = vst.msk [vmem:[#allocation11 + $0x28] sm:$0xff] %vm2434, %v2432
      %2441 = vst.msk [vmem:[#allocation11 + $0x30] sm:$0xff] %vm2434, %v2432
      %2442 = vst.msk [vmem:[#allocation11 + $0x38] sm:$0xff] %vm2434, %v2432
      %2443 = vst.msk [vmem:[#allocation11 + $0x40] sm:$0xff] %vm2434, %v2432
      %2444 = vst.msk [vmem:[#allocation11 + $0x48] sm:$0xff] %vm2434, %v2432
      %2445 = vst.msk [vmem:[#allocation11 + $0x50] sm:$0xff] %vm2434, %v2432
      %2446 = vst.msk [vmem:[#allocation11 + $0x58] sm:$0xff] %vm2434, %v2432
      %2447 = vst.msk [vmem:[#allocation11 + $0x60] sm:$0xff] %vm2434, %v2432
      %2448 = vst.msk [vmem:[#allocation11 + $0x68] sm:$0xff] %vm2434, %v2432
      %2449 = vst.msk [vmem:[#allocation11 + $0x70] sm:$0xff] %vm2434, %v2432
      %2450 = vst.msk [vmem:[#allocation11 + $0x78] sm:$0xff] %vm2434, %v2432
    $region45: #{tpu_custom_call.1} parent=1 // pred_fallthru
      _
    // Predicated region
    $region46: #{tpu_custom_call.1} parent=1 // pred_check
      _
    $region47: #{tpu_custom_call.1} parent=1 // pred_check_branch
      %2452 = sbr.rel (0) target = $region49
    $region48: #{tpu_custom_call.1} parent=1 // pred_region
      %s2454 = ssub.s32 2048, 2048
      %2455 = vsyncadd [#allocation10], %s2454
      %s2456 = sshll.u32 [#allocation11], 4
      %s2457 = int_to_ptr.vmem [resolvable:$true] %s2456
      %2462 = dma.vmem_to_hbm [thread:$0]  %s2457, 2048, %s8, [#allocation10], 128, 128, 8
    $region49: #{tpu_custom_call.1} parent=1 // pred_fallthru
      _
    // Predicated region
    $region50: #{tpu_custom_call.1} parent=1 // pred_check
      _
    $region51: #{tpu_custom_call.1} parent=1 // pred_check_branch
      %2464 = sbr.rel (0) target = $region53
    $region52: #{tpu_custom_call.1} parent=1 // pred_region
      %2465 = dma.done [#allocation10], 2048
    $region53: #{tpu_custom_call.1} parent=1 // pred_fallthru
      _
    %2466 = vsyncpa [#allocation9], 1
    %2467 = vsyncpa [#allocation10], 1

</llo_original>
